<compile_context>
chip_gen: v5e
topology: v5e:2x2
jax: 0.10.0
libtpu: 0.0.40
codegen_flags: <defaults>
</compile_context>

<pallas_src>
import math
import functools

import jax
import jax.numpy as jnp
from jax.experimental import pallas as pl
from jax.experimental.pallas import tpu as pltpu


_VMEM_LIMIT_BYTES = 32 * 1024 * 1024   # above default scoped limits, safe on v5e/v6e/v7x
_SQRT1_2 = 0.7071067811865476


# ----------------------------------------------------------------------------
# Shared in-kernel helper: 3x3x3 conv (stride 1, pad 1) + bias for one depth tile
# ----------------------------------------------------------------------------
def _conv_bias_tile(svals, w_ref, b_ref, *, TD, H, W):
    """svals : list of TD+2 padded depth slices, each (Hp, Wp, Cin) channels-last.
    w_ref : (27, Cin, Cout) conv weight, tap-major (kd*9 + kh*3 + kw).
    b_ref : (Cout, 1) conv bias.
    Returns y = conv + bias, shape (Cout, Lt) float32 with Lt = TD*H*W (lane-dense).
    """
    Cin, Cout = w_ref.shape[1], w_ref.shape[2]
    Lt = TD * H * W
    xall = jnp.stack(svals, axis=0)                       # (TD+2, Hp, Wp, Cin)
    acc = jnp.zeros((Lt, Cout), jnp.float32)
    for kd in range(3):
        xd = xall[kd:kd + TD]                             # (TD, Hp, Wp, Cin)
        for kh in range(3):
            for kw in range(3):
                # shifted window -> (TD, H, W, Cin) -> (Lt, Cin): the minor (Cin)
                # dim is untouched, so this is a cheap leading-dim collapse.
                xs = xd[:, kh:kh + H, kw:kw + W, :].reshape(Lt, Cin)
                tap = kd * 9 + kh * 3 + kw
                acc = acc + jnp.dot(xs, w_ref[tap],
                                    preferred_element_type=jnp.float32)
    # single transpose per tile -> lane-dense (Cout, Lt) for all downstream work
    return acc.T + b_ref[...]


# ----------------------------------------------------------------------------
# Pass 1: per-sample, per-channel sum / sum-of-squares of conv(x)+bias
# ----------------------------------------------------------------------------
def _stats_kernel(*refs, TD, H, W, n_slices):
    slice_refs = refs[:n_slices]
    w_ref, b_ref = refs[n_slices], refs[n_slices + 1]
    stat_ref = refs[n_slices + 2]

    d = pl.program_id(1)
    svals = [r[...][0, 0] for r in slice_refs]            # each (Hp, Wp, Cin)
    y = _conv_bias_tile(svals, w_ref, b_ref, TD=TD, H=H, W=W)   # (Cout, Lt)

    part = jnp.concatenate(
        [jnp.sum(y, axis=1, keepdims=True),
         jnp.sum(y * y, axis=1, keepdims=True)], axis=1)   # (Cout, 2)

    @pl.when(d == 0)
    def _():
        stat_ref[...] = jnp.zeros_like(stat_ref)

    stat_ref[...] += part[None]


# ----------------------------------------------------------------------------
# Pass 2: recompute conv+bias per tile, normalize with global stats, exact GELU
# ----------------------------------------------------------------------------
def _apply_kernel(*refs, TD, H, W, n_slices, inv_l, eps):
    slice_refs = refs[:n_slices]
    w_ref, b_ref, g_ref, be_ref, stat_ref = refs[n_slices:n_slices + 5]
    o_ref = refs[n_slices + 5]

    svals = [r[...][0, 0] for r in slice_refs]
    y = _conv_bias_tile(svals, w_ref, b_ref, TD=TD, H=H, W=W)   # (Cout, Lt) f32

    stats = stat_ref[...][0]                               # (Cout, 2)
    mean = stats[:, 0:1] * inv_l                           # (Cout, 1)
    var = stats[:, 1:2] * inv_l - mean * mean              # biased variance
    rstd = jax.lax.rsqrt(var + eps)

    yn = (y - mean) * rstd * g_ref[...] + be_ref[...]
    out = 0.5 * yn * (1.0 + jax.lax.erf(yn * _SQRT1_2))    # exact GELU
    o_ref[0] = out.astype(o_ref.dtype)


# ----------------------------------------------------------------------------
# Wrapper
# ----------------------------------------------------------------------------
def _pick_tile_d(D, H, W, Cin, Cout, budget_bytes=8 * 1024 * 1024):
    """Largest depth tile that divides D, keeps the L tile lane-aligned, fits VMEM."""
    candidates = [td for td in range(1, D + 1)
                  if D % td == 0 and (td == D or (td * H * W) % 128 == 0)]

    def est(td):                                           # rough per-step f32 bytes
        lt = td * H * W
        slabs = 2 * (td + 2) * (H + 2) * (W + 2) * Cin     # double-buffered input slices
        work = (Cin + 2 * Cout) * lt                       # shifted slice + acc + (Cout,Lt)
        outb = 2 * Cout * lt                               # double-buffered output block
        return 4 * (slabs + work + outb)

    fits = [td for td in candidates if est(td) <= budget_bytes]
    return max(fits) if fits else min(candidates)


def down_or_up_sample(x, weight, bias, gamma, beta, *, eps=1e-5, tile_d=None):
    """Forward pass of DownOrUpSample (ConvDropoutNormNonlin block).

    x      : (N, Cin, D, H, W) float32   (NCDHW, torch layout)
    weight : (Cout, Cin, 3, 3, 3) float32 (torch Conv3d layout)
    bias, gamma, beta : (Cout,) float32
    returns: (N, Cout, D, H, W) float32
    """
    N, Cin, D, H, W = x.shape
    Cout = weight.shape[0]
    Hp, Wp = H + 2, W + 2
    L = D * H * W

    if tile_d is None:
        tile_d = _pick_tile_d(D, H, W, Cin, Cout)
    TD = int(tile_d)
    assert D % TD == 0, "tile_d must divide D"
    assert TD == D or (TD * H * W) % 128 == 0, "depth tile must keep L lane-aligned"
    nD = D // TD
    Lt = TD * H * W
    n_slices = TD + 2

    # --- wrapper glue: layout change + zero padding only (no im2col, no output transpose)
    xp = jnp.pad(jnp.transpose(x, (0, 2, 3, 4, 1)),
                 ((0, 0), (1, 1), (1, 1), (1, 1), (0, 0)))        # (N, Dp, Hp, Wp, Cin)
    w_t = jnp.transpose(weight, (2, 3, 4, 1, 0)).reshape(27, Cin, Cout)
    b2 = bias.reshape(Cout, 1)
    g2 = gamma.reshape(Cout, 1)
    be2 = beta.reshape(Cout, 1)
    # NOTE: on v6e/v7x, xp / w_t could be cast to bf16 here (f32 accumulation stays
    # in-kernel) to halve HBM traffic; kept f32 for exact parity with torch.

    slice_specs = [
        pl.BlockSpec((1, 1, Hp, Wp, Cin),
                     (lambda n, d, j=j: (n, d * TD + j, 0, 0, 0)))
        for j in range(n_slices)
    ]
    w_spec = pl.BlockSpec((27, Cin, Cout), lambda n, d: (0, 0, 0))
    vec_spec = pl.BlockSpec((Cout, 1), lambda n, d: (0, 0))
    stat_spec = pl.BlockSpec((1, Cout, 2), lambda n, d: (n, 0, 0))

    # ---- pass 1: per-channel sum / sum-of-squares over each sample ----
    stats = pl.pallas_call(
        functools.partial(_stats_kernel, TD=TD, H=H, W=W, n_slices=n_slices),
        out_shape=jax.ShapeDtypeStruct((N, Cout, 2), jnp.float32),
        grid=(N, nD),
        in_specs=slice_specs + [w_spec, vec_spec],
        out_specs=stat_spec,
        compiler_params=pltpu.CompilerParams(
            dimension_semantics=("parallel", "arbitrary"),
            vmem_limit_bytes=_VMEM_LIMIT_BYTES),
    )(*([xp] * n_slices), w_t, b2)

    # ---- pass 2: normalize + GELU per tile with the global stats ----
    out_flat = pl.pallas_call(
        functools.partial(_apply_kernel, TD=TD, H=H, W=W, n_slices=n_slices,
                          inv_l=1.0 / float(L), eps=float(eps)),
        out_shape=jax.ShapeDtypeStruct((N, Cout, L), jnp.float32),
        grid=(N, nD),
        in_specs=slice_specs + [w_spec, vec_spec, vec_spec, vec_spec, stat_spec],
        out_specs=pl.BlockSpec((1, Cout, Lt), lambda n, d: (n, 0, d)),
        compiler_params=pltpu.CompilerParams(
            dimension_semantics=("parallel", "parallel"),
            vmem_limit_bytes=_VMEM_LIMIT_BYTES),
    )(*([xp] * n_slices), w_t, b2, g2, be2, stats)

    # free reshape (contiguous): (N, Cout, D*H*W) -> (N, Cout, D, H, W)
    return out_flat.reshape(N, Cout, D, H, W)


# ----------------------------------------------------------------------------
# Pure-JAX reference (mirrors the PyTorch forward) for a correctness check
# ----------------------------------------------------------------------------
def _reference(x, weight, bias, gamma, beta, eps=1e-5):
    y = jax.lax.conv_general_dilated(
        x, weight, window_strides=(1, 1, 1),
        padding=((1, 1), (1, 1), (1, 1)),
        dimension_numbers=("NCDHW", "OIDHW", "NCDHW"),
        precision=jax.lax.Precision.HIGHEST,
    )
    y = y + bias[None, :, None, None, None]
    mean = jnp.mean(y, axis=(2, 3, 4), keepdims=True)
    var = jnp.mean(jnp.square(y - mean), axis=(2, 3, 4), keepdims=True)
    yn = (y - mean) / jnp.sqrt(var + eps)
    yn = yn * gamma[None, :, None, None, None] + beta[None, :, None, None, None]
    return 0.5 * yn * (1.0 + jax.lax.erf(yn / math.sqrt(2.0)))


if __name__ == "__main__":
    key = jax.random.PRNGKey(0)
    k_x, k_w, k_b, k_g, k_be = jax.random.split(key, 5)

    N, Cin, Cout = 2, 4, 8
    D = H = W = 8

    x = jax.random.normal(k_x, (N, Cin, D, H, W), dtype=jnp.float32)
    fan_in = Cin * 27
    weight = jax.random.uniform(
        k_w, (Cout, Cin, 3, 3, 3), dtype=jnp.float32,
        minval=-1.0 / math.sqrt(fan_in), maxval=1.0 / math.sqrt(fan_in))
    bias = jax.random.uniform(
        k_b, (Cout,), dtype=jnp.float32,
        minval=-1.0 / math.sqrt(fan_in), maxval=1.0 / math.sqrt(fan_in))
    gamma = 1.0 + 0.1 * jax.random.normal(k_g, (Cout,), dtype=jnp.float32)
    beta = 0.1 * jax.random.normal(k_be, (Cout,), dtype=jnp.float32)

    # tile_d=4 -> two depth tiles per sample, exercising the cross-tile InstanceNorm stats.
    out = down_or_up_sample(x, weight, bias, gamma, beta, tile_d=4)
    out = jax.block_until_ready(out)

    ref = _reference(x, weight, bias, gamma, beta)
    assert out.shape == (N, Cout, D, H, W)
    assert bool(jnp.all(jnp.isfinite(out)))
    assert bool(jnp.allclose(out, ref, rtol=5e-2, atol=5e-2)), "mismatch vs reference"

    print("KERNEL_OK")
</pallas_src>

<mosaic_0001>
module attributes {stable_mosaic.version = 11 : i64} {
  func.func @_stats_kernel(%arg0: i32, %arg1: i32, %arg2: memref<1x1x10x10x4xf32, #tpu.memory_space<vmem>>, %arg3: memref<1x1x10x10x4xf32, #tpu.memory_space<vmem>>, %arg4: memref<1x1x10x10x4xf32, #tpu.memory_space<vmem>>, %arg5: memref<1x1x10x10x4xf32, #tpu.memory_space<vmem>>, %arg6: memref<1x1x10x10x4xf32, #tpu.memory_space<vmem>>, %arg7: memref<1x1x10x10x4xf32, #tpu.memory_space<vmem>>, %arg8: memref<27x4x8xf32, #tpu.memory_space<vmem>>, %arg9: memref<8x1xf32, #tpu.memory_space<vmem>>, %arg10: memref<1x8x2xf32, #tpu.memory_space<vmem>>) attributes {dimension_semantics = [#tpu.dimension_semantics<parallel>, #tpu.dimension_semantics<arbitrary>], iteration_bounds = array<i64: 2, 2>, scalar_prefetch = 0 : i64, scratch_operands = 0 : i64, tpu.core_type = #tpu.core_type<tc>, window_params = [{transform_indices = @transform_0, window_bounds = array<i64: 1, 1, 10, 10, 4>}, {transform_indices = @transform_1, window_bounds = array<i64: 1, 1, 10, 10, 4>}, {transform_indices = @transform_2, window_bounds = array<i64: 1, 1, 10, 10, 4>}, {transform_indices = @transform_3, window_bounds = array<i64: 1, 1, 10, 10, 4>}, {transform_indices = @transform_4, window_bounds = array<i64: 1, 1, 10, 10, 4>}, {transform_indices = @transform_5, window_bounds = array<i64: 1, 1, 10, 10, 4>}, {pipeline_mode = #tpu.pipeline_mode<synchronous>, transform_indices = @transform_6, window_bounds = array<i64: 27, 4, 8>}, {pipeline_mode = #tpu.pipeline_mode<synchronous>, transform_indices = @transform_7, window_bounds = array<i64: 8, 1>}, {transform_indices = @transform_8, window_bounds = array<i64: 1, 8, 2>}]} {
    %c0 = arith.constant 0 : index
    %c0_0 = arith.constant 0 : index
    %c0_1 = arith.constant 0 : index
    %c0_2 = arith.constant 0 : index
    %c0_3 = arith.constant 0 : index
    %0 = vector.load %arg2[%c0, %c0_0, %c0_1, %c0_2, %c0_3] : memref<1x1x10x10x4xf32, #tpu.memory_space<vmem>>, vector<1x1x10x10x4xf32>
    %1 = vector.shape_cast %0 : vector<1x1x10x10x4xf32> to vector<10x10x4xf32>
    %c0_4 = arith.constant 0 : index
    %c0_5 = arith.constant 0 : index
    %c0_6 = arith.constant 0 : index
    %c0_7 = arith.constant 0 : index
    %c0_8 = arith.constant 0 : index
    %2 = vector.load %arg3[%c0_4, %c0_5, %c0_6, %c0_7, %c0_8] : memref<1x1x10x10x4xf32, #tpu.memory_space<vmem>>, vector<1x1x10x10x4xf32>
    %3 = vector.shape_cast %2 : vector<1x1x10x10x4xf32> to vector<10x10x4xf32>
    %c0_9 = arith.constant 0 : index
    %c0_10 = arith.constant 0 : index
    %c0_11 = arith.constant 0 : index
    %c0_12 = arith.constant 0 : index
    %c0_13 = arith.constant 0 : index
    %4 = vector.load %arg4[%c0_9, %c0_10, %c0_11, %c0_12, %c0_13] : memref<1x1x10x10x4xf32, #tpu.memory_space<vmem>>, vector<1x1x10x10x4xf32>
    %5 = vector.shape_cast %4 : vector<1x1x10x10x4xf32> to vector<10x10x4xf32>
    %c0_14 = arith.constant 0 : index
    %c0_15 = arith.constant 0 : index
    %c0_16 = arith.constant 0 : index
    %c0_17 = arith.constant 0 : index
    %c0_18 = arith.constant 0 : index
    %6 = vector.load %arg5[%c0_14, %c0_15, %c0_16, %c0_17, %c0_18] : memref<1x1x10x10x4xf32, #tpu.memory_space<vmem>>, vector<1x1x10x10x4xf32>
    %7 = vector.shape_cast %6 : vector<1x1x10x10x4xf32> to vector<10x10x4xf32>
    %c0_19 = arith.constant 0 : index
    %c0_20 = arith.constant 0 : index
    %c0_21 = arith.constant 0 : index
    %c0_22 = arith.constant 0 : index
    %c0_23 = arith.constant 0 : index
    %8 = vector.load %arg6[%c0_19, %c0_20, %c0_21, %c0_22, %c0_23] : memref<1x1x10x10x4xf32, #tpu.memory_space<vmem>>, vector<1x1x10x10x4xf32>
    %9 = vector.shape_cast %8 : vector<1x1x10x10x4xf32> to vector<10x10x4xf32>
    %c0_24 = arith.constant 0 : index
    %c0_25 = arith.constant 0 : index
    %c0_26 = arith.constant 0 : index
    %c0_27 = arith.constant 0 : index
    %c0_28 = arith.constant 0 : index
    %10 = vector.load %arg7[%c0_24, %c0_25, %c0_26, %c0_27, %c0_28] : memref<1x1x10x10x4xf32, #tpu.memory_space<vmem>>, vector<1x1x10x10x4xf32>
    %11 = vector.shape_cast %10 : vector<1x1x10x10x4xf32> to vector<10x10x4xf32>
    %12 = vector.shape_cast %1 : vector<10x10x4xf32> to vector<1x10x10x4xf32>
    %13 = vector.shape_cast %3 : vector<10x10x4xf32> to vector<1x10x10x4xf32>
    %14 = vector.shape_cast %5 : vector<10x10x4xf32> to vector<1x10x10x4xf32>
    %15 = vector.shape_cast %7 : vector<10x10x4xf32> to vector<1x10x10x4xf32>
    %16 = vector.shape_cast %9 : vector<10x10x4xf32> to vector<1x10x10x4xf32>
    %17 = vector.shape_cast %11 : vector<10x10x4xf32> to vector<1x10x10x4xf32>
    %18 = tpu.concatenate %12, %13, %14, %15, %16, %17 in 0 : vector<1x10x10x4xf32>, vector<1x10x10x4xf32>, vector<1x10x10x4xf32>, vector<1x10x10x4xf32>, vector<1x10x10x4xf32>, vector<1x10x10x4xf32> -> vector<6x10x10x4xf32>
    %cst = arith.constant 0.000000e+00 : f32
    %19 = vector.broadcast %cst : f32 to vector<256x8xf32>
    %20 = vector.extract_strided_slice %18 {offsets = [0, 0, 0, 0], sizes = [4, 10, 10, 4], strides = [1, 1, 1, 1]} : vector<6x10x10x4xf32> to vector<4x10x10x4xf32>
    %21 = vector.extract_strided_slice %20 {offsets = [0, 0, 0, 0], sizes = [4, 8, 8, 4], strides = [1, 1, 1, 1]} : vector<4x10x10x4xf32> to vector<4x8x8x4xf32>
    %22 = vector.shape_cast %21 : vector<4x8x8x4xf32> to vector<256x4xf32>
    %c0_29 = arith.constant 0 : index
    %c0_30 = arith.constant 0 : index
    %c0_31 = arith.constant 0 : index
    %23 = vector.load %arg8[%c0_29, %c0_30, %c0_31] : memref<27x4x8xf32, #tpu.memory_space<vmem>>, vector<1x4x8xf32>
    %24 = vector.shape_cast %23 : vector<1x4x8xf32> to vector<4x8xf32>
    %cst_32 = arith.constant dense<0.000000e+00> : vector<256x8xf32>
    %25 = tpu.matmul %22, %24, %cst_32 {dimension_numbers = #tpu.dot_dimension_numbers<[1], [0], [0], [1], [0, 0, 1, 1], [], []>} : vector<256x4xf32>, vector<4x8xf32>, vector<256x8xf32> -> vector<256x8xf32>
    %26 = arith.addf %19, %25 : vector<256x8xf32>
    %27 = vector.extract_strided_slice %20 {offsets = [0, 0, 1, 0], sizes = [4, 8, 8, 4], strides = [1, 1, 1, 1]} : vector<4x10x10x4xf32> to vector<4x8x8x4xf32>
    %28 = vector.shape_cast %27 : vector<4x8x8x4xf32> to vector<256x4xf32>
    %c1 = arith.constant 1 : index
    %c0_33 = arith.constant 0 : index
    %c0_34 = arith.constant 0 : index
    %29 = vector.load %arg8[%c1, %c0_33, %c0_34] : memref<27x4x8xf32, #tpu.memory_space<vmem>>, vector<1x4x8xf32>
    %30 = vector.shape_cast %29 : vector<1x4x8xf32> to vector<4x8xf32>
    %cst_35 = arith.constant dense<0.000000e+00> : vector<256x8xf32>
    %31 = tpu.matmul %28, %30, %cst_35 {dimension_numbers = #tpu.dot_dimension_numbers<[1], [0], [0], [1], [0, 0, 1, 1], [], []>} : vector<256x4xf32>, vector<4x8xf32>, vector<256x8xf32> -> vector<256x8xf32>
    %32 = arith.addf %26, %31 : vector<256x8xf32>
    %33 = vector.extract_strided_slice %20 {offsets = [0, 0, 2, 0], sizes = [4, 8, 8, 4], strides = [1, 1, 1, 1]} : vector<4x10x10x4xf32> to vector<4x8x8x4xf32>
    %34 = vector.shape_cast %33 : vector<4x8x8x4xf32> to vector<256x4xf32>
    %c2 = arith.constant 2 : index
    %c0_36 = arith.constant 0 : index
    %c0_37 = arith.constant 0 : index
    %35 = vector.load %arg8[%c2, %c0_36, %c0_37] : memref<27x4x8xf32, #tpu.memory_space<vmem>>, vector<1x4x8xf32>
    %36 = vector.shape_cast %35 : vector<1x4x8xf32> to vector<4x8xf32>
    %cst_38 = arith.constant dense<0.000000e+00> : vector<256x8xf32>
    %37 = tpu.matmul %34, %36, %cst_38 {dimension_numbers = #tpu.dot_dimension_numbers<[1], [0], [0], [1], [0, 0, 1, 1], [], []>} : vector<256x4xf32>, vector<4x8xf32>, vector<256x8xf32> -> vector<256x8xf32>
    %38 = arith.addf %32, %37 : vector<256x8xf32>
    %39 = vector.extract_strided_slice %20 {offsets = [0, 1, 0, 0], sizes = [4, 8, 8, 4], strides = [1, 1, 1, 1]} : vector<4x10x10x4xf32> to vector<4x8x8x4xf32>
    %40 = vector.shape_cast %39 : vector<4x8x8x4xf32> to vector<256x4xf32>
    %c3 = arith.constant 3 : index
    %c0_39 = arith.constant 0 : index
    %c0_40 = arith.constant 0 : index
    %41 = vector.load %arg8[%c3, %c0_39, %c0_40] : memref<27x4x8xf32, #tpu.memory_space<vmem>>, vector<1x4x8xf32>
    %42 = vector.shape_cast %41 : vector<1x4x8xf32> to vector<4x8xf32>
    %cst_41 = arith.constant dense<0.000000e+00> : vector<256x8xf32>
    %43 = tpu.matmul %40, %42, %cst_41 {dimension_numbers = #tpu.dot_dimension_numbers<[1], [0], [0], [1], [0, 0, 1, 1], [], []>} : vector<256x4xf32>, vector<4x8xf32>, vector<256x8xf32> -> vector<256x8xf32>
    %44 = arith.addf %38, %43 : vector<256x8xf32>
    %45 = vector.extract_strided_slice %20 {offsets = [0, 1, 1, 0], sizes = [4, 8, 8, 4], strides = [1, 1, 1, 1]} : vector<4x10x10x4xf32> to vector<4x8x8x4xf32>
    %46 = vector.shape_cast %45 : vector<4x8x8x4xf32> to vector<256x4xf32>
    %c4 = arith.constant 4 : index
    %c0_42 = arith.constant 0 : index
    %c0_43 = arith.constant 0 : index
    %47 = vector.load %arg8[%c4, %c0_42, %c0_43] : memref<27x4x8xf32, #tpu.memory_space<vmem>>, vector<1x4x8xf32>
    %48 = vector.shape_cast %47 : vector<1x4x8xf32> to vector<4x8xf32>
    %cst_44 = arith.constant dense<0.000000e+00> : vector<256x8xf32>
    %49 = tpu.matmul %46, %48, %cst_44 {dimension_numbers = #tpu.dot_dimension_numbers<[1], [0], [0], [1], [0, 0, 1, 1], [], []>} : vector<256x4xf32>, vector<4x8xf32>, vector<256x8xf32> -> vector<256x8xf32>
    %50 = arith.addf %44, %49 : vector<256x8xf32>
    %51 = vector.extract_strided_slice %20 {offsets = [0, 1, 2, 0], sizes = [4, 8, 8, 4], strides = [1, 1, 1, 1]} : vector<4x10x10x4xf32> to vector<4x8x8x4xf32>
    %52 = vector.shape_cast %51 : vector<4x8x8x4xf32> to vector<256x4xf32>
    %c5 = arith.constant 5 : index
    %c0_45 = arith.constant 0 : index
    %c0_46 = arith.constant 0 : index
    %53 = vector.load %arg8[%c5, %c0_45, %c0_46] : memref<27x4x8xf32, #tpu.memory_space<vmem>>, vector<1x4x8xf32>
    %54 = vector.shape_cast %53 : vector<1x4x8xf32> to vector<4x8xf32>
    %cst_47 = arith.constant dense<0.000000e+00> : vector<256x8xf32>
    %55 = tpu.matmul %52, %54, %cst_47 {dimension_numbers = #tpu.dot_dimension_numbers<[1], [0], [0], [1], [0, 0, 1, 1], [], []>} : vector<256x4xf32>, vector<4x8xf32>, vector<256x8xf32> -> vector<256x8xf32>
    %56 = arith.addf %50, %55 : vector<256x8xf32>
    %57 = vector.extract_strided_slice %20 {offsets = [0, 2, 0, 0], sizes = [4, 8, 8, 4], strides = [1, 1, 1, 1]} : vector<4x10x10x4xf32> to vector<4x8x8x4xf32>
    %58 = vector.shape_cast %57 : vector<4x8x8x4xf32> to vector<256x4xf32>
    %c6 = arith.constant 6 : index
    %c0_48 = arith.constant 0 : index
    %c0_49 = arith.constant 0 : index
    %59 = vector.load %arg8[%c6, %c0_48, %c0_49] : memref<27x4x8xf32, #tpu.memory_space<vmem>>, vector<1x4x8xf32>
    %60 = vector.shape_cast %59 : vector<1x4x8xf32> to vector<4x8xf32>
    %cst_50 = arith.constant dense<0.000000e+00> : vector<256x8xf32>
    %61 = tpu.matmul %58, %60, %cst_50 {dimension_numbers = #tpu.dot_dimension_numbers<[1], [0], [0], [1], [0, 0, 1, 1], [], []>} : vector<256x4xf32>, vector<4x8xf32>, vector<256x8xf32> -> vector<256x8xf32>
    %62 = arith.addf %56, %61 : vector<256x8xf32>
    %63 = vector.extract_strided_slice %20 {offsets = [0, 2, 1, 0], sizes = [4, 8, 8, 4], strides = [1, 1, 1, 1]} : vector<4x10x10x4xf32> to vector<4x8x8x4xf32>
    %64 = vector.shape_cast %63 : vector<4x8x8x4xf32> to vector<256x4xf32>
    %c7 = arith.constant 7 : index
    %c0_51 = arith.constant 0 : index
    %c0_52 = arith.constant 0 : index
    %65 = vector.load %arg8[%c7, %c0_51, %c0_52] : memref<27x4x8xf32, #tpu.memory_space<vmem>>, vector<1x4x8xf32>
    %66 = vector.shape_cast %65 : vector<1x4x8xf32> to vector<4x8xf32>
    %cst_53 = arith.constant dense<0.000000e+00> : vector<256x8xf32>
    %67 = tpu.matmul %64, %66, %cst_53 {dimension_numbers = #tpu.dot_dimension_numbers<[1], [0], [0], [1], [0, 0, 1, 1], [], []>} : vector<256x4xf32>, vector<4x8xf32>, vector<256x8xf32> -> vector<256x8xf32>
    %68 = arith.addf %62, %67 : vector<256x8xf32>
    %69 = vector.extract_strided_slice %20 {offsets = [0, 2, 2, 0], sizes = [4, 8, 8, 4], strides = [1, 1, 1, 1]} : vector<4x10x10x4xf32> to vector<4x8x8x4xf32>
    %70 = vector.shape_cast %69 : vector<4x8x8x4xf32> to vector<256x4xf32>
    %c8 = arith.constant 8 : index
    %c0_54 = arith.constant 0 : index
    %c0_55 = arith.constant 0 : index
    %71 = vector.load %arg8[%c8, %c0_54, %c0_55] : memref<27x4x8xf32, #tpu.memory_space<vmem>>, vector<1x4x8xf32>
    %72 = vector.shape_cast %71 : vector<1x4x8xf32> to vector<4x8xf32>
    %cst_56 = arith.constant dense<0.000000e+00> : vector<256x8xf32>
    %73 = tpu.matmul %70, %72, %cst_56 {dimension_numbers = #tpu.dot_dimension_numbers<[1], [0], [0], [1], [0, 0, 1, 1], [], []>} : vector<256x4xf32>, vector<4x8xf32>, vector<256x8xf32> -> vector<256x8xf32>
    %74 = arith.addf %68, %73 : vector<256x8xf32>
    %75 = vector.extract_strided_slice %18 {offsets = [1, 0, 0, 0], sizes = [4, 10, 10, 4], strides = [1, 1, 1, 1]} : vector<6x10x10x4xf32> to vector<4x10x10x4xf32>
    %76 = vector.extract_strided_slice %75 {offsets = [0, 0, 0, 0], sizes = [4, 8, 8, 4], strides = [1, 1, 1, 1]} : vector<4x10x10x4xf32> to vector<4x8x8x4xf32>
    %77 = vector.shape_cast %76 : vector<4x8x8x4xf32> to vector<256x4xf32>
    %c9 = arith.constant 9 : index
    %c0_57 = arith.constant 0 : index
    %c0_58 = arith.constant 0 : index
    %78 = vector.load %arg8[%c9, %c0_57, %c0_58] : memref<27x4x8xf32, #tpu.memory_space<vmem>>, vector<1x4x8xf32>
    %79 = vector.shape_cast %78 : vector<1x4x8xf32> to vector<4x8xf32>
    %cst_59 = arith.constant dense<0.000000e+00> : vector<256x8xf32>
    %80 = tpu.matmul %77, %79, %cst_59 {dimension_numbers = #tpu.dot_dimension_numbers<[1], [0], [0], [1], [0, 0, 1, 1], [], []>} : vector<256x4xf32>, vector<4x8xf32>, vector<256x8xf32> -> vector<256x8xf32>
    %81 = arith.addf %74, %80 : vector<256x8xf32>
    %82 = vector.extract_strided_slice %75 {offsets = [0, 0, 1, 0], sizes = [4, 8, 8, 4], strides = [1, 1, 1, 1]} : vector<4x10x10x4xf32> to vector<4x8x8x4xf32>
    %83 = vector.shape_cast %82 : vector<4x8x8x4xf32> to vector<256x4xf32>
    %c10 = arith.constant 10 : index
    %c0_60 = arith.constant 0 : index
    %c0_61 = arith.constant 0 : index
    %84 = vector.load %arg8[%c10, %c0_60, %c0_61] : memref<27x4x8xf32, #tpu.memory_space<vmem>>, vector<1x4x8xf32>
    %85 = vector.shape_cast %84 : vector<1x4x8xf32> to vector<4x8xf32>
    %cst_62 = arith.constant dense<0.000000e+00> : vector<256x8xf32>
    %86 = tpu.matmul %83, %85, %cst_62 {dimension_numbers = #tpu.dot_dimension_numbers<[1], [0], [0], [1], [0, 0, 1, 1], [], []>} : vector<256x4xf32>, vector<4x8xf32>, vector<256x8xf32> -> vector<256x8xf32>
    %87 = arith.addf %81, %86 : vector<256x8xf32>
    %88 = vector.extract_strided_slice %75 {offsets = [0, 0, 2, 0], sizes = [4, 8, 8, 4], strides = [1, 1, 1, 1]} : vector<4x10x10x4xf32> to vector<4x8x8x4xf32>
    %89 = vector.shape_cast %88 : vector<4x8x8x4xf32> to vector<256x4xf32>
    %c11 = arith.constant 11 : index
    %c0_63 = arith.constant 0 : index
    %c0_64 = arith.constant 0 : index
    %90 = vector.load %arg8[%c11, %c0_63, %c0_64] : memref<27x4x8xf32, #tpu.memory_space<vmem>>, vector<1x4x8xf32>
    %91 = vector.shape_cast %90 : vector<1x4x8xf32> to vector<4x8xf32>
    %cst_65 = arith.constant dense<0.000000e+00> : vector<256x8xf32>
    %92 = tpu.matmul %89, %91, %cst_65 {dimension_numbers = #tpu.dot_dimension_numbers<[1], [0], [0], [1], [0, 0, 1, 1], [], []>} : vector<256x4xf32>, vector<4x8xf32>, vector<256x8xf32> -> vector<256x8xf32>
    %93 = arith.addf %87, %92 : vector<256x8xf32>
    %94 = vector.extract_strided_slice %75 {offsets = [0, 1, 0, 0], sizes = [4, 8, 8, 4], strides = [1, 1, 1, 1]} : vector<4x10x10x4xf32> to vector<4x8x8x4xf32>
    %95 = vector.shape_cast %94 : vector<4x8x8x4xf32> to vector<256x4xf32>
    %c12 = arith.constant 12 : index
    %c0_66 = arith.constant 0 : index
    %c0_67 = arith.constant 0 : index
    %96 = vector.load %arg8[%c12, %c0_66, %c0_67] : memref<27x4x8xf32, #tpu.memory_space<vmem>>, vector<1x4x8xf32>
    %97 = vector.shape_cast %96 : vector<1x4x8xf32> to vector<4x8xf32>
    %cst_68 = arith.constant dense<0.000000e+00> : vector<256x8xf32>
    %98 = tpu.matmul %95, %97, %cst_68 {dimension_numbers = #tpu.dot_dimension_numbers<[1], [0], [0], [1], [0, 0, 1, 1], [], []>} : vector<256x4xf32>, vector<4x8xf32>, vector<256x8xf32> -> vector<256x8xf32>
    %99 = arith.addf %93, %98 : vector<256x8xf32>
    %100 = vector.extract_strided_slice %75 {offsets = [0, 1, 1, 0], sizes = [4, 8, 8, 4], strides = [1, 1, 1, 1]} : vector<4x10x10x4xf32> to vector<4x8x8x4xf32>
    %101 = vector.shape_cast %100 : vector<4x8x8x4xf32> to vector<256x4xf32>
    %c13 = arith.constant 13 : index
    %c0_69 = arith.constant 0 : index
    %c0_70 = arith.constant 0 : index
    %102 = vector.load %arg8[%c13, %c0_69, %c0_70] : memref<27x4x8xf32, #tpu.memory_space<vmem>>, vector<1x4x8xf32>
    %103 = vector.shape_cast %102 : vector<1x4x8xf32> to vector<4x8xf32>
    %cst_71 = arith.constant dense<0.000000e+00> : vector<256x8xf32>
    %104 = tpu.matmul %101, %103, %cst_71 {dimension_numbers = #tpu.dot_dimension_numbers<[1], [0], [0], [1], [0, 0, 1, 1], [], []>} : vector<256x4xf32>, vector<4x8xf32>, vector<256x8xf32> -> vector<256x8xf32>
    %105 = arith.addf %99, %104 : vector<256x8xf32>
    %106 = vector.extract_strided_slice %75 {offsets = [0, 1, 2, 0], sizes = [4, 8, 8, 4], strides = [1, 1, 1, 1]} : vector<4x10x10x4xf32> to vector<4x8x8x4xf32>
    %107 = vector.shape_cast %106 : vector<4x8x8x4xf32> to vector<256x4xf32>
    %c14 = arith.constant 14 : index
    %c0_72 = arith.constant 0 : index
    %c0_73 = arith.constant 0 : index
    %108 = vector.load %arg8[%c14, %c0_72, %c0_73] : memref<27x4x8xf32, #tpu.memory_space<vmem>>, vector<1x4x8xf32>
    %109 = vector.shape_cast %108 : vector<1x4x8xf32> to vector<4x8xf32>
    %cst_74 = arith.constant dense<0.000000e+00> : vector<256x8xf32>
    %110 = tpu.matmul %107, %109, %cst_74 {dimension_numbers = #tpu.dot_dimension_numbers<[1], [0], [0], [1], [0, 0, 1, 1], [], []>} : vector<256x4xf32>, vector<4x8xf32>, vector<256x8xf32> -> vector<256x8xf32>
    %111 = arith.addf %105, %110 : vector<256x8xf32>
    %112 = vector.extract_strided_slice %75 {offsets = [0, 2, 0, 0], sizes = [4, 8, 8, 4], strides = [1, 1, 1, 1]} : vector<4x10x10x4xf32> to vector<4x8x8x4xf32>
    %113 = vector.shape_cast %112 : vector<4x8x8x4xf32> to vector<256x4xf32>
    %c15 = arith.constant 15 : index
    %c0_75 = arith.constant 0 : index
    %c0_76 = arith.constant 0 : index
    %114 = vector.load %arg8[%c15, %c0_75, %c0_76] : memref<27x4x8xf32, #tpu.memory_space<vmem>>, vector<1x4x8xf32>
    %115 = vector.shape_cast %114 : vector<1x4x8xf32> to vector<4x8xf32>
    %cst_77 = arith.constant dense<0.000000e+00> : vector<256x8xf32>
    %116 = tpu.matmul %113, %115, %cst_77 {dimension_numbers = #tpu.dot_dimension_numbers<[1], [0], [0], [1], [0, 0, 1, 1], [], []>} : vector<256x4xf32>, vector<4x8xf32>, vector<256x8xf32> -> vector<256x8xf32>
    %117 = arith.addf %111, %116 : vector<256x8xf32>
    %118 = vector.extract_strided_slice %75 {offsets = [0, 2, 1, 0], sizes = [4, 8, 8, 4], strides = [1, 1, 1, 1]} : vector<4x10x10x4xf32> to vector<4x8x8x4xf32>
    %119 = vector.shape_cast %118 : vector<4x8x8x4xf32> to vector<256x4xf32>
    %c16 = arith.constant 16 : index
    %c0_78 = arith.constant 0 : index
    %c0_79 = arith.constant 0 : index
    %120 = vector.load %arg8[%c16, %c0_78, %c0_79] : memref<27x4x8xf32, #tpu.memory_space<vmem>>, vector<1x4x8xf32>
    %121 = vector.shape_cast %120 : vector<1x4x8xf32> to vector<4x8xf32>
    %cst_80 = arith.constant dense<0.000000e+00> : vector<256x8xf32>
    %122 = tpu.matmul %119, %121, %cst_80 {dimension_numbers = #tpu.dot_dimension_numbers<[1], [0], [0], [1], [0, 0, 1, 1], [], []>} : vector<256x4xf32>, vector<4x8xf32>, vector<256x8xf32> -> vector<256x8xf32>
    %123 = arith.addf %117, %122 : vector<256x8xf32>
    %124 = vector.extract_strided_slice %75 {offsets = [0, 2, 2, 0], sizes = [4, 8, 8, 4], strides = [1, 1, 1, 1]} : vector<4x10x10x4xf32> to vector<4x8x8x4xf32>
    %125 = vector.shape_cast %124 : vector<4x8x8x4xf32> to vector<256x4xf32>
    %c17 = arith.constant 17 : index
    %c0_81 = arith.constant 0 : index
    %c0_82 = arith.constant 0 : index
    %126 = vector.load %arg8[%c17, %c0_81, %c0_82] : memref<27x4x8xf32, #tpu.memory_space<vmem>>, vector<1x4x8xf32>
    %127 = vector.shape_cast %126 : vector<1x4x8xf32> to vector<4x8xf32>
    %cst_83 = arith.constant dense<0.000000e+00> : vector<256x8xf32>
    %128 = tpu.matmul %125, %127, %cst_83 {dimension_numbers = #tpu.dot_dimension_numbers<[1], [0], [0], [1], [0, 0, 1, 1], [], []>} : vector<256x4xf32>, vector<4x8xf32>, vector<256x8xf32> -> vector<256x8xf32>
    %129 = arith.addf %123, %128 : vector<256x8xf32>
    %130 = vector.extract_strided_slice %18 {offsets = [2, 0, 0, 0], sizes = [4, 10, 10, 4], strides = [1, 1, 1, 1]} : vector<6x10x10x4xf32> to vector<4x10x10x4xf32>
    %131 = vector.extract_strided_slice %130 {offsets = [0, 0, 0, 0], sizes = [4, 8, 8, 4], strides = [1, 1, 1, 1]} : vector<4x10x10x4xf32> to vector<4x8x8x4xf32>
    %132 = vector.shape_cast %131 : vector<4x8x8x4xf32> to vector<256x4xf32>
    %c18 = arith.constant 18 : index
    %c0_84 = arith.constant 0 : index
    %c0_85 = arith.constant 0 : index
    %133 = vector.load %arg8[%c18, %c0_84, %c0_85] : memref<27x4x8xf32, #tpu.memory_space<vmem>>, vector<1x4x8xf32>
    %134 = vector.shape_cast %133 : vector<1x4x8xf32> to vector<4x8xf32>
    %cst_86 = arith.constant dense<0.000000e+00> : vector<256x8xf32>
    %135 = tpu.matmul %132, %134, %cst_86 {dimension_numbers = #tpu.dot_dimension_numbers<[1], [0], [0], [1], [0, 0, 1, 1], [], []>} : vector<256x4xf32>, vector<4x8xf32>, vector<256x8xf32> -> vector<256x8xf32>
    %136 = arith.addf %129, %135 : vector<256x8xf32>
    %137 = vector.extract_strided_slice %130 {offsets = [0, 0, 1, 0], sizes = [4, 8, 8, 4], strides = [1, 1, 1, 1]} : vector<4x10x10x4xf32> to vector<4x8x8x4xf32>
    %138 = vector.shape_cast %137 : vector<4x8x8x4xf32> to vector<256x4xf32>
    %c19 = arith.constant 19 : index
    %c0_87 = arith.constant 0 : index
    %c0_88 = arith.constant 0 : index
    %139 = vector.load %arg8[%c19, %c0_87, %c0_88] : memref<27x4x8xf32, #tpu.memory_space<vmem>>, vector<1x4x8xf32>
    %140 = vector.shape_cast %139 : vector<1x4x8xf32> to vector<4x8xf32>
    %cst_89 = arith.constant dense<0.000000e+00> : vector<256x8xf32>
    %141 = tpu.matmul %138, %140, %cst_89 {dimension_numbers = #tpu.dot_dimension_numbers<[1], [0], [0], [1], [0, 0, 1, 1], [], []>} : vector<256x4xf32>, vector<4x8xf32>, vector<256x8xf32> -> vector<256x8xf32>
    %142 = arith.addf %136, %141 : vector<256x8xf32>
    %143 = vector.extract_strided_slice %130 {offsets = [0, 0, 2, 0], sizes = [4, 8, 8, 4], strides = [1, 1, 1, 1]} : vector<4x10x10x4xf32> to vector<4x8x8x4xf32>
    %144 = vector.shape_cast %143 : vector<4x8x8x4xf32> to vector<256x4xf32>
    %c20 = arith.constant 20 : index
    %c0_90 = arith.constant 0 : index
    %c0_91 = arith.constant 0 : index
    %145 = vector.load %arg8[%c20, %c0_90, %c0_91] : memref<27x4x8xf32, #tpu.memory_space<vmem>>, vector<1x4x8xf32>
    %146 = vector.shape_cast %145 : vector<1x4x8xf32> to vector<4x8xf32>
    %cst_92 = arith.constant dense<0.000000e+00> : vector<256x8xf32>
    %147 = tpu.matmul %144, %146, %cst_92 {dimension_numbers = #tpu.dot_dimension_numbers<[1], [0], [0], [1], [0, 0, 1, 1], [], []>} : vector<256x4xf32>, vector<4x8xf32>, vector<256x8xf32> -> vector<256x8xf32>
    %148 = arith.addf %142, %147 : vector<256x8xf32>
    %149 = vector.extract_strided_slice %130 {offsets = [0, 1, 0, 0], sizes = [4, 8, 8, 4], strides = [1, 1, 1, 1]} : vector<4x10x10x4xf32> to vector<4x8x8x4xf32>
    %150 = vector.shape_cast %149 : vector<4x8x8x4xf32> to vector<256x4xf32>
    %c21 = arith.constant 21 : index
    %c0_93 = arith.constant 0 : index
    %c0_94 = arith.constant 0 : index
    %151 = vector.load %arg8[%c21, %c0_93, %c0_94] : memref<27x4x8xf32, #tpu.memory_space<vmem>>, vector<1x4x8xf32>
    %152 = vector.shape_cast %151 : vector<1x4x8xf32> to vector<4x8xf32>
    %cst_95 = arith.constant dense<0.000000e+00> : vector<256x8xf32>
    %153 = tpu.matmul %150, %152, %cst_95 {dimension_numbers = #tpu.dot_dimension_numbers<[1], [0], [0], [1], [0, 0, 1, 1], [], []>} : vector<256x4xf32>, vector<4x8xf32>, vector<256x8xf32> -> vector<256x8xf32>
    %154 = arith.addf %148, %153 : vector<256x8xf32>
    %155 = vector.extract_strided_slice %130 {offsets = [0, 1, 1, 0], sizes = [4, 8, 8, 4], strides = [1, 1, 1, 1]} : vector<4x10x10x4xf32> to vector<4x8x8x4xf32>
    %156 = vector.shape_cast %155 : vector<4x8x8x4xf32> to vector<256x4xf32>
    %c22 = arith.constant 22 : index
    %c0_96 = arith.constant 0 : index
    %c0_97 = arith.constant 0 : index
    %157 = vector.load %arg8[%c22, %c0_96, %c0_97] : memref<27x4x8xf32, #tpu.memory_space<vmem>>, vector<1x4x8xf32>
    %158 = vector.shape_cast %157 : vector<1x4x8xf32> to vector<4x8xf32>
    %cst_98 = arith.constant dense<0.000000e+00> : vector<256x8xf32>
    %159 = tpu.matmul %156, %158, %cst_98 {dimension_numbers = #tpu.dot_dimension_numbers<[1], [0], [0], [1], [0, 0, 1, 1], [], []>} : vector<256x4xf32>, vector<4x8xf32>, vector<256x8xf32> -> vector<256x8xf32>
    %160 = arith.addf %154, %159 : vector<256x8xf32>
    %161 = vector.extract_strided_slice %130 {offsets = [0, 1, 2, 0], sizes = [4, 8, 8, 4], strides = [1, 1, 1, 1]} : vector<4x10x10x4xf32> to vector<4x8x8x4xf32>
    %162 = vector.shape_cast %161 : vector<4x8x8x4xf32> to vector<256x4xf32>
    %c23 = arith.constant 23 : index
    %c0_99 = arith.constant 0 : index
    %c0_100 = arith.constant 0 : index
    %163 = vector.load %arg8[%c23, %c0_99, %c0_100] : memref<27x4x8xf32, #tpu.memory_space<vmem>>, vector<1x4x8xf32>
    %164 = vector.shape_cast %163 : vector<1x4x8xf32> to vector<4x8xf32>
    %cst_101 = arith.constant dense<0.000000e+00> : vector<256x8xf32>
    %165 = tpu.matmul %162, %164, %cst_101 {dimension_numbers = #tpu.dot_dimension_numbers<[1], [0], [0], [1], [0, 0, 1, 1], [], []>} : vector<256x4xf32>, vector<4x8xf32>, vector<256x8xf32> -> vector<256x8xf32>
    %166 = arith.addf %160, %165 : vector<256x8xf32>
    %167 = vector.extract_strided_slice %130 {offsets = [0, 2, 0, 0], sizes = [4, 8, 8, 4], strides = [1, 1, 1, 1]} : vector<4x10x10x4xf32> to vector<4x8x8x4xf32>
    %168 = vector.shape_cast %167 : vector<4x8x8x4xf32> to vector<256x4xf32>
    %c24 = arith.constant 24 : index
    %c0_102 = arith.constant 0 : index
    %c0_103 = arith.constant 0 : index
    %169 = vector.load %arg8[%c24, %c0_102, %c0_103] : memref<27x4x8xf32, #tpu.memory_space<vmem>>, vector<1x4x8xf32>
    %170 = vector.shape_cast %169 : vector<1x4x8xf32> to vector<4x8xf32>
    %cst_104 = arith.constant dense<0.000000e+00> : vector<256x8xf32>
    %171 = tpu.matmul %168, %170, %cst_104 {dimension_numbers = #tpu.dot_dimension_numbers<[1], [0], [0], [1], [0, 0, 1, 1], [], []>} : vector<256x4xf32>, vector<4x8xf32>, vector<256x8xf32> -> vector<256x8xf32>
    %172 = arith.addf %166, %171 : vector<256x8xf32>
    %173 = vector.extract_strided_slice %130 {offsets = [0, 2, 1, 0], sizes = [4, 8, 8, 4], strides = [1, 1, 1, 1]} : vector<4x10x10x4xf32> to vector<4x8x8x4xf32>
    %174 = vector.shape_cast %173 : vector<4x8x8x4xf32> to vector<256x4xf32>
    %c25 = arith.constant 25 : index
    %c0_105 = arith.constant 0 : index
    %c0_106 = arith.constant 0 : index
    %175 = vector.load %arg8[%c25, %c0_105, %c0_106] : memref<27x4x8xf32, #tpu.memory_space<vmem>>, vector<1x4x8xf32>
    %176 = vector.shape_cast %175 : vector<1x4x8xf32> to vector<4x8xf32>
    %cst_107 = arith.constant dense<0.000000e+00> : vector<256x8xf32>
    %177 = tpu.matmul %174, %176, %cst_107 {dimension_numbers = #tpu.dot_dimension_numbers<[1], [0], [0], [1], [0, 0, 1, 1], [], []>} : vector<256x4xf32>, vector<4x8xf32>, vector<256x8xf32> -> vector<256x8xf32>
    %178 = arith.addf %172, %177 : vector<256x8xf32>
    %179 = vector.extract_strided_slice %130 {offsets = [0, 2, 2, 0], sizes = [4, 8, 8, 4], strides = [1, 1, 1, 1]} : vector<4x10x10x4xf32> to vector<4x8x8x4xf32>
    %180 = vector.shape_cast %179 : vector<4x8x8x4xf32> to vector<256x4xf32>
    %c26 = arith.constant 26 : index
    %c0_108 = arith.constant 0 : index
    %c0_109 = arith.constant 0 : index
    %181 = vector.load %arg8[%c26, %c0_108, %c0_109] : memref<27x4x8xf32, #tpu.memory_space<vmem>>, vector<1x4x8xf32>
    %182 = vector.shape_cast %181 : vector<1x4x8xf32> to vector<4x8xf32>
    %cst_110 = arith.constant dense<0.000000e+00> : vector<256x8xf32>
    %183 = tpu.matmul %180, %182, %cst_110 {dimension_numbers = #tpu.dot_dimension_numbers<[1], [0], [0], [1], [0, 0, 1, 1], [], []>} : vector<256x4xf32>, vector<4x8xf32>, vector<256x8xf32> -> vector<256x8xf32>
    %184 = arith.addf %178, %183 : vector<256x8xf32>
    %185 = tpu.transpose %184, [1, 0] : vector<256x8xf32> -> vector<8x256xf32>
    %c0_111 = arith.constant 0 : index
    %c0_112 = arith.constant 0 : index
    %186 = vector.load %arg9[%c0_111, %c0_112] : memref<8x1xf32, #tpu.memory_space<vmem>>, vector<8x1xf32>
    %187 = vector.broadcast %186 : vector<8x1xf32> to vector<8x256xf32>
    %188 = arith.addf %185, %187 : vector<8x256xf32>
    %cst_113 = arith.constant dense<0.000000e+00> : vector<8xf32>
    %189 = vector.multi_reduction <add>, %188, %cst_113 [1] : vector<8x256xf32> to vector<8xf32>
    %190 = vector.shape_cast %189 : vector<8xf32> to vector<8x1xf32>
    %191 = arith.mulf %188, %188 : vector<8x256xf32>
    %cst_114 = arith.constant dense<0.000000e+00> : vector<8xf32>
    %192 = vector.multi_reduction <add>, %191, %cst_114 [1] : vector<8x256xf32> to vector<8xf32>
    %193 = vector.shape_cast %192 : vector<8xf32> to vector<8x1xf32>
    %194 = tpu.concatenate %190, %193 in 1 : vector<8x1xf32>, vector<8x1xf32> -> vector<8x2xf32>
    %c0_i32 = arith.constant 0 : i32
    %195 = arith.cmpi eq, %arg1, %c0_i32 : i32
    %196 = arith.extui %195 : i1 to i32
    %c0_i32_115 = arith.constant 0 : i32
    %197 = arith.cmpi ne, %196, %c0_i32_115 : i32
    scf.if %197 {
      %cst_122 = arith.constant 0.000000e+00 : f32
      %202 = vector.broadcast %cst_122 : f32 to vector<1x8x2xf32>
      %c0_123 = arith.constant 0 : index
      %c0_124 = arith.constant 0 : index
      %c0_125 = arith.constant 0 : index
      %203 = vector.load %arg10[%c0_123, %c0_124, %c0_125] : memref<1x8x2xf32, #tpu.memory_space<vmem>>, vector<1x8x2xf32>
      tpu.vector_store %arg10[%c0_123, %c0_124, %c0_125], %202 {strides = array<i32>} : memref<1x8x2xf32, #tpu.memory_space<vmem>>, vector<1x8x2xf32>,
    } else {
    }
    %c0_116 = arith.constant 0 : index
    %c0_117 = arith.constant 0 : index
    %c0_118 = arith.constant 0 : index
    %198 = vector.load %arg10[%c0_116, %c0_117, %c0_118] : memref<1x8x2xf32, #tpu.memory_space<vmem>>, vector<1x8x2xf32>
    %199 = vector.shape_cast %194 : vector<8x2xf32> to vector<1x8x2xf32>
    %200 = arith.addf %198, %199 : vector<1x8x2xf32>
    %c0_119 = arith.constant 0 : index
    %c0_120 = arith.constant 0 : index
    %c0_121 = arith.constant 0 : index
    %201 = vector.load %arg10[%c0_119, %c0_120, %c0_121] : memref<1x8x2xf32, #tpu.memory_space<vmem>>, vector<1x8x2xf32>
    tpu.vector_store %arg10[%c0_119, %c0_120, %c0_121], %200 {strides = array<i32>} : memref<1x8x2xf32, #tpu.memory_space<vmem>>, vector<1x8x2xf32>,
    return
  }
  func.func @transform_0(%arg0: i32, %arg1: i32) -> (i32, i32, i32, i32, i32) {
    %c4_i32 = arith.constant 4 : i32
    %0 = arith.muli %arg1, %c4_i32 : i32
    %c0_i32 = arith.constant 0 : i32
    %1 = arith.addi %0, %c0_i32 : i32
    %c0_i32_0 = arith.constant 0 : i32
    %c0_i32_1 = arith.constant 0 : i32
    %c0_i32_2 = arith.constant 0 : i32
    %c0_i32_3 = arith.constant 0 : i32
    return %arg0, %1, %c0_i32_0, %c0_i32_1, %c0_i32_2 : i32, i32, i32, i32, i32
  }
  func.func @transform_1(%arg0: i32, %arg1: i32) -> (i32, i32, i32, i32, i32) {
    %c4_i32 = arith.constant 4 : i32
    %0 = arith.muli %arg1, %c4_i32 : i32
    %c1_i32 = arith.constant 1 : i32
    %1 = arith.addi %0, %c1_i32 : i32
    %c0_i32 = arith.constant 0 : i32
    %c0_i32_0 = arith.constant 0 : i32
    %c0_i32_1 = arith.constant 0 : i32
    %c0_i32_2 = arith.constant 0 : i32
    return %arg0, %1, %c0_i32, %c0_i32_0, %c0_i32_1 : i32, i32, i32, i32, i32
  }
  func.func @transform_2(%arg0: i32, %arg1: i32) -> (i32, i32, i32, i32, i32) {
    %c4_i32 = arith.constant 4 : i32
    %0 = arith.muli %arg1, %c4_i32 : i32
    %c2_i32 = arith.constant 2 : i32
    %1 = arith.addi %0, %c2_i32 : i32
    %c0_i32 = arith.constant 0 : i32
    %c0_i32_0 = arith.constant 0 : i32
    %c0_i32_1 = arith.constant 0 : i32
    %c0_i32_2 = arith.constant 0 : i32
    return %arg0, %1, %c0_i32, %c0_i32_0, %c0_i32_1 : i32, i32, i32, i32, i32
  }
  func.func @transform_3(%arg0: i32, %arg1: i32) -> (i32, i32, i32, i32, i32) {
    %c4_i32 = arith.constant 4 : i32
    %0 = arith.muli %arg1, %c4_i32 : i32
    %c3_i32 = arith.constant 3 : i32
    %1 = arith.addi %0, %c3_i32 : i32
    %c0_i32 = arith.constant 0 : i32
    %c0_i32_0 = arith.constant 0 : i32
    %c0_i32_1 = arith.constant 0 : i32
    %c0_i32_2 = arith.constant 0 : i32
    return %arg0, %1, %c0_i32, %c0_i32_0, %c0_i32_1 : i32, i32, i32, i32, i32
  }
  func.func @transform_4(%arg0: i32, %arg1: i32) -> (i32, i32, i32, i32, i32) {
    %c4_i32 = arith.constant 4 : i32
    %0 = arith.muli %arg1, %c4_i32 : i32
    %c4_i32_0 = arith.constant 4 : i32
    %1 = arith.addi %0, %c4_i32_0 : i32
    %c0_i32 = arith.constant 0 : i32
    %c0_i32_1 = arith.constant 0 : i32
    %c0_i32_2 = arith.constant 0 : i32
    %c0_i32_3 = arith.constant 0 : i32
    return %arg0, %1, %c0_i32, %c0_i32_1, %c0_i32_2 : i32, i32, i32, i32, i32
  }
  func.func @transform_5(%arg0: i32, %arg1: i32) -> (i32, i32, i32, i32, i32) {
    %c4_i32 = arith.constant 4 : i32
    %0 = arith.muli %arg1, %c4_i32 : i32
    %c5_i32 = arith.constant 5 : i32
    %1 = arith.addi %0, %c5_i32 : i32
    %c0_i32 = arith.constant 0 : i32
    %c0_i32_0 = arith.constant 0 : i32
    %c0_i32_1 = arith.constant 0 : i32
    %c0_i32_2 = arith.constant 0 : i32
    return %arg0, %1, %c0_i32, %c0_i32_0, %c0_i32_1 : i32, i32, i32, i32, i32
  }
  func.func @transform_6(%arg0: i32, %arg1: i32) -> (i32, i32, i32) {
    %c0_i32 = arith.constant 0 : i32
    %c0_i32_0 = arith.constant 0 : i32
    %c0_i32_1 = arith.constant 0 : i32
    %c0_i32_2 = arith.constant 0 : i32
    return %c0_i32, %c0_i32_0, %c0_i32_1 : i32, i32, i32
  }
  func.func @transform_7(%arg0: i32, %arg1: i32) -> (i32, i32) {
    %c0_i32 = arith.constant 0 : i32
    %c0_i32_0 = arith.constant 0 : i32
    %c0_i32_1 = arith.constant 0 : i32
    return %c0_i32, %c0_i32_0 : i32, i32
  }
  func.func @transform_8(%arg0: i32, %arg1: i32) -> (i32, i32, i32) {
    %c0_i32 = arith.constant 0 : i32
    %c0_i32_0 = arith.constant 0 : i32
    %c0_i32_1 = arith.constant 0 : i32
    return %arg0, %c0_i32, %c0_i32_0 : i32, i32, i32
  }
}

</mosaic_0001>

<llo_original>
// kernel: tpu_custom_call.1
$region0: #{tpu_custom_call.1}
  #allocation0 [shape = 'u32[]', space=smem, size = 0x4, offset = 0x4, fixed_abs, tag = 'smem constant byte address 0x4 - core index']
  #allocation1 [shape = 'u32[72,128]{1,0:T(1,128)}', space=vmem, size = 0x9000, scoped, tag = 'internal scratch']
  %s0 = inlined_call_operand.vmem [shape: f32[2,10,10,10,4], index: 0, kind: input, shape index: {}]
  %s1 = inlined_call_operand.vmem [shape: f32[2,10,10,10,4], index: 1, kind: input, shape index: {}]
  %s2 = inlined_call_operand.vmem [shape: f32[2,10,10,10,4], index: 2, kind: input, shape index: {}]
  %s3 = inlined_call_operand.vmem [shape: f32[2,10,10,10,4], index: 3, kind: input, shape index: {}]
  %s4 = inlined_call_operand.vmem [shape: f32[2,10,10,10,4], index: 4, kind: input, shape index: {}]
  %s5 = inlined_call_operand.vmem [shape: f32[2,10,10,10,4], index: 5, kind: input, shape index: {}]
  %s6 = inlined_call_operand.vmem [shape: f32[27,4,8], index: 6, kind: input, shape index: {}]
  %s7 = inlined_call_operand.vmem [shape: f32[8,1], index: 7, kind: input, shape index: {}]
  %s8 = inlined_call_operand.vmem [shape: f32[2,8,2], index: 8, kind: output, shape index: {}]
  %s9 = sld [smem:[#allocation0]]
  $region69: #{tpu_custom_call.1} parent=0
    _
  %s11 = ssub.s32 1, %s9
  %s12 = scalar_select 0, %s11, %s9
  loop: start=0, step=1, limit=6
  $region2: #{tpu_custom_call.1} parent=0 // loop_pre_header
    _
  $region3: #{tpu_custom_call.1} parent=0 // loop_header
    %s14 = sphi 0, %s18
    %p15 = scmp.ge.s32.totalorder %s14, 6
    %s21 = sphi 0, %s33
    %s22 = sphi 0, %s29
    %s23 = sphi 0, %s21
    %s24 = sphi 0, %s22
    %s25 = sphi 0, %s23
    %s26 = sphi 0, %s24
    %s40 = sphi 0, %s42
    %s43 = sphi 0, %s40
    %s44 = sphi 0, %s43
    %s60 = sphi 0, %s44
    %s72 = sphi 0, %s74
    %s75 = sphi 0, %s72
    %s76 = sphi 0, %s75
    %s92 = sphi 0, %s76
    %s104 = sphi 0, %s106
    %s107 = sphi 0, %s104
    %s108 = sphi 0, %s107
    %s124 = sphi 0, %s108
    %s136 = sphi 0, %s138
    %s139 = sphi 0, %s136
    %s140 = sphi 0, %s139
    %s156 = sphi 0, %s140
    %s168 = sphi 0, %s170
    %s171 = sphi 0, %s168
    %s172 = sphi 0, %s171
    %s188 = sphi 0, %s172
    %s200 = sphi 0, %s202
    %s203 = sphi 0, %s200
    %s204 = sphi 0, %s203
    %s220 = sphi 0, %s204
    %s224 = sphi 0, %s224
    %s226 = sphi 0, %s224
    %s227 = sphi 0, %s226
    %s241 = sphi 0, %s227
    %s245 = sphi 0, %s245
    %s247 = sphi 0, %s245
    %s248 = sphi 0, %s247
    %s262 = sphi 0, %s248
    %s268 = sphi 0, %s270
    %s271 = sphi 0, %s268
    %s272 = sphi 0, %s271
    %s288 = sphi 0, %s272
  $region4: #{tpu_custom_call.1} parent=0 // loop_header_branch
    %17 = sbr.rel (%p15) target = $region8
  $region5: #{tpu_custom_call.1} parent=0 // loop_body
    %s19 = ssub.s32 %s14, 1
    %s20 = ssub.s32 %s14, 2
    %s27 = sadd.s32 1, %s22
    %p28 = scmp.ge.s32.totalorder %s27, 2
    %s29 = scalar_select %p28, 0, %s27
    %s30 = sadd.s32 1, %s21
    %s31 = scalar_select %p28, %s30, %s21
    %p32 = scmp.ge.s32.totalorder %s31, 2
    %s33 = scalar_select %p32, 0, %s31
    %s34 = smul.u32 %s22, 4
    %s35 = smul.u32 %s29, 4
    %s36 = ssub.s32 %s21, %s33
    %s37 = ssub.s32 %s34, %s35
    %s38 = sor.u32 %s36, %s37
    %p39 = scmp.eq.s32.totalorder %s38, 0
    %s41 = sadd.s32 %s40, 1
    %s42 = scalar_select %p39, %s40, %s41
    %p45 = pneg %p39
    %p46 = scmp.eq.s32.totalorder %s14, 3
    %p47 = por %p45, %p46
    %p48 = scmp.ne.s32.totalorder %s40, %s43
    %p49 = scmp.eq.s32.totalorder %s14, 0
    %p50 = por %p48, %p49
    %p51 = scmp.ne.s32.totalorder %s40, %s43
    %p52 = scmp.eq.s32.totalorder %s19, 3
    %p53 = por %p51, %p52
    %p54 = scmp.ne.s32.totalorder %s43, %s44
    %p55 = scmp.eq.s32.totalorder %s19, 0
    %p56 = por %p54, %p55
    %p57 = scmp.ne.s32.totalorder %s43, %s44
    %p58 = scmp.eq.s32.totalorder %s20, 3
    %p59 = por %p57, %p58
    %p61 = scmp.ne.s32.totalorder %s44, %s60
    %p62 = scmp.eq.s32.totalorder %s20, 0
    %p63 = por %p61, %p62
    %s64 = smul.u32 %s22, 4
    %s65 = sadd.s32 %s64, 1
    %s66 = smul.u32 %s29, 4
    %s67 = sadd.s32 %s66, 1
    %s68 = ssub.s32 %s21, %s33
    %s69 = ssub.s32 %s65, %s67
    %s70 = sor.u32 %s68, %s69
    %p71 = scmp.eq.s32.totalorder %s70, 0
    %s73 = sadd.s32 %s72, 1
    %s74 = scalar_select %p71, %s72, %s73
    %p77 = pneg %p71
    %p78 = scmp.eq.s32.totalorder %s14, 3
    %p79 = por %p77, %p78
    %p80 = scmp.ne.s32.totalorder %s72, %s75
    %p81 = scmp.eq.s32.totalorder %s14, 0
    %p82 = por %p80, %p81
    %p83 = scmp.ne.s32.totalorder %s72, %s75
    %p84 = scmp.eq.s32.totalorder %s19, 3
    %p85 = por %p83, %p84
    %p86 = scmp.ne.s32.totalorder %s75, %s76
    %p87 = scmp.eq.s32.totalorder %s19, 0
    %p88 = por %p86, %p87
    %p89 = scmp.ne.s32.totalorder %s75, %s76
    %p90 = scmp.eq.s32.totalorder %s20, 3
    %p91 = por %p89, %p90
    %p93 = scmp.ne.s32.totalorder %s76, %s92
    %p94 = scmp.eq.s32.totalorder %s20, 0
    %p95 = por %p93, %p94
    %s96 = smul.u32 %s22, 4
    %s97 = sadd.s32 %s96, 2
    %s98 = smul.u32 %s29, 4
    %s99 = sadd.s32 %s98, 2
    %s100 = ssub.s32 %s21, %s33
    %s101 = ssub.s32 %s97, %s99
    %s102 = sor.u32 %s100, %s101
    %p103 = scmp.eq.s32.totalorder %s102, 0
    %s105 = sadd.s32 %s104, 1
    %s106 = scalar_select %p103, %s104, %s105
    %p109 = pneg %p103
    %p110 = scmp.eq.s32.totalorder %s14, 3
    %p111 = por %p109, %p110
    %p112 = scmp.ne.s32.totalorder %s104, %s107
    %p113 = scmp.eq.s32.totalorder %s14, 0
    %p114 = por %p112, %p113
    %p115 = scmp.ne.s32.totalorder %s104, %s107
    %p116 = scmp.eq.s32.totalorder %s19, 3
    %p117 = por %p115, %p116
    %p118 = scmp.ne.s32.totalorder %s107, %s108
    %p119 = scmp.eq.s32.totalorder %s19, 0
    %p120 = por %p118, %p119
    %p121 = scmp.ne.s32.totalorder %s107, %s108
    %p122 = scmp.eq.s32.totalorder %s20, 3
    %p123 = por %p121, %p122
    %p125 = scmp.ne.s32.totalorder %s108, %s124
    %p126 = scmp.eq.s32.totalorder %s20, 0
    %p127 = por %p125, %p126
    %s128 = smul.u32 %s22, 4
    %s129 = sadd.s32 %s128, 3
    %s130 = smul.u32 %s29, 4
    %s131 = sadd.s32 %s130, 3
    %s132 = ssub.s32 %s21, %s33
    %s133 = ssub.s32 %s129, %s131
    %s134 = sor.u32 %s132, %s133
    %p135 = scmp.eq.s32.totalorder %s134, 0
    %s137 = sadd.s32 %s136, 1
    %s138 = scalar_select %p135, %s136, %s137
    %p141 = pneg %p135
    %p142 = scmp.eq.s32.totalorder %s14, 3
    %p143 = por %p141, %p142
    %p144 = scmp.ne.s32.totalorder %s136, %s139
    %p145 = scmp.eq.s32.totalorder %s14, 0
    %p146 = por %p144, %p145
    %p147 = scmp.ne.s32.totalorder %s136, %s139
    %p148 = scmp.eq.s32.totalorder %s19, 3
    %p149 = por %p147, %p148
    %p150 = scmp.ne.s32.totalorder %s139, %s140
    %p151 = scmp.eq.s32.totalorder %s19, 0
    %p152 = por %p150, %p151
    %p153 = scmp.ne.s32.totalorder %s139, %s140
    %p154 = scmp.eq.s32.totalorder %s20, 3
    %p155 = por %p153, %p154
    %p157 = scmp.ne.s32.totalorder %s140, %s156
    %p158 = scmp.eq.s32.totalorder %s20, 0
    %p159 = por %p157, %p158
    %s160 = smul.u32 %s22, 4
    %s161 = sadd.s32 %s160, 4
    %s162 = smul.u32 %s29, 4
    %s163 = sadd.s32 %s162, 4
    %s164 = ssub.s32 %s21, %s33
    %s165 = ssub.s32 %s161, %s163
    %s166 = sor.u32 %s164, %s165
    %p167 = scmp.eq.s32.totalorder %s166, 0
    %s169 = sadd.s32 %s168, 1
    %s170 = scalar_select %p167, %s168, %s169
    %p173 = pneg %p167
    %p174 = scmp.eq.s32.totalorder %s14, 3
    %p175 = por %p173, %p174
    %p176 = scmp.ne.s32.totalorder %s168, %s171
    %p177 = scmp.eq.s32.totalorder %s14, 0
    %p178 = por %p176, %p177
    %p179 = scmp.ne.s32.totalorder %s168, %s171
    %p180 = scmp.eq.s32.totalorder %s19, 3
    %p181 = por %p179, %p180
    %p182 = scmp.ne.s32.totalorder %s171, %s172
    %p183 = scmp.eq.s32.totalorder %s19, 0
    %p184 = por %p182, %p183
    %p185 = scmp.ne.s32.totalorder %s171, %s172
    %p186 = scmp.eq.s32.totalorder %s20, 3
    %p187 = por %p185, %p186
    %p189 = scmp.ne.s32.totalorder %s172, %s188
    %p190 = scmp.eq.s32.totalorder %s20, 0
    %p191 = por %p189, %p190
    %s192 = smul.u32 %s22, 4
    %s193 = sadd.s32 %s192, 5
    %s194 = smul.u32 %s29, 4
    %s195 = sadd.s32 %s194, 5
    %s196 = ssub.s32 %s21, %s33
    %s197 = ssub.s32 %s193, %s195
    %s198 = sor.u32 %s196, %s197
    %p199 = scmp.eq.s32.totalorder %s198, 0
    %s201 = sadd.s32 %s200, 1
    %s202 = scalar_select %p199, %s200, %s201
    %p205 = pneg %p199
    %p206 = scmp.eq.s32.totalorder %s14, 3
    %p207 = por %p205, %p206
    %p208 = scmp.ne.s32.totalorder %s200, %s203
    %p209 = scmp.eq.s32.totalorder %s14, 0
    %p210 = por %p208, %p209
    %p211 = scmp.ne.s32.totalorder %s200, %s203
    %p212 = scmp.eq.s32.totalorder %s19, 3
    %p213 = por %p211, %p212
    %p214 = scmp.ne.s32.totalorder %s203, %s204
    %p215 = scmp.eq.s32.totalorder %s19, 0
    %p216 = por %p214, %p215
    %p217 = scmp.ne.s32.totalorder %s203, %s204
    %p218 = scmp.eq.s32.totalorder %s20, 3
    %p219 = por %p217, %p218
    %p221 = scmp.ne.s32.totalorder %s204, %s220
    %p222 = scmp.eq.s32.totalorder %s20, 0
    %p223 = por %p221, %p222
    %s225 = sadd.s32 %s224, 1
    %p228 = scmp.eq.s32.totalorder %s14, 3
    %p229 = scmp.ne.s32.totalorder %s224, %s226
    %p230 = scmp.eq.s32.totalorder %s14, 0
    %p231 = por %p229, %p230
    %p232 = scmp.ne.s32.totalorder %s224, %s226
    %p233 = scmp.eq.s32.totalorder %s19, 3
    %p234 = por %p232, %p233
    %p235 = scmp.ne.s32.totalorder %s226, %s227
    %p236 = scmp.eq.s32.totalorder %s19, 0
    %p237 = por %p235, %p236
    %p238 = scmp.ne.s32.totalorder %s226, %s227
    %p239 = scmp.eq.s32.totalorder %s20, 3
    %p240 = por %p238, %p239
    %p242 = scmp.ne.s32.totalorder %s227, %s241
    %p243 = scmp.eq.s32.totalorder %s20, 0
    %p244 = por %p242, %p243
    %s246 = sadd.s32 %s245, 1
    %p249 = scmp.eq.s32.totalorder %s14, 3
    %p250 = scmp.ne.s32.totalorder %s245, %s247
    %p251 = scmp.eq.s32.totalorder %s14, 0
    %p252 = por %p250, %p251
    %p253 = scmp.ne.s32.totalorder %s245, %s247
    %p254 = scmp.eq.s32.totalorder %s19, 3
    %p255 = por %p253, %p254
    %p256 = scmp.ne.s32.totalorder %s247, %s248
    %p257 = scmp.eq.s32.totalorder %s19, 0
    %p258 = por %p256, %p257
    %p259 = scmp.ne.s32.totalorder %s247, %s248
    %p260 = scmp.eq.s32.totalorder %s20, 3
    %p261 = por %p259, %p260
    %p263 = scmp.ne.s32.totalorder %s248, %s262
    %p264 = scmp.eq.s32.totalorder %s20, 0
    %p265 = por %p263, %p264
    %s266 = ssub.s32 %s21, %s33
    %p267 = scmp.eq.s32.totalorder %s266, 0
    %s269 = sadd.s32 %s268, 1
    %s270 = scalar_select %p267, %s268, %s269
    %p273 = pneg %p267
    %p274 = scmp.eq.s32.totalorder %s14, 3
    %p275 = por %p273, %p274
    %p276 = scmp.ne.s32.totalorder %s268, %s271
    %p277 = scmp.eq.s32.totalorder %s14, 0
    %p278 = por %p276, %p277
    %p279 = scmp.ne.s32.totalorder %s268, %s271
    %p280 = scmp.eq.s32.totalorder %s19, 3
    %p281 = por %p279, %p280
    %p282 = scmp.ne.s32.totalorder %s271, %s272
    %p283 = scmp.eq.s32.totalorder %s19, 0
    %p284 = por %p282, %p283
    %p285 = scmp.ne.s32.totalorder %s271, %s272
    %p286 = scmp.eq.s32.totalorder %s20, 3
    %p287 = por %p285, %p286
    %p289 = scmp.ne.s32.totalorder %s272, %s288
    %p290 = scmp.eq.s32.totalorder %s20, 0
    %p291 = por %p289, %p290
    %p292 = scmp.le.s32.totalorder 1, %s14
    %p293 = scmp.lt.s32.totalorder %s14, 5
    %p294 = pnand %p292, %p293
    %p295 = pneg %p294
    // Predicated region
    $region9: #{tpu_custom_call.1} parent=5 // pred_check
      _
    $region10: #{tpu_custom_call.1} parent=5 // pred_check_branch
      %297 = sbr.rel (%p294) target = $region12
    $region11: #{tpu_custom_call.1} parent=5 // pred_region
      %s298 = ssub.s32 %s14, 1
      // Predicated region
      $region13: #{tpu_custom_call.1} parent=11 // pred_check
        %p299 = pneg %p237
      $region14: #{tpu_custom_call.1} parent=11 // pred_check_branch
        %301 = sbr.rel (%p299) target = $region16
      $region15: #{tpu_custom_call.1} parent=11 // pred_region
        _
      $region16: #{tpu_custom_call.1} parent=11 // pred_fallthru
        _
      // Predicated region
      $region17: #{tpu_custom_call.1} parent=11 // pred_check
        %p302 = pneg %p258
      $region18: #{tpu_custom_call.1} parent=11 // pred_check_branch
        %304 = sbr.rel (%p302) target = $region20
      $region19: #{tpu_custom_call.1} parent=11 // pred_region
        _
      $region20: #{tpu_custom_call.1} parent=11 // pred_fallthru
        _
    $region12: #{tpu_custom_call.1} parent=5 // pred_fallthru
      _
    %p305 = scmp.lt.s32.totalorder %s14, 4
    // Predicated region
    $region21: #{tpu_custom_call.1} parent=5 // pred_check
      %p306 = pneg %p305
    $region22: #{tpu_custom_call.1} parent=5 // pred_check_branch
      %308 = sbr.rel (%p306) target = $region24
    $region23: #{tpu_custom_call.1} parent=5 // pred_region
      // Predicated region
      $region25: #{tpu_custom_call.1} parent=23 // pred_check
        %p309 = pneg %p50
      $region26: #{tpu_custom_call.1} parent=23 // pred_check_branch
        %311 = sbr.rel (%p309) target = $region28
      $region27: #{tpu_custom_call.1} parent=23 // pred_region
        %s312 = smul.u32 %s22, 4
        %p313 = scmp.lt.s32.totalorder %s21, 1
        %s314 = scalar_select %p313, %s21, 1
        %p315 = scmp.lt.s32.totalorder %s312, 9
        %s316 = scalar_select %p315, %s312, 9
        %s317 = smul.addr %s316, 20
        %s318 = smul.addr %s314, 200
        %s319 = sadd.s32 %s317, %s318
        %s320 = smul.addr %s319, 8
        %s321 = scalar_lea.vmem %s0, %s320
        %s322 = smul.u32 %s22, 4
      $region28: #{tpu_custom_call.1} parent=23 // pred_fallthru
        _
      // Predicated region
      $region29: #{tpu_custom_call.1} parent=23 // pred_check
        %p323 = pneg %p82
      $region30: #{tpu_custom_call.1} parent=23 // pred_check_branch
        %325 = sbr.rel (%p323) target = $region32
      $region31: #{tpu_custom_call.1} parent=23 // pred_region
        %s326 = smul.u32 %s22, 4
        %s327 = sadd.s32 %s326, 1
        %p328 = scmp.lt.s32.totalorder %s21, 1
        %s329 = scalar_select %p328, %s21, 1
        %p330 = scmp.lt.s32.totalorder %s327, 9
        %s331 = scalar_select %p330, %s327, 9
        %s332 = smul.addr %s331, 20
        %s333 = smul.addr %s329, 200
        %s334 = sadd.s32 %s332, %s333
        %s335 = smul.addr %s334, 8
        %s336 = scalar_lea.vmem %s1, %s335
        %s337 = smul.u32 %s22, 4
        %s338 = sadd.s32 %s337, 1
      $region32: #{tpu_custom_call.1} parent=23 // pred_fallthru
        _
      // Predicated region
      $region33: #{tpu_custom_call.1} parent=23 // pred_check
        %p339 = pneg %p114
      $region34: #{tpu_custom_call.1} parent=23 // pred_check_branch
        %341 = sbr.rel (%p339) target = $region36
      $region35: #{tpu_custom_call.1} parent=23 // pred_region
        %s342 = smul.u32 %s22, 4
        %s343 = sadd.s32 %s342, 2
        %p344 = scmp.lt.s32.totalorder %s21, 1
        %s345 = scalar_select %p344, %s21, 1
        %p346 = scmp.lt.s32.totalorder %s343, 9
        %s347 = scalar_select %p346, %s343, 9
        %s348 = smul.addr %s347, 20
        %s349 = smul.addr %s345, 200
        %s350 = sadd.s32 %s348, %s349
        %s351 = smul.addr %s350, 8
        %s352 = scalar_lea.vmem %s2, %s351
        %s353 = smul.u32 %s22, 4
        %s354 = sadd.s32 %s353, 2
      $region36: #{tpu_custom_call.1} parent=23 // pred_fallthru
        _
      // Predicated region
      $region37: #{tpu_custom_call.1} parent=23 // pred_check
        %p355 = pneg %p146
      $region38: #{tpu_custom_call.1} parent=23 // pred_check_branch
        %357 = sbr.rel (%p355) target = $region40
      $region39: #{tpu_custom_call.1} parent=23 // pred_region
        %s358 = smul.u32 %s22, 4
        %s359 = sadd.s32 %s358, 3
        %p360 = scmp.lt.s32.totalorder %s21, 1
        %s361 = scalar_select %p360, %s21, 1
        %p362 = scmp.lt.s32.totalorder %s359, 9
        %s363 = scalar_select %p362, %s359, 9
        %s364 = smul.addr %s363, 20
        %s365 = smul.addr %s361, 200
        %s366 = sadd.s32 %s364, %s365
        %s367 = smul.addr %s366, 8
        %s368 = scalar_lea.vmem %s3, %s367
        %s369 = smul.u32 %s22, 4
        %s370 = sadd.s32 %s369, 3
      $region40: #{tpu_custom_call.1} parent=23 // pred_fallthru
        _
      // Predicated region
      $region41: #{tpu_custom_call.1} parent=23 // pred_check
        %p371 = pneg %p178
      $region42: #{tpu_custom_call.1} parent=23 // pred_check_branch
        %373 = sbr.rel (%p371) target = $region44
      $region43: #{tpu_custom_call.1} parent=23 // pred_region
        %s374 = smul.u32 %s22, 4
        %s375 = sadd.s32 %s374, 4
        %p376 = scmp.lt.s32.totalorder %s21, 1
        %s377 = scalar_select %p376, %s21, 1
        %p378 = scmp.lt.s32.totalorder %s375, 9
        %s379 = scalar_select %p378, %s375, 9
        %s380 = smul.addr %s379, 20
        %s381 = smul.addr %s377, 200
        %s382 = sadd.s32 %s380, %s381
        %s383 = smul.addr %s382, 8
        %s384 = scalar_lea.vmem %s4, %s383
        %s385 = smul.u32 %s22, 4
        %s386 = sadd.s32 %s385, 4
      $region44: #{tpu_custom_call.1} parent=23 // pred_fallthru
        _
      // Predicated region
      $region45: #{tpu_custom_call.1} parent=23 // pred_check
        %p387 = pneg %p210
      $region46: #{tpu_custom_call.1} parent=23 // pred_check_branch
        %389 = sbr.rel (%p387) target = $region48
      $region47: #{tpu_custom_call.1} parent=23 // pred_region
        %s390 = smul.u32 %s22, 4
        %s391 = sadd.s32 %s390, 5
        %p392 = scmp.lt.s32.totalorder %s21, 1
        %s393 = scalar_select %p392, %s21, 1
        %p394 = scmp.lt.s32.totalorder %s391, 9
        %s395 = scalar_select %p394, %s391, 9
        %s396 = smul.addr %s395, 20
        %s397 = smul.addr %s393, 200
        %s398 = sadd.s32 %s396, %s397
        %s399 = smul.addr %s398, 8
        %s400 = scalar_lea.vmem %s5, %s399
        %s401 = smul.u32 %s22, 4
        %s402 = sadd.s32 %s401, 5
      $region48: #{tpu_custom_call.1} parent=23 // pred_fallthru
        _
    $region24: #{tpu_custom_call.1} parent=5 // pred_fallthru
      _
    %p403 = scmp.le.s32.totalorder 1, %s14
    %p404 = scmp.lt.s32.totalorder %s14, 5
    %p405 = pnand %p403, %p404
    %p406 = pneg %p405
    // Predicated region
    $region49: #{tpu_custom_call.1} parent=5 // pred_check
      _
    $region50: #{tpu_custom_call.1} parent=5 // pred_check_branch
      %408 = sbr.rel (%p405) target = $region52
    $region51: #{tpu_custom_call.1} parent=5 // pred_region
      %s409 = ssub.s32 %s14, 1
      %s410 = smul.u32 %s24, 4
      %p411 = scmp.lt.s32.totalorder %s23, 1
      %s412 = scalar_select %p411, %s23, 1
      %p413 = scmp.lt.s32.totalorder %s410, 9
      %s414 = scalar_select %p413, %s410, 9
      %s415 = smul.addr %s414, 20
      %s416 = smul.addr %s412, 200
      %s417 = sadd.s32 %s415, %s416
      %s418 = smul.addr %s417, 8
      %s419 = scalar_lea.vmem %s0, %s418
      %p420 = pneg %p56
      %p421 = pneg %p53
      %s422 = smul.u32 %s24, 4
      %s423 = sadd.s32 %s422, 1
      %p424 = scmp.lt.s32.totalorder %s23, 1
      %s425 = scalar_select %p424, %s23, 1
      %p426 = scmp.lt.s32.totalorder %s423, 9
      %s427 = scalar_select %p426, %s423, 9
      %s428 = smul.addr %s427, 20
      %s429 = smul.addr %s425, 200
      %s430 = sadd.s32 %s428, %s429
      %s431 = smul.addr %s430, 8
      %s432 = scalar_lea.vmem %s1, %s431
      %p433 = pneg %p88
      %p434 = pneg %p85
      %s435 = smul.u32 %s24, 4
      %s436 = sadd.s32 %s435, 2
      %p437 = scmp.lt.s32.totalorder %s23, 1
      %s438 = scalar_select %p437, %s23, 1
      %p439 = scmp.lt.s32.totalorder %s436, 9
      %s440 = scalar_select %p439, %s436, 9
      %s441 = smul.addr %s440, 20
      %s442 = smul.addr %s438, 200
      %s443 = sadd.s32 %s441, %s442
      %s444 = smul.addr %s443, 8
      %s445 = scalar_lea.vmem %s2, %s444
      %p446 = pneg %p120
      %p447 = pneg %p117
      %s448 = smul.u32 %s24, 4
      %s449 = sadd.s32 %s448, 3
      %p450 = scmp.lt.s32.totalorder %s23, 1
      %s451 = scalar_select %p450, %s23, 1
      %p452 = scmp.lt.s32.totalorder %s449, 9
      %s453 = scalar_select %p452, %s449, 9
      %s454 = smul.addr %s453, 20
      %s455 = smul.addr %s451, 200
      %s456 = sadd.s32 %s454, %s455
      %s457 = smul.addr %s456, 8
      %s458 = scalar_lea.vmem %s3, %s457
      %p459 = pneg %p152
      %p460 = pneg %p149
      %s461 = smul.u32 %s24, 4
      %s462 = sadd.s32 %s461, 4
      %p463 = scmp.lt.s32.totalorder %s23, 1
      %s464 = scalar_select %p463, %s23, 1
      %p465 = scmp.lt.s32.totalorder %s462, 9
      %s466 = scalar_select %p465, %s462, 9
      %s467 = smul.addr %s466, 20
      %s468 = smul.addr %s464, 200
      %s469 = sadd.s32 %s467, %s468
      %s470 = smul.addr %s469, 8
      %s471 = scalar_lea.vmem %s4, %s470
      %p472 = pneg %p184
      %p473 = pneg %p181
      %s474 = smul.u32 %s24, 4
      %s475 = sadd.s32 %s474, 5
      %p476 = scmp.lt.s32.totalorder %s23, 1
      %s477 = scalar_select %p476, %s23, 1
      %p478 = scmp.lt.s32.totalorder %s475, 9
      %s479 = scalar_select %p478, %s475, 9
      %s480 = smul.addr %s479, 20
      %s481 = smul.addr %s477, 200
      %s482 = sadd.s32 %s480, %s481
      %s483 = smul.addr %s482, 8
      %s484 = scalar_lea.vmem %s5, %s483
      %p485 = pneg %p216
      %p486 = pneg %p213
      %p487 = pneg %p237
      %p488 = pneg %p234
      %p489 = pneg %p258
      %p490 = pneg %p255
      %p491 = pneg %p284
      %p492 = pneg %p281
      %p493 = scmp.lt.s32.totalorder %s23, 1
      %s494 = scalar_select %p493, %s23, 1
      %s495 = smul.addr %s494, 8
      %s496 = scalar_lea.vmem %s8, %s495
      %s497 = smul.u32 %s24, 4
      %p498 = scmp.lt.s32.totalorder %s23, 1
      %s499 = scalar_select %p498, %s23, 1
      %p500 = scmp.lt.s32.totalorder %s497, 9
      %s501 = scalar_select %p500, %s497, 9
      %s502 = smul.addr %s501, 20
      %s503 = smul.addr %s499, 200
      %s504 = sadd.s32 %s502, %s503
      %s505 = smul.addr %s504, 8
      %s506 = scalar_lea.vmem %s0, %s505
      %s507 = smul.u32 %s24, 4
      %s508 = smul.u32 %s24, 4
      %s509 = sadd.s32 %s508, 1
      %p510 = scmp.lt.s32.totalorder %s23, 1
      %s511 = scalar_select %p510, %s23, 1
      %p512 = scmp.lt.s32.totalorder %s509, 9
      %s513 = scalar_select %p512, %s509, 9
      %s514 = smul.addr %s513, 20
      %s515 = smul.addr %s511, 200
      %s516 = sadd.s32 %s514, %s515
      %s517 = smul.addr %s516, 8
      %s518 = scalar_lea.vmem %s1, %s517
      %s519 = smul.u32 %s24, 4
      %s520 = sadd.s32 %s519, 1
      %s521 = smul.u32 %s24, 4
      %s522 = sadd.s32 %s521, 2
      %p523 = scmp.lt.s32.totalorder %s23, 1
      %s524 = scalar_select %p523, %s23, 1
      %p525 = scmp.lt.s32.totalorder %s522, 9
      %s526 = scalar_select %p525, %s522, 9
      %s527 = smul.addr %s526, 20
      %s528 = smul.addr %s524, 200
      %s529 = sadd.s32 %s527, %s528
      %s530 = smul.addr %s529, 8
      %s531 = scalar_lea.vmem %s2, %s530
      %s532 = smul.u32 %s24, 4
      %s533 = sadd.s32 %s532, 2
      %s534 = smul.u32 %s24, 4
      %s535 = sadd.s32 %s534, 3
      %p536 = scmp.lt.s32.totalorder %s23, 1
      %s537 = scalar_select %p536, %s23, 1
      %p538 = scmp.lt.s32.totalorder %s535, 9
      %s539 = scalar_select %p538, %s535, 9
      %s540 = smul.addr %s539, 20
      %s541 = smul.addr %s537, 200
      %s542 = sadd.s32 %s540, %s541
      %s543 = smul.addr %s542, 8
      %s544 = scalar_lea.vmem %s3, %s543
      %s545 = smul.u32 %s24, 4
      %s546 = sadd.s32 %s545, 3
      %s547 = smul.u32 %s24, 4
      %s548 = sadd.s32 %s547, 4
      %p549 = scmp.lt.s32.totalorder %s23, 1
      %s550 = scalar_select %p549, %s23, 1
      %p551 = scmp.lt.s32.totalorder %s548, 9
      %s552 = scalar_select %p551, %s548, 9
      %s553 = smul.addr %s552, 20
      %s554 = smul.addr %s550, 200
      %s555 = sadd.s32 %s553, %s554
      %s556 = smul.addr %s555, 8
      %s557 = scalar_lea.vmem %s4, %s556
      %s558 = smul.u32 %s24, 4
      %s559 = sadd.s32 %s558, 4
      %s560 = smul.u32 %s24, 4
      %s561 = sadd.s32 %s560, 5
      %p562 = scmp.lt.s32.totalorder %s23, 1
      %s563 = scalar_select %p562, %s23, 1
      %p564 = scmp.lt.s32.totalorder %s561, 9
      %s565 = scalar_select %p564, %s561, 9
      %s566 = smul.addr %s565, 20
      %s567 = smul.addr %s563, 200
      %s568 = sadd.s32 %s566, %s567
      %s569 = smul.addr %s568, 8
      %s570 = scalar_lea.vmem %s5, %s569
      %s571 = smul.u32 %s24, 4
      %s572 = sadd.s32 %s571, 5
      %p573 = scmp.lt.s32.totalorder %s23, 1
      %s574 = scalar_select %p573, %s23, 1
      %s575 = smul.addr %s574, 8
      %s576 = scalar_lea.vmem %s8, %s575
      %v577 = vld [vmem:[%s506] sm:$0xff]
      %v578 = vld [vmem:[%s506 + $0x8] sm:$0x3]
      %v579 = vld [vmem:[%s506 + $0x10] sm:$0xff]
      %v580 = vld [vmem:[%s506 + $0x18] sm:$0x3]
      %v581 = vld [vmem:[%s506 + $0x20] sm:$0xff]
      %v582 = vld [vmem:[%s506 + $0x28] sm:$0x3]
      %v583 = vld [vmem:[%s506 + $0x30] sm:$0xff]
      %v584 = vld [vmem:[%s506 + $0x38] sm:$0x3]
      %v585 = vld [vmem:[%s506 + $0x40] sm:$0xff]
      %v586 = vld [vmem:[%s506 + $0x48] sm:$0x3]
      %v587 = vld [vmem:[%s506 + $0x50] sm:$0xff]
      %v588 = vld [vmem:[%s506 + $0x58] sm:$0x3]
      %v589 = vld [vmem:[%s506 + $0x60] sm:$0xff]
      %v590 = vld [vmem:[%s506 + $0x68] sm:$0x3]
      %v591 = vld [vmem:[%s506 + $0x70] sm:$0xff]
      %v592 = vld [vmem:[%s506 + $0x78] sm:$0x3]
      %v593 = vld [vmem:[%s506 + $0x80] sm:$0xff]
      %v594 = vld [vmem:[%s506 + $0x88] sm:$0x3]
      %v595 = vld [vmem:[%s506 + $0x90] sm:$0xff]
      %v596 = vld [vmem:[%s506 + $0x98] sm:$0x3]
      %v597 = vld [vmem:[%s518] sm:$0xff]
      %v598 = vld [vmem:[%s518 + $0x8] sm:$0x3]
      %v599 = vld [vmem:[%s518 + $0x10] sm:$0xff]
      %v600 = vld [vmem:[%s518 + $0x18] sm:$0x3]
      %v601 = vld [vmem:[%s518 + $0x20] sm:$0xff]
      %v602 = vld [vmem:[%s518 + $0x28] sm:$0x3]
      %v603 = vld [vmem:[%s518 + $0x30] sm:$0xff]
      %v604 = vld [vmem:[%s518 + $0x38] sm:$0x3]
      %v605 = vld [vmem:[%s518 + $0x40] sm:$0xff]
      %v606 = vld [vmem:[%s518 + $0x48] sm:$0x3]
      %v607 = vld [vmem:[%s518 + $0x50] sm:$0xff]
      %v608 = vld [vmem:[%s518 + $0x58] sm:$0x3]
      %v609 = vld [vmem:[%s518 + $0x60] sm:$0xff]
      %v610 = vld [vmem:[%s518 + $0x68] sm:$0x3]
      %v611 = vld [vmem:[%s518 + $0x70] sm:$0xff]
      %v612 = vld [vmem:[%s518 + $0x78] sm:$0x3]
      %v613 = vld [vmem:[%s518 + $0x80] sm:$0xff]
      %v614 = vld [vmem:[%s518 + $0x88] sm:$0x3]
      %v615 = vld [vmem:[%s518 + $0x90] sm:$0xff]
      %v616 = vld [vmem:[%s518 + $0x98] sm:$0x3]
      %v617 = vld [vmem:[%s531] sm:$0xff]
      %v618 = vld [vmem:[%s531 + $0x8] sm:$0x3]
      %v619 = vld [vmem:[%s531 + $0x10] sm:$0xff]
      %v620 = vld [vmem:[%s531 + $0x18] sm:$0x3]
      %v621 = vld [vmem:[%s531 + $0x20] sm:$0xff]
      %v622 = vld [vmem:[%s531 + $0x28] sm:$0x3]
      %v623 = vld [vmem:[%s531 + $0x30] sm:$0xff]
      %v624 = vld [vmem:[%s531 + $0x38] sm:$0x3]
      %v625 = vld [vmem:[%s531 + $0x40] sm:$0xff]
      %v626 = vld [vmem:[%s531 + $0x48] sm:$0x3]
      %v627 = vld [vmem:[%s531 + $0x50] sm:$0xff]
      %v628 = vld [vmem:[%s531 + $0x58] sm:$0x3]
      %v629 = vld [vmem:[%s531 + $0x60] sm:$0xff]
      %v630 = vld [vmem:[%s531 + $0x68] sm:$0x3]
      %v631 = vld [vmem:[%s531 + $0x70] sm:$0xff]
      %v632 = vld [vmem:[%s531 + $0x78] sm:$0x3]
      %v633 = vld [vmem:[%s531 + $0x80] sm:$0xff]
      %v634 = vld [vmem:[%s531 + $0x88] sm:$0x3]
      %v635 = vld [vmem:[%s531 + $0x90] sm:$0xff]
      %v636 = vld [vmem:[%s531 + $0x98] sm:$0x3]
      %v637 = vld [vmem:[%s544] sm:$0xff]
      %v638 = vld [vmem:[%s544 + $0x8] sm:$0x3]
      %v639 = vld [vmem:[%s544 + $0x10] sm:$0xff]
      %v640 = vld [vmem:[%s544 + $0x18] sm:$0x3]
      %v641 = vld [vmem:[%s544 + $0x20] sm:$0xff]
      %v642 = vld [vmem:[%s544 + $0x28] sm:$0x3]
      %v643 = vld [vmem:[%s544 + $0x30] sm:$0xff]
      %v644 = vld [vmem:[%s544 + $0x38] sm:$0x3]
      %v645 = vld [vmem:[%s544 + $0x40] sm:$0xff]
      %v646 = vld [vmem:[%s544 + $0x48] sm:$0x3]
      %v647 = vld [vmem:[%s544 + $0x50] sm:$0xff]
      %v648 = vld [vmem:[%s544 + $0x58] sm:$0x3]
      %v649 = vld [vmem:[%s544 + $0x60] sm:$0xff]
      %v650 = vld [vmem:[%s544 + $0x68] sm:$0x3]
      %v651 = vld [vmem:[%s544 + $0x70] sm:$0xff]
      %v652 = vld [vmem:[%s544 + $0x78] sm:$0x3]
      %v653 = vld [vmem:[%s544 + $0x80] sm:$0xff]
      %v654 = vld [vmem:[%s544 + $0x88] sm:$0x3]
      %v655 = vld [vmem:[%s544 + $0x90] sm:$0xff]
      %v656 = vld [vmem:[%s544 + $0x98] sm:$0x3]
      %v657 = vld [vmem:[%s557] sm:$0xff]
      %v658 = vld [vmem:[%s557 + $0x8] sm:$0x3]
      %v659 = vld [vmem:[%s557 + $0x10] sm:$0xff]
      %v660 = vld [vmem:[%s557 + $0x18] sm:$0x3]
      %v661 = vld [vmem:[%s557 + $0x20] sm:$0xff]
      %v662 = vld [vmem:[%s557 + $0x28] sm:$0x3]
      %v663 = vld [vmem:[%s557 + $0x30] sm:$0xff]
      %v664 = vld [vmem:[%s557 + $0x38] sm:$0x3]
      %v665 = vld [vmem:[%s557 + $0x40] sm:$0xff]
      %v666 = vld [vmem:[%s557 + $0x48] sm:$0x3]
      %v667 = vld [vmem:[%s557 + $0x50] sm:$0xff]
      %v668 = vld [vmem:[%s557 + $0x58] sm:$0x3]
      %v669 = vld [vmem:[%s557 + $0x60] sm:$0xff]
      %v670 = vld [vmem:[%s557 + $0x68] sm:$0x3]
      %v671 = vld [vmem:[%s557 + $0x70] sm:$0xff]
      %v672 = vld [vmem:[%s557 + $0x78] sm:$0x3]
      %v673 = vld [vmem:[%s557 + $0x80] sm:$0xff]
      %v674 = vld [vmem:[%s557 + $0x88] sm:$0x3]
      %v675 = vld [vmem:[%s557 + $0x90] sm:$0xff]
      %v676 = vld [vmem:[%s557 + $0x98] sm:$0x3]
      %v677 = vld [vmem:[%s570] sm:$0xff]
      %v678 = vld [vmem:[%s570 + $0x8] sm:$0x3]
      %v679 = vld [vmem:[%s570 + $0x10] sm:$0xff]
      %v680 = vld [vmem:[%s570 + $0x18] sm:$0x3]
      %v681 = vld [vmem:[%s570 + $0x20] sm:$0xff]
      %v682 = vld [vmem:[%s570 + $0x28] sm:$0x3]
      %v683 = vld [vmem:[%s570 + $0x30] sm:$0xff]
      %v684 = vld [vmem:[%s570 + $0x38] sm:$0x3]
      %v685 = vld [vmem:[%s570 + $0x40] sm:$0xff]
      %v686 = vld [vmem:[%s570 + $0x48] sm:$0x3]
      %v687 = vld [vmem:[%s570 + $0x50] sm:$0xff]
      %v688 = vld [vmem:[%s570 + $0x58] sm:$0x3]
      %v689 = vld [vmem:[%s570 + $0x60] sm:$0xff]
      %v690 = vld [vmem:[%s570 + $0x68] sm:$0x3]
      %v691 = vld [vmem:[%s570 + $0x70] sm:$0xff]
      %v692 = vld [vmem:[%s570 + $0x78] sm:$0x3]
      %v693 = vld [vmem:[%s570 + $0x80] sm:$0xff]
      %v694 = vld [vmem:[%s570 + $0x88] sm:$0x3]
      %v695 = vld [vmem:[%s570 + $0x90] sm:$0xff]
      %v696 = vld [vmem:[%s570 + $0x98] sm:$0x3]
      %v697 = vld [vmem:[%s6] sm:$0xf]
      %vm762 = vcmask 1046528
      %v763 = vrot.slane %v577, 1
      %v764 = vrot.slane %v578, 1
      %v765 = vsel %vm762, %v763, %v764
      %v766 = vrot.slane %v579, 1
      %v767 = vrot.slane %v580, 1
      %v768 = vsel %vm762, %v766, %v767
      %v769 = vrot.slane %v581, 1
      %v770 = vrot.slane %v582, 1
      %v771 = vsel %vm762, %v769, %v770
      %v772 = vrot.slane %v583, 1
      %v773 = vrot.slane %v584, 1
      %v774 = vsel %vm762, %v772, %v773
      %v775 = vrot.slane %v585, 1
      %v776 = vrot.slane %v586, 1
      %v777 = vsel %vm762, %v775, %v776
      %v778 = vrot.slane %v587, 1
      %v779 = vrot.slane %v588, 1
      %v780 = vsel %vm762, %v778, %v779
      %v781 = vrot.slane %v589, 1
      %v782 = vrot.slane %v590, 1
      %v783 = vsel %vm762, %v781, %v782
      %v784 = vrot.slane %v591, 1
      %v785 = vrot.slane %v592, 1
      %v786 = vsel %vm762, %v784, %v785
      %v787 = vrot.slane %v597, 1
      %v788 = vrot.slane %v598, 1
      %v789 = vsel %vm762, %v787, %v788
      %v790 = vrot.slane %v599, 1
      %v791 = vrot.slane %v600, 1
      %v792 = vsel %vm762, %v790, %v791
      %v793 = vrot.slane %v601, 1
      %v794 = vrot.slane %v602, 1
      %v795 = vsel %vm762, %v793, %v794
      %v796 = vrot.slane %v603, 1
      %v797 = vrot.slane %v604, 1
      %v798 = vsel %vm762, %v796, %v797
      %v799 = vrot.slane %v605, 1
      %v800 = vrot.slane %v606, 1
      %v801 = vsel %vm762, %v799, %v800
      %v802 = vrot.slane %v607, 1
      %v803 = vrot.slane %v608, 1
      %v804 = vsel %vm762, %v802, %v803
      %v805 = vrot.slane %v609, 1
      %v806 = vrot.slane %v610, 1
      %v807 = vsel %vm762, %v805, %v806
      %v808 = vrot.slane %v611, 1
      %v809 = vrot.slane %v612, 1
      %v810 = vsel %vm762, %v808, %v809
      %v811 = vrot.slane %v617, 1
      %v812 = vrot.slane %v618, 1
      %v813 = vsel %vm762, %v811, %v812
      %v814 = vrot.slane %v619, 1
      %v815 = vrot.slane %v620, 1
      %v816 = vsel %vm762, %v814, %v815
      %v817 = vrot.slane %v621, 1
      %v818 = vrot.slane %v622, 1
      %v819 = vsel %vm762, %v817, %v818
      %v820 = vrot.slane %v623, 1
      %v821 = vrot.slane %v624, 1
      %v822 = vsel %vm762, %v820, %v821
      %v823 = vrot.slane %v625, 1
      %v824 = vrot.slane %v626, 1
      %v825 = vsel %vm762, %v823, %v824
      %v826 = vrot.slane %v627, 1
      %v827 = vrot.slane %v628, 1
      %v828 = vsel %vm762, %v826, %v827
      %v829 = vrot.slane %v629, 1
      %v830 = vrot.slane %v630, 1
      %v831 = vsel %vm762, %v829, %v830
      %v832 = vrot.slane %v631, 1
      %v833 = vrot.slane %v632, 1
      %v834 = vsel %vm762, %v832, %v833
      %v835 = vrot.slane %v637, 1
      %v836 = vrot.slane %v638, 1
      %v837 = vsel %vm762, %v835, %v836
      %v838 = vrot.slane %v639, 1
      %v839 = vrot.slane %v640, 1
      %v840 = vsel %vm762, %v838, %v839
      %v841 = vrot.slane %v641, 1
      %v842 = vrot.slane %v642, 1
      %v843 = vsel %vm762, %v841, %v842
      %v844 = vrot.slane %v643, 1
      %v845 = vrot.slane %v644, 1
      %v846 = vsel %vm762, %v844, %v845
      %v847 = vrot.slane %v645, 1
      %v848 = vrot.slane %v646, 1
      %v849 = vsel %vm762, %v847, %v848
      %v850 = vrot.slane %v647, 1
      %v851 = vrot.slane %v648, 1
      %v852 = vsel %vm762, %v850, %v851
      %v853 = vrot.slane %v649, 1
      %v854 = vrot.slane %v650, 1
      %v855 = vsel %vm762, %v853, %v854
      %v856 = vrot.slane %v651, 1
      %v857 = vrot.slane %v652, 1
      %v858 = vsel %vm762, %v856, %v857
      %s859 = scalar_lea.vmem %s6, 4
      %v860 = vld [vmem:[%s859] sm:$0xf]
      %vm861 = vcmask 31744
      %v862 = vsel %vm861, %v765, 0
      %v864 = vsel %vm861, %v768, 0
      %v866 = vsel %vm861, %v771, 0
      %v868 = vsel %vm861, %v774, 0
      %v870 = vsel %vm861, %v777, 0
      %v872 = vsel %vm861, %v780, 0
      %v874 = vsel %vm861, %v783, 0
      %v876 = vsel %vm861, %v786, 0
      %v878 = vsel %vm861, %v789, 0
      %v880 = vsel %vm861, %v792, 0
      %v882 = vsel %vm861, %v795, 0
      %v884 = vsel %vm861, %v798, 0
      %v886 = vsel %vm861, %v801, 0
      %v888 = vsel %vm861, %v804, 0
      %v890 = vsel %vm861, %v807, 0
      %v892 = vsel %vm861, %v810, 0
      %v894 = vsel %vm861, %v813, 0
      %v896 = vsel %vm861, %v816, 0
      %v898 = vsel %vm861, %v819, 0
      %v900 = vsel %vm861, %v822, 0
      %v902 = vsel %vm861, %v825, 0
      %v904 = vsel %vm861, %v828, 0
      %v906 = vsel %vm861, %v831, 0
      %v908 = vsel %vm861, %v834, 0
      %v910 = vsel %vm861, %v837, 0
      %v912 = vsel %vm861, %v840, 0
      %v914 = vsel %vm861, %v843, 0
      %v916 = vsel %vm861, %v846, 0
      %v918 = vsel %vm861, %v849, 0
      %v920 = vsel %vm861, %v852, 0
      %v922 = vsel %vm861, %v855, 0
      %v924 = vsel %vm861, %v858, 0
      %vm926 = vcmask 1043456
      %v928 = vsel %vm926, %v860, 0
      %930 = vmatpush.msra.mxu0 0.0
      %931 = vmatpush.msra.mxu0 0.0
      %932 = vmatpush.msra.mxu0 0.0
      %933 = vmatpush.msra.mxu0 0.0
      %934 = vmatpush.msra.mxu0 0.0
      %935 = vmatpush.msra.mxu0 0.0
      %936 = vmatpush.msra.mxu0 0.0
      %937 = vmatpush.msra.mxu0 0.0
      %938 = vmatpush.msra.mxu0 0.0
      %939 = vmatpush.msra.mxu0 0.0
      %940 = vmatpush.msra.mxu0 0.0
      %941 = vmatpush.msra.mxu0 0.0
      %942 = vmatpush.msra.mxu0 0.0
      %943 = vmatpush.msra.mxu0 0.0
      %944 = vmatpush.msra.mxu0 0.0
      %945 = vmatpush.msra.mxu0 %v928
      %946 = vmatmul.f32.gmra.mxu0 %v862
      %v947 = vpop.f32.mrf.mxu0
      %v948 = vadd.f32 0.0, %v947
      %949 = vmatmul.f32.gmra.mxu0 %v864
      %v950 = vpop.f32.mrf.mxu0
      %v951 = vadd.f32 0.0, %v950
      %952 = vmatmul.f32.gmra.mxu0 %v866
      %v953 = vpop.f32.mrf.mxu0
      %v954 = vadd.f32 0.0, %v953
      %955 = vmatmul.f32.gmra.mxu0 %v868
      %v956 = vpop.f32.mrf.mxu0
      %v957 = vadd.f32 0.0, %v956
      %958 = vmatmul.f32.gmra.mxu0 %v870
      %v959 = vpop.f32.mrf.mxu0
      %v960 = vadd.f32 0.0, %v959
      %961 = vmatmul.f32.gmra.mxu0 %v872
      %v962 = vpop.f32.mrf.mxu0
      %v963 = vadd.f32 0.0, %v962
      %964 = vmatmul.f32.gmra.mxu0 %v874
      %v965 = vpop.f32.mrf.mxu0
      %v966 = vadd.f32 0.0, %v965
      %967 = vmatmul.f32.gmra.mxu0 %v876
      %v968 = vpop.f32.mrf.mxu0
      %v969 = vadd.f32 0.0, %v968
      %970 = vmatmul.f32.gmra.mxu0 %v878
      %v971 = vpop.f32.mrf.mxu0
      %v972 = vadd.f32 0.0, %v971
      %973 = vmatmul.f32.gmra.mxu0 %v880
      %v974 = vpop.f32.mrf.mxu0
      %v975 = vadd.f32 0.0, %v974
      %976 = vmatmul.f32.gmra.mxu0 %v882
      %v977 = vpop.f32.mrf.mxu0
      %v978 = vadd.f32 0.0, %v977
      %979 = vmatmul.f32.gmra.mxu0 %v884
      %v980 = vpop.f32.mrf.mxu0
      %v981 = vadd.f32 0.0, %v980
      %982 = vmatmul.f32.gmra.mxu0 %v886
      %v983 = vpop.f32.mrf.mxu0
      %v984 = vadd.f32 0.0, %v983
      %985 = vmatmul.f32.gmra.mxu0 %v888
      %v986 = vpop.f32.mrf.mxu0
      %v987 = vadd.f32 0.0, %v986
      %988 = vmatmul.f32.gmra.mxu0 %v890
      %v989 = vpop.f32.mrf.mxu0
      %v990 = vadd.f32 0.0, %v989
      %991 = vmatmul.f32.gmra.mxu0 %v892
      %v992 = vpop.f32.mrf.mxu0
      %v993 = vadd.f32 0.0, %v992
      %994 = vmatmul.f32.gmra.mxu0 %v894
      %v995 = vpop.f32.mrf.mxu0
      %v996 = vadd.f32 0.0, %v995
      %997 = vmatmul.f32.gmra.mxu0 %v896
      %v998 = vpop.f32.mrf.mxu0
      %v999 = vadd.f32 0.0, %v998
      %1000 = vmatmul.f32.gmra.mxu0 %v898
      %v1001 = vpop.f32.mrf.mxu0
      %v1002 = vadd.f32 0.0, %v1001
      %1003 = vmatmul.f32.gmra.mxu0 %v900
      %v1004 = vpop.f32.mrf.mxu0
      %v1005 = vadd.f32 0.0, %v1004
      %1006 = vmatmul.f32.gmra.mxu0 %v902
      %v1007 = vpop.f32.mrf.mxu0
      %v1008 = vadd.f32 0.0, %v1007
      %1009 = vmatmul.f32.gmra.mxu0 %v904
      %v1010 = vpop.f32.mrf.mxu0
      %v1011 = vadd.f32 0.0, %v1010
      %1012 = vmatmul.f32.gmra.mxu0 %v906
      %v1013 = vpop.f32.mrf.mxu0
      %v1014 = vadd.f32 0.0, %v1013
      %1015 = vmatmul.f32.gmra.mxu0 %v908
      %v1016 = vpop.f32.mrf.mxu0
      %v1017 = vadd.f32 0.0, %v1016
      %1018 = vmatmul.f32.gmra.mxu0 %v910
      %v1019 = vpop.f32.mrf.mxu0
      %v1020 = vadd.f32 0.0, %v1019
      %1021 = vmatmul.f32.gmra.mxu0 %v912
      %v1022 = vpop.f32.mrf.mxu0
      %v1023 = vadd.f32 0.0, %v1022
      %1024 = vmatmul.f32.gmra.mxu0 %v914
      %v1025 = vpop.f32.mrf.mxu0
      %v1026 = vadd.f32 0.0, %v1025
      %1027 = vmatmul.f32.gmra.mxu0 %v916
      %v1028 = vpop.f32.mrf.mxu0
      %v1029 = vadd.f32 0.0, %v1028
      %1030 = vmatmul.f32.gmra.mxu0 %v918
      %v1031 = vpop.f32.mrf.mxu0
      %v1032 = vadd.f32 0.0, %v1031
      %1033 = vmatmul.f32.gmra.mxu0 %v920
      %v1034 = vpop.f32.mrf.mxu0
      %v1035 = vadd.f32 0.0, %v1034
      %1036 = vmatmul.f32.gmra.mxu0 %v922
      %v1037 = vpop.f32.mrf.mxu0
      %v1038 = vadd.f32 0.0, %v1037
      %1039 = vmatmul.f32.gmra.mxu0 %v924
      %v1040 = vpop.f32.mrf.mxu0
      %v1041 = vadd.f32 0.0, %v1040
      %1042 = vdwg.mxu0
      %v1043 = vsel %vm861, %v577, 0
      %v1045 = vsel %vm861, %v579, 0
      %v1047 = vsel %vm861, %v581, 0
      %v1049 = vsel %vm861, %v583, 0
      %v1051 = vsel %vm861, %v585, 0
      %v1053 = vsel %vm861, %v587, 0
      %v1055 = vsel %vm861, %v589, 0
      %v1057 = vsel %vm861, %v591, 0
      %v1059 = vsel %vm861, %v597, 0
      %v1061 = vsel %vm861, %v599, 0
      %v1063 = vsel %vm861, %v601, 0
      %v1065 = vsel %vm861, %v603, 0
      %v1067 = vsel %vm861, %v605, 0
      %v1069 = vsel %vm861, %v607, 0
      %v1071 = vsel %vm861, %v609, 0
      %v1073 = vsel %vm861, %v611, 0
      %v1075 = vsel %vm861, %v617, 0
      %v1077 = vsel %vm861, %v619, 0
      %v1079 = vsel %vm861, %v621, 0
      %v1081 = vsel %vm861, %v623, 0
      %v1083 = vsel %vm861, %v625, 0
      %v1085 = vsel %vm861, %v627, 0
      %v1087 = vsel %vm861, %v629, 0
      %v1089 = vsel %vm861, %v631, 0
      %v1091 = vsel %vm861, %v637, 0
      %v1093 = vsel %vm861, %v639, 0
      %v1095 = vsel %vm861, %v641, 0
      %v1097 = vsel %vm861, %v643, 0
      %v1099 = vsel %vm861, %v645, 0
      %v1101 = vsel %vm861, %v647, 0
      %v1103 = vsel %vm861, %v649, 0
      %v1105 = vsel %vm861, %v651, 0
      %v1108 = vsel %vm926, %v697, 0
      %1110 = vmatpush.msra.mxu0 0.0
      %1111 = vmatpush.msra.mxu0 0.0
      %1112 = vmatpush.msra.mxu0 0.0
      %1113 = vmatpush.msra.mxu0 0.0
      %1114 = vmatpush.msra.mxu0 0.0
      %1115 = vmatpush.msra.mxu0 0.0
      %1116 = vmatpush.msra.mxu0 0.0
      %1117 = vmatpush.msra.mxu0 0.0
      %1118 = vmatpush.msra.mxu0 0.0
      %1119 = vmatpush.msra.mxu0 0.0
      %1120 = vmatpush.msra.mxu0 0.0
      %1121 = vmatpush.msra.mxu0 0.0
      %1122 = vmatpush.msra.mxu0 0.0
      %1123 = vmatpush.msra.mxu0 0.0
      %1124 = vmatpush.msra.mxu0 0.0
      %1125 = vmatpush.msra.mxu0 %v1108
      %1126 = vmatmul.f32.gmra.mxu0 %v1043
      %v1127 = vpop.f32.mrf.mxu0
      %v1128 = vadd.f32 %v948, %v1127
      %1129 = vmatmul.f32.gmra.mxu0 %v1045
      %v1130 = vpop.f32.mrf.mxu0
      %v1131 = vadd.f32 %v951, %v1130
      %1132 = vmatmul.f32.gmra.mxu0 %v1047
      %v1133 = vpop.f32.mrf.mxu0
      %v1134 = vadd.f32 %v954, %v1133
      %1135 = vmatmul.f32.gmra.mxu0 %v1049
      %v1136 = vpop.f32.mrf.mxu0
      %v1137 = vadd.f32 %v957, %v1136
      %1138 = vmatmul.f32.gmra.mxu0 %v1051
      %v1139 = vpop.f32.mrf.mxu0
      %v1140 = vadd.f32 %v960, %v1139
      %1141 = vmatmul.f32.gmra.mxu0 %v1053
      %v1142 = vpop.f32.mrf.mxu0
      %v1143 = vadd.f32 %v963, %v1142
      %1144 = vmatmul.f32.gmra.mxu0 %v1055
      %v1145 = vpop.f32.mrf.mxu0
      %v1146 = vadd.f32 %v966, %v1145
      %1147 = vmatmul.f32.gmra.mxu0 %v1057
      %v1148 = vpop.f32.mrf.mxu0
      %v1149 = vadd.f32 %v969, %v1148
      %1150 = vmatmul.f32.gmra.mxu0 %v1059
      %v1151 = vpop.f32.mrf.mxu0
      %v1152 = vadd.f32 %v972, %v1151
      %1153 = vmatmul.f32.gmra.mxu0 %v1061
      %v1154 = vpop.f32.mrf.mxu0
      %v1155 = vadd.f32 %v975, %v1154
      %1156 = vmatmul.f32.gmra.mxu0 %v1063
      %v1157 = vpop.f32.mrf.mxu0
      %v1158 = vadd.f32 %v978, %v1157
      %1159 = vmatmul.f32.gmra.mxu0 %v1065
      %v1160 = vpop.f32.mrf.mxu0
      %v1161 = vadd.f32 %v981, %v1160
      %1162 = vmatmul.f32.gmra.mxu0 %v1067
      %v1163 = vpop.f32.mrf.mxu0
      %v1164 = vadd.f32 %v984, %v1163
      %1165 = vmatmul.f32.gmra.mxu0 %v1069
      %v1166 = vpop.f32.mrf.mxu0
      %v1167 = vadd.f32 %v987, %v1166
      %1168 = vmatmul.f32.gmra.mxu0 %v1071
      %v1169 = vpop.f32.mrf.mxu0
      %v1170 = vadd.f32 %v990, %v1169
      %1171 = vmatmul.f32.gmra.mxu0 %v1073
      %v1172 = vpop.f32.mrf.mxu0
      %v1173 = vadd.f32 %v993, %v1172
      %1174 = vmatmul.f32.gmra.mxu0 %v1075
      %v1175 = vpop.f32.mrf.mxu0
      %v1176 = vadd.f32 %v996, %v1175
      %1177 = vmatmul.f32.gmra.mxu0 %v1077
      %v1178 = vpop.f32.mrf.mxu0
      %v1179 = vadd.f32 %v999, %v1178
      %1180 = vmatmul.f32.gmra.mxu0 %v1079
      %v1181 = vpop.f32.mrf.mxu0
      %v1182 = vadd.f32 %v1002, %v1181
      %1183 = vmatmul.f32.gmra.mxu0 %v1081
      %v1184 = vpop.f32.mrf.mxu0
      %v1185 = vadd.f32 %v1005, %v1184
      %1186 = vmatmul.f32.gmra.mxu0 %v1083
      %v1187 = vpop.f32.mrf.mxu0
      %v1188 = vadd.f32 %v1008, %v1187
      %1189 = vmatmul.f32.gmra.mxu0 %v1085
      %v1190 = vpop.f32.mrf.mxu0
      %v1191 = vadd.f32 %v1011, %v1190
      %1192 = vmatmul.f32.gmra.mxu0 %v1087
      %v1193 = vpop.f32.mrf.mxu0
      %v1194 = vadd.f32 %v1014, %v1193
      %1195 = vmatmul.f32.gmra.mxu0 %v1089
      %v1196 = vpop.f32.mrf.mxu0
      %v1197 = vadd.f32 %v1017, %v1196
      %1198 = vmatmul.f32.gmra.mxu0 %v1091
      %v1199 = vpop.f32.mrf.mxu0
      %v1200 = vadd.f32 %v1020, %v1199
      %1201 = vmatmul.f32.gmra.mxu0 %v1093
      %v1202 = vpop.f32.mrf.mxu0
      %v1203 = vadd.f32 %v1023, %v1202
      %1204 = vmatmul.f32.gmra.mxu0 %v1095
      %v1205 = vpop.f32.mrf.mxu0
      %v1206 = vadd.f32 %v1026, %v1205
      %1207 = vmatmul.f32.gmra.mxu0 %v1097
      %v1208 = vpop.f32.mrf.mxu0
      %v1209 = vadd.f32 %v1029, %v1208
      %1210 = vmatmul.f32.gmra.mxu0 %v1099
      %v1211 = vpop.f32.mrf.mxu0
      %v1212 = vadd.f32 %v1032, %v1211
      %1213 = vmatmul.f32.gmra.mxu0 %v1101
      %v1214 = vpop.f32.mrf.mxu0
      %v1215 = vadd.f32 %v1035, %v1214
      %1216 = vmatmul.f32.gmra.mxu0 %v1103
      %v1217 = vpop.f32.mrf.mxu0
      %v1218 = vadd.f32 %v1038, %v1217
      %1219 = vmatmul.f32.gmra.mxu0 %v1105
      %v1220 = vpop.f32.mrf.mxu0
      %v1221 = vadd.f32 %v1041, %v1220
      %1222 = vdwg.mxu0
      %vm1223 = vcmask 1045504
      %v1224 = vrot.slane %v577, 2
      %v1225 = vrot.slane %v578, 2
      %v1226 = vsel %vm1223, %v1224, %v1225
      %v1227 = vrot.slane %v579, 2
      %v1228 = vrot.slane %v580, 2
      %v1229 = vsel %vm1223, %v1227, %v1228
      %v1230 = vrot.slane %v581, 2
      %v1231 = vrot.slane %v582, 2
      %v1232 = vsel %vm1223, %v1230, %v1231
      %v1233 = vrot.slane %v583, 2
      %v1234 = vrot.slane %v584, 2
      %v1235 = vsel %vm1223, %v1233, %v1234
      %v1236 = vrot.slane %v585, 2
      %v1237 = vrot.slane %v586, 2
      %v1238 = vsel %vm1223, %v1236, %v1237
      %v1239 = vrot.slane %v587, 2
      %v1240 = vrot.slane %v588, 2
      %v1241 = vsel %vm1223, %v1239, %v1240
      %v1242 = vrot.slane %v589, 2
      %v1243 = vrot.slane %v590, 2
      %v1244 = vsel %vm1223, %v1242, %v1243
      %v1245 = vrot.slane %v591, 2
      %v1246 = vrot.slane %v592, 2
      %v1247 = vsel %vm1223, %v1245, %v1246
      %v1248 = vrot.slane %v597, 2
      %v1249 = vrot.slane %v598, 2
      %v1250 = vsel %vm1223, %v1248, %v1249
      %v1251 = vrot.slane %v599, 2
      %v1252 = vrot.slane %v600, 2
      %v1253 = vsel %vm1223, %v1251, %v1252
      %v1254 = vrot.slane %v601, 2
      %v1255 = vrot.slane %v602, 2
      %v1256 = vsel %vm1223, %v1254, %v1255
      %v1257 = vrot.slane %v603, 2
      %v1258 = vrot.slane %v604, 2
      %v1259 = vsel %vm1223, %v1257, %v1258
      %v1260 = vrot.slane %v605, 2
      %v1261 = vrot.slane %v606, 2
      %v1262 = vsel %vm1223, %v1260, %v1261
      %v1263 = vrot.slane %v607, 2
      %v1264 = vrot.slane %v608, 2
      %v1265 = vsel %vm1223, %v1263, %v1264
      %v1266 = vrot.slane %v609, 2
      %v1267 = vrot.slane %v610, 2
      %v1268 = vsel %vm1223, %v1266, %v1267
      %v1269 = vrot.slane %v611, 2
      %v1270 = vrot.slane %v612, 2
      %v1271 = vsel %vm1223, %v1269, %v1270
      %v1272 = vrot.slane %v617, 2
      %v1273 = vrot.slane %v618, 2
      %v1274 = vsel %vm1223, %v1272, %v1273
      %v1275 = vrot.slane %v619, 2
      %v1276 = vrot.slane %v620, 2
      %v1277 = vsel %vm1223, %v1275, %v1276
      %v1278 = vrot.slane %v621, 2
      %v1279 = vrot.slane %v622, 2
      %v1280 = vsel %vm1223, %v1278, %v1279
      %v1281 = vrot.slane %v623, 2
      %v1282 = vrot.slane %v624, 2
      %v1283 = vsel %vm1223, %v1281, %v1282
      %v1284 = vrot.slane %v625, 2
      %v1285 = vrot.slane %v626, 2
      %v1286 = vsel %vm1223, %v1284, %v1285
      %v1287 = vrot.slane %v627, 2
      %v1288 = vrot.slane %v628, 2
      %v1289 = vsel %vm1223, %v1287, %v1288
      %v1290 = vrot.slane %v629, 2
      %v1291 = vrot.slane %v630, 2
      %v1292 = vsel %vm1223, %v1290, %v1291
      %v1293 = vrot.slane %v631, 2
      %v1294 = vrot.slane %v632, 2
      %v1295 = vsel %vm1223, %v1293, %v1294
      %v1296 = vrot.slane %v637, 2
      %v1297 = vrot.slane %v638, 2
      %v1298 = vsel %vm1223, %v1296, %v1297
      %v1299 = vrot.slane %v639, 2
      %v1300 = vrot.slane %v640, 2
      %v1301 = vsel %vm1223, %v1299, %v1300
      %v1302 = vrot.slane %v641, 2
      %v1303 = vrot.slane %v642, 2
      %v1304 = vsel %vm1223, %v1302, %v1303
      %v1305 = vrot.slane %v643, 2
      %v1306 = vrot.slane %v644, 2
      %v1307 = vsel %vm1223, %v1305, %v1306
      %v1308 = vrot.slane %v645, 2
      %v1309 = vrot.slane %v646, 2
      %v1310 = vsel %vm1223, %v1308, %v1309
      %v1311 = vrot.slane %v647, 2
      %v1312 = vrot.slane %v648, 2
      %v1313 = vsel %vm1223, %v1311, %v1312
      %v1314 = vrot.slane %v649, 2
      %v1315 = vrot.slane %v650, 2
      %v1316 = vsel %vm1223, %v1314, %v1315
      %v1317 = vrot.slane %v651, 2
      %v1318 = vrot.slane %v652, 2
      %v1319 = vsel %vm1223, %v1317, %v1318
      %s1320 = scalar_lea.vmem %s6, 8
      %v1321 = vld [vmem:[%s1320] sm:$0xf]
      %v1322 = vsel %vm861, %v1226, 0
      %v1324 = vsel %vm861, %v1229, 0
      %v1326 = vsel %vm861, %v1232, 0
      %v1328 = vsel %vm861, %v1235, 0
      %v1330 = vsel %vm861, %v1238, 0
      %v1332 = vsel %vm861, %v1241, 0
      %v1334 = vsel %vm861, %v1244, 0
      %v1336 = vsel %vm861, %v1247, 0
      %v1338 = vsel %vm861, %v1250, 0
      %v1340 = vsel %vm861, %v1253, 0
      %v1342 = vsel %vm861, %v1256, 0
      %v1344 = vsel %vm861, %v1259, 0
      %v1346 = vsel %vm861, %v1262, 0
      %v1348 = vsel %vm861, %v1265, 0
      %v1350 = vsel %vm861, %v1268, 0
      %v1352 = vsel %vm861, %v1271, 0
      %v1354 = vsel %vm861, %v1274, 0
      %v1356 = vsel %vm861, %v1277, 0
      %v1358 = vsel %vm861, %v1280, 0
      %v1360 = vsel %vm861, %v1283, 0
      %v1362 = vsel %vm861, %v1286, 0
      %v1364 = vsel %vm861, %v1289, 0
      %v1366 = vsel %vm861, %v1292, 0
      %v1368 = vsel %vm861, %v1295, 0
      %v1370 = vsel %vm861, %v1298, 0
      %v1372 = vsel %vm861, %v1301, 0
      %v1374 = vsel %vm861, %v1304, 0
      %v1376 = vsel %vm861, %v1307, 0
      %v1378 = vsel %vm861, %v1310, 0
      %v1380 = vsel %vm861, %v1313, 0
      %v1382 = vsel %vm861, %v1316, 0
      %v1384 = vsel %vm861, %v1319, 0
      %v1387 = vsel %vm926, %v1321, 0
      %1389 = vmatpush.msra.mxu0 0.0
      %1390 = vmatpush.msra.mxu0 0.0
      %1391 = vmatpush.msra.mxu0 0.0
      %1392 = vmatpush.msra.mxu0 0.0
      %1393 = vmatpush.msra.mxu0 0.0
      %1394 = vmatpush.msra.mxu0 0.0
      %1395 = vmatpush.msra.mxu0 0.0
      %1396 = vmatpush.msra.mxu0 0.0
      %1397 = vmatpush.msra.mxu0 0.0
      %1398 = vmatpush.msra.mxu0 0.0
      %1399 = vmatpush.msra.mxu0 0.0
      %1400 = vmatpush.msra.mxu0 0.0
      %1401 = vmatpush.msra.mxu0 0.0
      %1402 = vmatpush.msra.mxu0 0.0
      %1403 = vmatpush.msra.mxu0 0.0
      %1404 = vmatpush.msra.mxu0 %v1387
      %1405 = vmatmul.f32.gmra.mxu0 %v1322
      %v1406 = vpop.f32.mrf.mxu0
      %v1407 = vadd.f32 0.0, %v1406
      %1408 = vmatmul.f32.gmra.mxu0 %v1324
      %v1409 = vpop.f32.mrf.mxu0
      %v1410 = vadd.f32 0.0, %v1409
      %1411 = vmatmul.f32.gmra.mxu0 %v1326
      %v1412 = vpop.f32.mrf.mxu0
      %v1413 = vadd.f32 0.0, %v1412
      %1414 = vmatmul.f32.gmra.mxu0 %v1328
      %v1415 = vpop.f32.mrf.mxu0
      %v1416 = vadd.f32 0.0, %v1415
      %1417 = vmatmul.f32.gmra.mxu0 %v1330
      %v1418 = vpop.f32.mrf.mxu0
      %v1419 = vadd.f32 0.0, %v1418
      %1420 = vmatmul.f32.gmra.mxu0 %v1332
      %v1421 = vpop.f32.mrf.mxu0
      %v1422 = vadd.f32 0.0, %v1421
      %1423 = vmatmul.f32.gmra.mxu0 %v1334
      %v1424 = vpop.f32.mrf.mxu0
      %v1425 = vadd.f32 0.0, %v1424
      %1426 = vmatmul.f32.gmra.mxu0 %v1336
      %v1427 = vpop.f32.mrf.mxu0
      %v1428 = vadd.f32 0.0, %v1427
      %1429 = vmatmul.f32.gmra.mxu0 %v1338
      %v1430 = vpop.f32.mrf.mxu0
      %v1431 = vadd.f32 0.0, %v1430
      %1432 = vmatmul.f32.gmra.mxu0 %v1340
      %v1433 = vpop.f32.mrf.mxu0
      %v1434 = vadd.f32 0.0, %v1433
      %1435 = vmatmul.f32.gmra.mxu0 %v1342
      %v1436 = vpop.f32.mrf.mxu0
      %v1437 = vadd.f32 0.0, %v1436
      %1438 = vmatmul.f32.gmra.mxu0 %v1344
      %v1439 = vpop.f32.mrf.mxu0
      %v1440 = vadd.f32 0.0, %v1439
      %1441 = vmatmul.f32.gmra.mxu0 %v1346
      %v1442 = vpop.f32.mrf.mxu0
      %v1443 = vadd.f32 0.0, %v1442
      %1444 = vmatmul.f32.gmra.mxu0 %v1348
      %v1445 = vpop.f32.mrf.mxu0
      %v1446 = vadd.f32 0.0, %v1445
      %1447 = vmatmul.f32.gmra.mxu0 %v1350
      %v1448 = vpop.f32.mrf.mxu0
      %v1449 = vadd.f32 0.0, %v1448
      %1450 = vmatmul.f32.gmra.mxu0 %v1352
      %v1451 = vpop.f32.mrf.mxu0
      %v1452 = vadd.f32 0.0, %v1451
      %1453 = vmatmul.f32.gmra.mxu0 %v1354
      %v1454 = vpop.f32.mrf.mxu0
      %v1455 = vadd.f32 0.0, %v1454
      %1456 = vmatmul.f32.gmra.mxu0 %v1356
      %v1457 = vpop.f32.mrf.mxu0
      %v1458 = vadd.f32 0.0, %v1457
      %1459 = vmatmul.f32.gmra.mxu0 %v1358
      %v1460 = vpop.f32.mrf.mxu0
      %v1461 = vadd.f32 0.0, %v1460
      %1462 = vmatmul.f32.gmra.mxu0 %v1360
      %v1463 = vpop.f32.mrf.mxu0
      %v1464 = vadd.f32 0.0, %v1463
      %1465 = vmatmul.f32.gmra.mxu0 %v1362
      %v1466 = vpop.f32.mrf.mxu0
      %v1467 = vadd.f32 0.0, %v1466
      %1468 = vmatmul.f32.gmra.mxu0 %v1364
      %v1469 = vpop.f32.mrf.mxu0
      %v1470 = vadd.f32 0.0, %v1469
      %1471 = vmatmul.f32.gmra.mxu0 %v1366
      %v1472 = vpop.f32.mrf.mxu0
      %v1473 = vadd.f32 0.0, %v1472
      %1474 = vmatmul.f32.gmra.mxu0 %v1368
      %v1475 = vpop.f32.mrf.mxu0
      %v1476 = vadd.f32 0.0, %v1475
      %1477 = vmatmul.f32.gmra.mxu0 %v1370
      %v1478 = vpop.f32.mrf.mxu0
      %v1479 = vadd.f32 0.0, %v1478
      %1480 = vmatmul.f32.gmra.mxu0 %v1372
      %v1481 = vpop.f32.mrf.mxu0
      %v1482 = vadd.f32 0.0, %v1481
      %1483 = vmatmul.f32.gmra.mxu0 %v1374
      %v1484 = vpop.f32.mrf.mxu0
      %v1485 = vadd.f32 0.0, %v1484
      %1486 = vmatmul.f32.gmra.mxu0 %v1376
      %v1487 = vpop.f32.mrf.mxu0
      %v1488 = vadd.f32 0.0, %v1487
      %1489 = vmatmul.f32.gmra.mxu0 %v1378
      %v1490 = vpop.f32.mrf.mxu0
      %v1491 = vadd.f32 0.0, %v1490
      %1492 = vmatmul.f32.gmra.mxu0 %v1380
      %v1493 = vpop.f32.mrf.mxu0
      %v1494 = vadd.f32 0.0, %v1493
      %1495 = vmatmul.f32.gmra.mxu0 %v1382
      %v1496 = vpop.f32.mrf.mxu0
      %v1497 = vadd.f32 0.0, %v1496
      %1498 = vmatmul.f32.gmra.mxu0 %v1384
      %v1499 = vpop.f32.mrf.mxu0
      %v1500 = vadd.f32 0.0, %v1499
      %1501 = vdwg.mxu0
      %v1502 = vadd.f32 %v1128, %v1407
      %v1503 = vadd.f32 %v1131, %v1410
      %v1504 = vadd.f32 %v1134, %v1413
      %v1505 = vadd.f32 %v1137, %v1416
      %v1506 = vadd.f32 %v1140, %v1419
      %v1507 = vadd.f32 %v1143, %v1422
      %v1508 = vadd.f32 %v1146, %v1425
      %v1509 = vadd.f32 %v1149, %v1428
      %v1510 = vadd.f32 %v1152, %v1431
      %v1511 = vadd.f32 %v1155, %v1434
      %v1512 = vadd.f32 %v1158, %v1437
      %v1513 = vadd.f32 %v1161, %v1440
      %v1514 = vadd.f32 %v1164, %v1443
      %v1515 = vadd.f32 %v1167, %v1446
      %v1516 = vadd.f32 %v1170, %v1449
      %v1517 = vadd.f32 %v1173, %v1452
      %v1518 = vadd.f32 %v1176, %v1455
      %v1519 = vadd.f32 %v1179, %v1458
      %v1520 = vadd.f32 %v1182, %v1461
      %v1521 = vadd.f32 %v1185, %v1464
      %v1522 = vadd.f32 %v1188, %v1467
      %v1523 = vadd.f32 %v1191, %v1470
      %v1524 = vadd.f32 %v1194, %v1473
      %v1525 = vadd.f32 %v1197, %v1476
      %v1526 = vadd.f32 %v1200, %v1479
      %v1527 = vadd.f32 %v1203, %v1482
      %v1528 = vadd.f32 %v1206, %v1485
      %v1529 = vadd.f32 %v1209, %v1488
      %v1530 = vadd.f32 %v1212, %v1491
      %v1531 = vadd.f32 %v1215, %v1494
      %v1532 = vadd.f32 %v1218, %v1497
      %v1533 = vadd.f32 %v1221, %v1500
      %s1534 = scalar_lea.vmem %s6, 12
      %v1535 = vld [vmem:[%s1534] sm:$0xf]
      %v1537 = vsel %vm861, %v593, 0
      %v1540 = vsel %vm861, %v613, 0
      %v1543 = vsel %vm861, %v633, 0
      %v1546 = vsel %vm861, %v653, 0
      %v1549 = vsel %vm926, %v1535, 0
      %1551 = vmatpush.msra.mxu0 0.0
      %1552 = vmatpush.msra.mxu0 0.0
      %1553 = vmatpush.msra.mxu0 0.0
      %1554 = vmatpush.msra.mxu0 0.0
      %1555 = vmatpush.msra.mxu0 0.0
      %1556 = vmatpush.msra.mxu0 0.0
      %1557 = vmatpush.msra.mxu0 0.0
      %1558 = vmatpush.msra.mxu0 0.0
      %1559 = vmatpush.msra.mxu0 0.0
      %1560 = vmatpush.msra.mxu0 0.0
      %1561 = vmatpush.msra.mxu0 0.0
      %1562 = vmatpush.msra.mxu0 0.0
      %1563 = vmatpush.msra.mxu0 0.0
      %1564 = vmatpush.msra.mxu0 0.0
      %1565 = vmatpush.msra.mxu0 0.0
      %1566 = vmatpush.msra.mxu0 %v1549
      %1567 = vmatmul.f32.gmra.mxu0 %v1045
      %v1568 = vpop.f32.mrf.mxu0
      %v1569 = vadd.f32 0.0, %v1568
      %1570 = vmatmul.f32.gmra.mxu0 %v1047
      %v1571 = vpop.f32.mrf.mxu0
      %v1572 = vadd.f32 0.0, %v1571
      %1573 = vmatmul.f32.gmra.mxu0 %v1049
      %v1574 = vpop.f32.mrf.mxu0
      %v1575 = vadd.f32 0.0, %v1574
      %1576 = vmatmul.f32.gmra.mxu0 %v1051
      %v1577 = vpop.f32.mrf.mxu0
      %v1578 = vadd.f32 0.0, %v1577
      %1579 = vmatmul.f32.gmra.mxu0 %v1053
      %v1580 = vpop.f32.mrf.mxu0
      %v1581 = vadd.f32 0.0, %v1580
      %1582 = vmatmul.f32.gmra.mxu0 %v1055
      %v1583 = vpop.f32.mrf.mxu0
      %v1584 = vadd.f32 0.0, %v1583
      %1585 = vmatmul.f32.gmra.mxu0 %v1057
      %v1586 = vpop.f32.mrf.mxu0
      %v1587 = vadd.f32 0.0, %v1586
      %1588 = vmatmul.f32.gmra.mxu0 %v1537
      %v1589 = vpop.f32.mrf.mxu0
      %v1590 = vadd.f32 0.0, %v1589
      %1591 = vmatmul.f32.gmra.mxu0 %v1061
      %v1592 = vpop.f32.mrf.mxu0
      %v1593 = vadd.f32 0.0, %v1592
      %1594 = vmatmul.f32.gmra.mxu0 %v1063
      %v1595 = vpop.f32.mrf.mxu0
      %v1596 = vadd.f32 0.0, %v1595
      %1597 = vmatmul.f32.gmra.mxu0 %v1065
      %v1598 = vpop.f32.mrf.mxu0
      %v1599 = vadd.f32 0.0, %v1598
      %1600 = vmatmul.f32.gmra.mxu0 %v1067
      %v1601 = vpop.f32.mrf.mxu0
      %v1602 = vadd.f32 0.0, %v1601
      %1603 = vmatmul.f32.gmra.mxu0 %v1069
      %v1604 = vpop.f32.mrf.mxu0
      %v1605 = vadd.f32 0.0, %v1604
      %1606 = vmatmul.f32.gmra.mxu0 %v1071
      %v1607 = vpop.f32.mrf.mxu0
      %v1608 = vadd.f32 0.0, %v1607
      %1609 = vmatmul.f32.gmra.mxu0 %v1073
      %v1610 = vpop.f32.mrf.mxu0
      %v1611 = vadd.f32 0.0, %v1610
      %1612 = vmatmul.f32.gmra.mxu0 %v1540
      %v1613 = vpop.f32.mrf.mxu0
      %v1614 = vadd.f32 0.0, %v1613
      %1615 = vmatmul.f32.gmra.mxu0 %v1077
      %v1616 = vpop.f32.mrf.mxu0
      %v1617 = vadd.f32 0.0, %v1616
      %1618 = vmatmul.f32.gmra.mxu0 %v1079
      %v1619 = vpop.f32.mrf.mxu0
      %v1620 = vadd.f32 0.0, %v1619
      %1621 = vmatmul.f32.gmra.mxu0 %v1081
      %v1622 = vpop.f32.mrf.mxu0
      %v1623 = vadd.f32 0.0, %v1622
      %1624 = vmatmul.f32.gmra.mxu0 %v1083
      %v1625 = vpop.f32.mrf.mxu0
      %v1626 = vadd.f32 0.0, %v1625
      %1627 = vmatmul.f32.gmra.mxu0 %v1085
      %v1628 = vpop.f32.mrf.mxu0
      %v1629 = vadd.f32 0.0, %v1628
      %1630 = vmatmul.f32.gmra.mxu0 %v1087
      %v1631 = vpop.f32.mrf.mxu0
      %v1632 = vadd.f32 0.0, %v1631
      %1633 = vmatmul.f32.gmra.mxu0 %v1089
      %v1634 = vpop.f32.mrf.mxu0
      %v1635 = vadd.f32 0.0, %v1634
      %1636 = vmatmul.f32.gmra.mxu0 %v1543
      %v1637 = vpop.f32.mrf.mxu0
      %v1638 = vadd.f32 0.0, %v1637
      %1639 = vmatmul.f32.gmra.mxu0 %v1093
      %v1640 = vpop.f32.mrf.mxu0
      %v1641 = vadd.f32 0.0, %v1640
      %1642 = vmatmul.f32.gmra.mxu0 %v1095
      %v1643 = vpop.f32.mrf.mxu0
      %v1644 = vadd.f32 0.0, %v1643
      %1645 = vmatmul.f32.gmra.mxu0 %v1097
      %v1646 = vpop.f32.mrf.mxu0
      %v1647 = vadd.f32 0.0, %v1646
      %1648 = vmatmul.f32.gmra.mxu0 %v1099
      %v1649 = vpop.f32.mrf.mxu0
      %v1650 = vadd.f32 0.0, %v1649
      %1651 = vmatmul.f32.gmra.mxu0 %v1101
      %v1652 = vpop.f32.mrf.mxu0
      %v1653 = vadd.f32 0.0, %v1652
      %1654 = vmatmul.f32.gmra.mxu0 %v1103
      %v1655 = vpop.f32.mrf.mxu0
      %v1656 = vadd.f32 0.0, %v1655
      %1657 = vmatmul.f32.gmra.mxu0 %v1105
      %v1658 = vpop.f32.mrf.mxu0
      %v1659 = vadd.f32 0.0, %v1658
      %1660 = vmatmul.f32.gmra.mxu0 %v1546
      %v1661 = vpop.f32.mrf.mxu0
      %v1662 = vadd.f32 0.0, %v1661
      %1663 = vdwg.mxu0
      %v1664 = vadd.f32 %v1502, %v1569
      %v1665 = vadd.f32 %v1503, %v1572
      %v1666 = vadd.f32 %v1504, %v1575
      %v1667 = vadd.f32 %v1505, %v1578
      %v1668 = vadd.f32 %v1506, %v1581
      %v1669 = vadd.f32 %v1507, %v1584
      %v1670 = vadd.f32 %v1508, %v1587
      %v1671 = vadd.f32 %v1509, %v1590
      %v1672 = vadd.f32 %v1510, %v1593
      %v1673 = vadd.f32 %v1511, %v1596
      %v1674 = vadd.f32 %v1512, %v1599
      %v1675 = vadd.f32 %v1513, %v1602
      %v1676 = vadd.f32 %v1514, %v1605
      %v1677 = vadd.f32 %v1515, %v1608
      %v1678 = vadd.f32 %v1516, %v1611
      %v1679 = vadd.f32 %v1517, %v1614
      %v1680 = vadd.f32 %v1518, %v1617
      %v1681 = vadd.f32 %v1519, %v1620
      %v1682 = vadd.f32 %v1520, %v1623
      %v1683 = vadd.f32 %v1521, %v1626
      %v1684 = vadd.f32 %v1522, %v1629
      %v1685 = vadd.f32 %v1523, %v1632
      %v1686 = vadd.f32 %v1524, %v1635
      %v1687 = vadd.f32 %v1525, %v1638
      %v1688 = vadd.f32 %v1526, %v1641
      %v1689 = vadd.f32 %v1527, %v1644
      %v1690 = vadd.f32 %v1528, %v1647
      %v1691 = vadd.f32 %v1529, %v1650
      %v1692 = vadd.f32 %v1530, %v1653
      %v1693 = vadd.f32 %v1531, %v1656
      %v1694 = vadd.f32 %v1532, %v1659
      %v1695 = vadd.f32 %v1533, %v1662
      %v1700 = vrot.slane %v593, 1
      %v1701 = vrot.slane %v594, 1
      %v1702 = vsel %vm762, %v1700, %v1701
      %v1703 = vrot.slane %v613, 1
      %v1704 = vrot.slane %v614, 1
      %v1705 = vsel %vm762, %v1703, %v1704
      %v1706 = vrot.slane %v633, 1
      %v1707 = vrot.slane %v634, 1
      %v1708 = vsel %vm762, %v1706, %v1707
      %v1709 = vrot.slane %v653, 1
      %v1710 = vrot.slane %v654, 1
      %v1711 = vsel %vm762, %v1709, %v1710
      %s1712 = scalar_lea.vmem %s6, 16
      %v1713 = vld [vmem:[%s1712] sm:$0xf]
      %v1714 = vsel %vm861, %v1702, 0
      %v1716 = vsel %vm861, %v1705, 0
      %v1718 = vsel %vm861, %v1708, 0
      %v1720 = vsel %vm861, %v1711, 0
      %v1723 = vsel %vm926, %v1713, 0
      %1725 = vmatpush.msra.mxu0 0.0
      %1726 = vmatpush.msra.mxu0 0.0
      %1727 = vmatpush.msra.mxu0 0.0
      %1728 = vmatpush.msra.mxu0 0.0
      %1729 = vmatpush.msra.mxu0 0.0
      %1730 = vmatpush.msra.mxu0 0.0
      %1731 = vmatpush.msra.mxu0 0.0
      %1732 = vmatpush.msra.mxu0 0.0
      %1733 = vmatpush.msra.mxu0 0.0
      %1734 = vmatpush.msra.mxu0 0.0
      %1735 = vmatpush.msra.mxu0 0.0
      %1736 = vmatpush.msra.mxu0 0.0
      %1737 = vmatpush.msra.mxu0 0.0
      %1738 = vmatpush.msra.mxu0 0.0
      %1739 = vmatpush.msra.mxu0 0.0
      %1740 = vmatpush.msra.mxu0 %v1723
      %1741 = vmatmul.f32.gmra.mxu0 %v864
      %v1742 = vpop.f32.mrf.mxu0
      %v1743 = vadd.f32 0.0, %v1742
      %1744 = vmatmul.f32.gmra.mxu0 %v866
      %v1745 = vpop.f32.mrf.mxu0
      %v1746 = vadd.f32 0.0, %v1745
      %1747 = vmatmul.f32.gmra.mxu0 %v868
      %v1748 = vpop.f32.mrf.mxu0
      %v1749 = vadd.f32 0.0, %v1748
      %1750 = vmatmul.f32.gmra.mxu0 %v870
      %v1751 = vpop.f32.mrf.mxu0
      %v1752 = vadd.f32 0.0, %v1751
      %1753 = vmatmul.f32.gmra.mxu0 %v872
      %v1754 = vpop.f32.mrf.mxu0
      %v1755 = vadd.f32 0.0, %v1754
      %1756 = vmatmul.f32.gmra.mxu0 %v874
      %v1757 = vpop.f32.mrf.mxu0
      %v1758 = vadd.f32 0.0, %v1757
      %1759 = vmatmul.f32.gmra.mxu0 %v876
      %v1760 = vpop.f32.mrf.mxu0
      %v1761 = vadd.f32 0.0, %v1760
      %1762 = vmatmul.f32.gmra.mxu0 %v1714
      %v1763 = vpop.f32.mrf.mxu0
      %v1764 = vadd.f32 0.0, %v1763
      %1765 = vmatmul.f32.gmra.mxu0 %v880
      %v1766 = vpop.f32.mrf.mxu0
      %v1767 = vadd.f32 0.0, %v1766
      %1768 = vmatmul.f32.gmra.mxu0 %v882
      %v1769 = vpop.f32.mrf.mxu0
      %v1770 = vadd.f32 0.0, %v1769
      %1771 = vmatmul.f32.gmra.mxu0 %v884
      %v1772 = vpop.f32.mrf.mxu0
      %v1773 = vadd.f32 0.0, %v1772
      %1774 = vmatmul.f32.gmra.mxu0 %v886
      %v1775 = vpop.f32.mrf.mxu0
      %v1776 = vadd.f32 0.0, %v1775
      %1777 = vmatmul.f32.gmra.mxu0 %v888
      %v1778 = vpop.f32.mrf.mxu0
      %v1779 = vadd.f32 0.0, %v1778
      %1780 = vmatmul.f32.gmra.mxu0 %v890
      %v1781 = vpop.f32.mrf.mxu0
      %v1782 = vadd.f32 0.0, %v1781
      %1783 = vmatmul.f32.gmra.mxu0 %v892
      %v1784 = vpop.f32.mrf.mxu0
      %v1785 = vadd.f32 0.0, %v1784
      %1786 = vmatmul.f32.gmra.mxu0 %v1716
      %v1787 = vpop.f32.mrf.mxu0
      %v1788 = vadd.f32 0.0, %v1787
      %1789 = vmatmul.f32.gmra.mxu0 %v896
      %v1790 = vpop.f32.mrf.mxu0
      %v1791 = vadd.f32 0.0, %v1790
      %1792 = vmatmul.f32.gmra.mxu0 %v898
      %v1793 = vpop.f32.mrf.mxu0
      %v1794 = vadd.f32 0.0, %v1793
      %1795 = vmatmul.f32.gmra.mxu0 %v900
      %v1796 = vpop.f32.mrf.mxu0
      %v1797 = vadd.f32 0.0, %v1796
      %1798 = vmatmul.f32.gmra.mxu0 %v902
      %v1799 = vpop.f32.mrf.mxu0
      %v1800 = vadd.f32 0.0, %v1799
      %1801 = vmatmul.f32.gmra.mxu0 %v904
      %v1802 = vpop.f32.mrf.mxu0
      %v1803 = vadd.f32 0.0, %v1802
      %1804 = vmatmul.f32.gmra.mxu0 %v906
      %v1805 = vpop.f32.mrf.mxu0
      %v1806 = vadd.f32 0.0, %v1805
      %1807 = vmatmul.f32.gmra.mxu0 %v908
      %v1808 = vpop.f32.mrf.mxu0
      %v1809 = vadd.f32 0.0, %v1808
      %1810 = vmatmul.f32.gmra.mxu0 %v1718
      %v1811 = vpop.f32.mrf.mxu0
      %v1812 = vadd.f32 0.0, %v1811
      %1813 = vmatmul.f32.gmra.mxu0 %v912
      %v1814 = vpop.f32.mrf.mxu0
      %v1815 = vadd.f32 0.0, %v1814
      %1816 = vmatmul.f32.gmra.mxu0 %v914
      %v1817 = vpop.f32.mrf.mxu0
      %v1818 = vadd.f32 0.0, %v1817
      %1819 = vmatmul.f32.gmra.mxu0 %v916
      %v1820 = vpop.f32.mrf.mxu0
      %v1821 = vadd.f32 0.0, %v1820
      %1822 = vmatmul.f32.gmra.mxu0 %v918
      %v1823 = vpop.f32.mrf.mxu0
      %v1824 = vadd.f32 0.0, %v1823
      %1825 = vmatmul.f32.gmra.mxu0 %v920
      %v1826 = vpop.f32.mrf.mxu0
      %v1827 = vadd.f32 0.0, %v1826
      %1828 = vmatmul.f32.gmra.mxu0 %v922
      %v1829 = vpop.f32.mrf.mxu0
      %v1830 = vadd.f32 0.0, %v1829
      %1831 = vmatmul.f32.gmra.mxu0 %v924
      %v1832 = vpop.f32.mrf.mxu0
      %v1833 = vadd.f32 0.0, %v1832
      %1834 = vmatmul.f32.gmra.mxu0 %v1720
      %v1835 = vpop.f32.mrf.mxu0
      %v1836 = vadd.f32 0.0, %v1835
      %1837 = vdwg.mxu0
      %v1838 = vadd.f32 %v1664, %v1743
      %v1839 = vadd.f32 %v1665, %v1746
      %v1840 = vadd.f32 %v1666, %v1749
      %v1841 = vadd.f32 %v1667, %v1752
      %v1842 = vadd.f32 %v1668, %v1755
      %v1843 = vadd.f32 %v1669, %v1758
      %v1844 = vadd.f32 %v1670, %v1761
      %v1845 = vadd.f32 %v1671, %v1764
      %v1846 = vadd.f32 %v1672, %v1767
      %v1847 = vadd.f32 %v1673, %v1770
      %v1848 = vadd.f32 %v1674, %v1773
      %v1849 = vadd.f32 %v1675, %v1776
      %v1850 = vadd.f32 %v1676, %v1779
      %v1851 = vadd.f32 %v1677, %v1782
      %v1852 = vadd.f32 %v1678, %v1785
      %v1853 = vadd.f32 %v1679, %v1788
      %v1854 = vadd.f32 %v1680, %v1791
      %v1855 = vadd.f32 %v1681, %v1794
      %v1856 = vadd.f32 %v1682, %v1797
      %v1857 = vadd.f32 %v1683, %v1800
      %v1858 = vadd.f32 %v1684, %v1803
      %v1859 = vadd.f32 %v1685, %v1806
      %v1860 = vadd.f32 %v1686, %v1809
      %v1861 = vadd.f32 %v1687, %v1812
      %v1862 = vadd.f32 %v1688, %v1815
      %v1863 = vadd.f32 %v1689, %v1818
      %v1864 = vadd.f32 %v1690, %v1821
      %v1865 = vadd.f32 %v1691, %v1824
      %v1866 = vadd.f32 %v1692, %v1827
      %v1867 = vadd.f32 %v1693, %v1830
      %v1868 = vadd.f32 %v1694, %v1833
      %v1869 = vadd.f32 %v1695, %v1836
      %v1870 = vrot.slane %v593, 2
      %v1871 = vrot.slane %v594, 2
      %v1872 = vsel %vm1223, %v1870, %v1871
      %v1873 = vrot.slane %v613, 2
      %v1874 = vrot.slane %v614, 2
      %v1875 = vsel %vm1223, %v1873, %v1874
      %v1876 = vrot.slane %v633, 2
      %v1877 = vrot.slane %v634, 2
      %v1878 = vsel %vm1223, %v1876, %v1877
      %v1879 = vrot.slane %v653, 2
      %v1880 = vrot.slane %v654, 2
      %v1881 = vsel %vm1223, %v1879, %v1880
      %s1882 = scalar_lea.vmem %s6, 20
      %v1883 = vld [vmem:[%s1882] sm:$0xf]
      %v1884 = vsel %vm861, %v1872, 0
      %v1886 = vsel %vm861, %v1875, 0
      %v1888 = vsel %vm861, %v1878, 0
      %v1890 = vsel %vm861, %v1881, 0
      %v1893 = vsel %vm926, %v1883, 0
      %1895 = vmatpush.msra.mxu0 0.0
      %1896 = vmatpush.msra.mxu0 0.0
      %1897 = vmatpush.msra.mxu0 0.0
      %1898 = vmatpush.msra.mxu0 0.0
      %1899 = vmatpush.msra.mxu0 0.0
      %1900 = vmatpush.msra.mxu0 0.0
      %1901 = vmatpush.msra.mxu0 0.0
      %1902 = vmatpush.msra.mxu0 0.0
      %1903 = vmatpush.msra.mxu0 0.0
      %1904 = vmatpush.msra.mxu0 0.0
      %1905 = vmatpush.msra.mxu0 0.0
      %1906 = vmatpush.msra.mxu0 0.0
      %1907 = vmatpush.msra.mxu0 0.0
      %1908 = vmatpush.msra.mxu0 0.0
      %1909 = vmatpush.msra.mxu0 0.0
      %1910 = vmatpush.msra.mxu0 %v1893
      %1911 = vmatmul.f32.gmra.mxu0 %v1324
      %v1912 = vpop.f32.mrf.mxu0
      %v1913 = vadd.f32 0.0, %v1912
      %1914 = vmatmul.f32.gmra.mxu0 %v1326
      %v1915 = vpop.f32.mrf.mxu0
      %v1916 = vadd.f32 0.0, %v1915
      %1917 = vmatmul.f32.gmra.mxu0 %v1328
      %v1918 = vpop.f32.mrf.mxu0
      %v1919 = vadd.f32 0.0, %v1918
      %1920 = vmatmul.f32.gmra.mxu0 %v1330
      %v1921 = vpop.f32.mrf.mxu0
      %v1922 = vadd.f32 0.0, %v1921
      %1923 = vmatmul.f32.gmra.mxu0 %v1332
      %v1924 = vpop.f32.mrf.mxu0
      %v1925 = vadd.f32 0.0, %v1924
      %1926 = vmatmul.f32.gmra.mxu0 %v1334
      %v1927 = vpop.f32.mrf.mxu0
      %v1928 = vadd.f32 0.0, %v1927
      %1929 = vmatmul.f32.gmra.mxu0 %v1336
      %v1930 = vpop.f32.mrf.mxu0
      %v1931 = vadd.f32 0.0, %v1930
      %1932 = vmatmul.f32.gmra.mxu0 %v1884
      %v1933 = vpop.f32.mrf.mxu0
      %v1934 = vadd.f32 0.0, %v1933
      %1935 = vmatmul.f32.gmra.mxu0 %v1340
      %v1936 = vpop.f32.mrf.mxu0
      %v1937 = vadd.f32 0.0, %v1936
      %1938 = vmatmul.f32.gmra.mxu0 %v1342
      %v1939 = vpop.f32.mrf.mxu0
      %v1940 = vadd.f32 0.0, %v1939
      %1941 = vmatmul.f32.gmra.mxu0 %v1344
      %v1942 = vpop.f32.mrf.mxu0
      %v1943 = vadd.f32 0.0, %v1942
      %1944 = vmatmul.f32.gmra.mxu0 %v1346
      %v1945 = vpop.f32.mrf.mxu0
      %v1946 = vadd.f32 0.0, %v1945
      %1947 = vmatmul.f32.gmra.mxu0 %v1348
      %v1948 = vpop.f32.mrf.mxu0
      %v1949 = vadd.f32 0.0, %v1948
      %1950 = vmatmul.f32.gmra.mxu0 %v1350
      %v1951 = vpop.f32.mrf.mxu0
      %v1952 = vadd.f32 0.0, %v1951
      %1953 = vmatmul.f32.gmra.mxu0 %v1352
      %v1954 = vpop.f32.mrf.mxu0
      %v1955 = vadd.f32 0.0, %v1954
      %1956 = vmatmul.f32.gmra.mxu0 %v1886
      %v1957 = vpop.f32.mrf.mxu0
      %v1958 = vadd.f32 0.0, %v1957
      %1959 = vmatmul.f32.gmra.mxu0 %v1356
      %v1960 = vpop.f32.mrf.mxu0
      %v1961 = vadd.f32 0.0, %v1960
      %1962 = vmatmul.f32.gmra.mxu0 %v1358
      %v1963 = vpop.f32.mrf.mxu0
      %v1964 = vadd.f32 0.0, %v1963
      %1965 = vmatmul.f32.gmra.mxu0 %v1360
      %v1966 = vpop.f32.mrf.mxu0
      %v1967 = vadd.f32 0.0, %v1966
      %1968 = vmatmul.f32.gmra.mxu0 %v1362
      %v1969 = vpop.f32.mrf.mxu0
      %v1970 = vadd.f32 0.0, %v1969
      %1971 = vmatmul.f32.gmra.mxu0 %v1364
      %v1972 = vpop.f32.mrf.mxu0
      %v1973 = vadd.f32 0.0, %v1972
      %1974 = vmatmul.f32.gmra.mxu0 %v1366
      %v1975 = vpop.f32.mrf.mxu0
      %v1976 = vadd.f32 0.0, %v1975
      %1977 = vmatmul.f32.gmra.mxu0 %v1368
      %v1978 = vpop.f32.mrf.mxu0
      %v1979 = vadd.f32 0.0, %v1978
      %1980 = vmatmul.f32.gmra.mxu0 %v1888
      %v1981 = vpop.f32.mrf.mxu0
      %v1982 = vadd.f32 0.0, %v1981
      %1983 = vmatmul.f32.gmra.mxu0 %v1372
      %v1984 = vpop.f32.mrf.mxu0
      %v1985 = vadd.f32 0.0, %v1984
      %1986 = vmatmul.f32.gmra.mxu0 %v1374
      %v1987 = vpop.f32.mrf.mxu0
      %v1988 = vadd.f32 0.0, %v1987
      %1989 = vmatmul.f32.gmra.mxu0 %v1376
      %v1990 = vpop.f32.mrf.mxu0
      %v1991 = vadd.f32 0.0, %v1990
      %1992 = vmatmul.f32.gmra.mxu0 %v1378
      %v1993 = vpop.f32.mrf.mxu0
      %v1994 = vadd.f32 0.0, %v1993
      %1995 = vmatmul.f32.gmra.mxu0 %v1380
      %v1996 = vpop.f32.mrf.mxu0
      %v1997 = vadd.f32 0.0, %v1996
      %1998 = vmatmul.f32.gmra.mxu0 %v1382
      %v1999 = vpop.f32.mrf.mxu0
      %v2000 = vadd.f32 0.0, %v1999
      %2001 = vmatmul.f32.gmra.mxu0 %v1384
      %v2002 = vpop.f32.mrf.mxu0
      %v2003 = vadd.f32 0.0, %v2002
      %2004 = vmatmul.f32.gmra.mxu0 %v1890
      %v2005 = vpop.f32.mrf.mxu0
      %v2006 = vadd.f32 0.0, %v2005
      %2007 = vdwg.mxu0
      %v2008 = vadd.f32 %v1838, %v1913
      %v2009 = vadd.f32 %v1839, %v1916
      %v2010 = vadd.f32 %v1840, %v1919
      %v2011 = vadd.f32 %v1841, %v1922
      %v2012 = vadd.f32 %v1842, %v1925
      %v2013 = vadd.f32 %v1843, %v1928
      %v2014 = vadd.f32 %v1844, %v1931
      %v2015 = vadd.f32 %v1845, %v1934
      %v2016 = vadd.f32 %v1846, %v1937
      %v2017 = vadd.f32 %v1847, %v1940
      %v2018 = vadd.f32 %v1848, %v1943
      %v2019 = vadd.f32 %v1849, %v1946
      %v2020 = vadd.f32 %v1850, %v1949
      %v2021 = vadd.f32 %v1851, %v1952
      %v2022 = vadd.f32 %v1852, %v1955
      %v2023 = vadd.f32 %v1853, %v1958
      %v2024 = vadd.f32 %v1854, %v1961
      %v2025 = vadd.f32 %v1855, %v1964
      %v2026 = vadd.f32 %v1856, %v1967
      %v2027 = vadd.f32 %v1857, %v1970
      %v2028 = vadd.f32 %v1858, %v1973
      %v2029 = vadd.f32 %v1859, %v1976
      %v2030 = vadd.f32 %v1860, %v1979
      %v2031 = vadd.f32 %v1861, %v1982
      %v2032 = vadd.f32 %v1862, %v1985
      %v2033 = vadd.f32 %v1863, %v1988
      %v2034 = vadd.f32 %v1864, %v1991
      %v2035 = vadd.f32 %v1865, %v1994
      %v2036 = vadd.f32 %v1866, %v1997
      %v2037 = vadd.f32 %v1867, %v2000
      %v2038 = vadd.f32 %v1868, %v2003
      %v2039 = vadd.f32 %v1869, %v2006
      %s2040 = scalar_lea.vmem %s6, 24
      %v2041 = vld [vmem:[%s2040] sm:$0xf]
      %v2043 = vsel %vm861, %v595, 0
      %v2046 = vsel %vm861, %v615, 0
      %v2049 = vsel %vm861, %v635, 0
      %v2052 = vsel %vm861, %v655, 0
      %v2055 = vsel %vm926, %v2041, 0
      %2057 = vmatpush.msra.mxu0 0.0
      %2058 = vmatpush.msra.mxu0 0.0
      %2059 = vmatpush.msra.mxu0 0.0
      %2060 = vmatpush.msra.mxu0 0.0
      %2061 = vmatpush.msra.mxu0 0.0
      %2062 = vmatpush.msra.mxu0 0.0
      %2063 = vmatpush.msra.mxu0 0.0
      %2064 = vmatpush.msra.mxu0 0.0
      %2065 = vmatpush.msra.mxu0 0.0
      %2066 = vmatpush.msra.mxu0 0.0
      %2067 = vmatpush.msra.mxu0 0.0
      %2068 = vmatpush.msra.mxu0 0.0
      %2069 = vmatpush.msra.mxu0 0.0
      %2070 = vmatpush.msra.mxu0 0.0
      %2071 = vmatpush.msra.mxu0 0.0
      %2072 = vmatpush.msra.mxu0 %v2055
      %2073 = vmatmul.f32.gmra.mxu0 %v1047
      %v2074 = vpop.f32.mrf.mxu0
      %v2075 = vadd.f32 0.0, %v2074
      %2076 = vmatmul.f32.gmra.mxu0 %v1049
      %v2077 = vpop.f32.mrf.mxu0
      %v2078 = vadd.f32 0.0, %v2077
      %2079 = vmatmul.f32.gmra.mxu0 %v1051
      %v2080 = vpop.f32.mrf.mxu0
      %v2081 = vadd.f32 0.0, %v2080
      %2082 = vmatmul.f32.gmra.mxu0 %v1053
      %v2083 = vpop.f32.mrf.mxu0
      %v2084 = vadd.f32 0.0, %v2083
      %2085 = vmatmul.f32.gmra.mxu0 %v1055
      %v2086 = vpop.f32.mrf.mxu0
      %v2087 = vadd.f32 0.0, %v2086
      %2088 = vmatmul.f32.gmra.mxu0 %v1057
      %v2089 = vpop.f32.mrf.mxu0
      %v2090 = vadd.f32 0.0, %v2089
      %2091 = vmatmul.f32.gmra.mxu0 %v1537
      %v2092 = vpop.f32.mrf.mxu0
      %v2093 = vadd.f32 0.0, %v2092
      %2094 = vmatmul.f32.gmra.mxu0 %v2043
      %v2095 = vpop.f32.mrf.mxu0
      %v2096 = vadd.f32 0.0, %v2095
      %2097 = vmatmul.f32.gmra.mxu0 %v1063
      %v2098 = vpop.f32.mrf.mxu0
      %v2099 = vadd.f32 0.0, %v2098
      %2100 = vmatmul.f32.gmra.mxu0 %v1065
      %v2101 = vpop.f32.mrf.mxu0
      %v2102 = vadd.f32 0.0, %v2101
      %2103 = vmatmul.f32.gmra.mxu0 %v1067
      %v2104 = vpop.f32.mrf.mxu0
      %v2105 = vadd.f32 0.0, %v2104
      %2106 = vmatmul.f32.gmra.mxu0 %v1069
      %v2107 = vpop.f32.mrf.mxu0
      %v2108 = vadd.f32 0.0, %v2107
      %2109 = vmatmul.f32.gmra.mxu0 %v1071
      %v2110 = vpop.f32.mrf.mxu0
      %v2111 = vadd.f32 0.0, %v2110
      %2112 = vmatmul.f32.gmra.mxu0 %v1073
      %v2113 = vpop.f32.mrf.mxu0
      %v2114 = vadd.f32 0.0, %v2113
      %2115 = vmatmul.f32.gmra.mxu0 %v1540
      %v2116 = vpop.f32.mrf.mxu0
      %v2117 = vadd.f32 0.0, %v2116
      %2118 = vmatmul.f32.gmra.mxu0 %v2046
      %v2119 = vpop.f32.mrf.mxu0
      %v2120 = vadd.f32 0.0, %v2119
      %2121 = vmatmul.f32.gmra.mxu0 %v1079
      %v2122 = vpop.f32.mrf.mxu0
      %v2123 = vadd.f32 0.0, %v2122
      %2124 = vmatmul.f32.gmra.mxu0 %v1081
      %v2125 = vpop.f32.mrf.mxu0
      %v2126 = vadd.f32 0.0, %v2125
      %2127 = vmatmul.f32.gmra.mxu0 %v1083
      %v2128 = vpop.f32.mrf.mxu0
      %v2129 = vadd.f32 0.0, %v2128
      %2130 = vmatmul.f32.gmra.mxu0 %v1085
      %v2131 = vpop.f32.mrf.mxu0
      %v2132 = vadd.f32 0.0, %v2131
      %2133 = vmatmul.f32.gmra.mxu0 %v1087
      %v2134 = vpop.f32.mrf.mxu0
      %v2135 = vadd.f32 0.0, %v2134
      %2136 = vmatmul.f32.gmra.mxu0 %v1089
      %v2137 = vpop.f32.mrf.mxu0
      %v2138 = vadd.f32 0.0, %v2137
      %2139 = vmatmul.f32.gmra.mxu0 %v1543
      %v2140 = vpop.f32.mrf.mxu0
      %v2141 = vadd.f32 0.0, %v2140
      %2142 = vmatmul.f32.gmra.mxu0 %v2049
      %v2143 = vpop.f32.mrf.mxu0
      %v2144 = vadd.f32 0.0, %v2143
      %2145 = vmatmul.f32.gmra.mxu0 %v1095
      %v2146 = vpop.f32.mrf.mxu0
      %v2147 = vadd.f32 0.0, %v2146
      %2148 = vmatmul.f32.gmra.mxu0 %v1097
      %v2149 = vpop.f32.mrf.mxu0
      %v2150 = vadd.f32 0.0, %v2149
      %2151 = vmatmul.f32.gmra.mxu0 %v1099
      %v2152 = vpop.f32.mrf.mxu0
      %v2153 = vadd.f32 0.0, %v2152
      %2154 = vmatmul.f32.gmra.mxu0 %v1101
      %v2155 = vpop.f32.mrf.mxu0
      %v2156 = vadd.f32 0.0, %v2155
      %2157 = vmatmul.f32.gmra.mxu0 %v1103
      %v2158 = vpop.f32.mrf.mxu0
      %v2159 = vadd.f32 0.0, %v2158
      %2160 = vmatmul.f32.gmra.mxu0 %v1105
      %v2161 = vpop.f32.mrf.mxu0
      %v2162 = vadd.f32 0.0, %v2161
      %2163 = vmatmul.f32.gmra.mxu0 %v1546
      %v2164 = vpop.f32.mrf.mxu0
      %v2165 = vadd.f32 0.0, %v2164
      %2166 = vmatmul.f32.gmra.mxu0 %v2052
      %v2167 = vpop.f32.mrf.mxu0
      %v2168 = vadd.f32 0.0, %v2167
      %2169 = vdwg.mxu0
      %v2170 = vadd.f32 %v2008, %v2075
      %v2171 = vadd.f32 %v2009, %v2078
      %v2172 = vadd.f32 %v2010, %v2081
      %v2173 = vadd.f32 %v2011, %v2084
      %v2174 = vadd.f32 %v2012, %v2087
      %v2175 = vadd.f32 %v2013, %v2090
      %v2176 = vadd.f32 %v2014, %v2093
      %v2177 = vadd.f32 %v2015, %v2096
      %v2178 = vadd.f32 %v2016, %v2099
      %v2179 = vadd.f32 %v2017, %v2102
      %v2180 = vadd.f32 %v2018, %v2105
      %v2181 = vadd.f32 %v2019, %v2108
      %v2182 = vadd.f32 %v2020, %v2111
      %v2183 = vadd.f32 %v2021, %v2114
      %v2184 = vadd.f32 %v2022, %v2117
      %v2185 = vadd.f32 %v2023, %v2120
      %v2186 = vadd.f32 %v2024, %v2123
      %v2187 = vadd.f32 %v2025, %v2126
      %v2188 = vadd.f32 %v2026, %v2129
      %v2189 = vadd.f32 %v2027, %v2132
      %v2190 = vadd.f32 %v2028, %v2135
      %v2191 = vadd.f32 %v2029, %v2138
      %v2192 = vadd.f32 %v2030, %v2141
      %v2193 = vadd.f32 %v2031, %v2144
      %v2194 = vadd.f32 %v2032, %v2147
      %v2195 = vadd.f32 %v2033, %v2150
      %v2196 = vadd.f32 %v2034, %v2153
      %v2197 = vadd.f32 %v2035, %v2156
      %v2198 = vadd.f32 %v2036, %v2159
      %v2199 = vadd.f32 %v2037, %v2162
      %v2200 = vadd.f32 %v2038, %v2165
      %v2201 = vadd.f32 %v2039, %v2168
      %v2206 = vrot.slane %v595, 1
      %v2207 = vrot.slane %v596, 1
      %v2208 = vsel %vm762, %v2206, %v2207
      %v2209 = vrot.slane %v615, 1
      %v2210 = vrot.slane %v616, 1
      %v2211 = vsel %vm762, %v2209, %v2210
      %v2212 = vrot.slane %v635, 1
      %v2213 = vrot.slane %v636, 1
      %v2214 = vsel %vm762, %v2212, %v2213
      %v2215 = vrot.slane %v655, 1
      %v2216 = vrot.slane %v656, 1
      %v2217 = vsel %vm762, %v2215, %v2216
      %s2218 = scalar_lea.vmem %s6, 28
      %v2219 = vld [vmem:[%s2218] sm:$0xf]
      %v2220 = vsel %vm861, %v2208, 0
      %v2222 = vsel %vm861, %v2211, 0
      %v2224 = vsel %vm861, %v2214, 0
      %v2226 = vsel %vm861, %v2217, 0
      %v2229 = vsel %vm926, %v2219, 0
      %2231 = vmatpush.msra.mxu0 0.0
      %2232 = vmatpush.msra.mxu0 0.0
      %2233 = vmatpush.msra.mxu0 0.0
      %2234 = vmatpush.msra.mxu0 0.0
      %2235 = vmatpush.msra.mxu0 0.0
      %2236 = vmatpush.msra.mxu0 0.0
      %2237 = vmatpush.msra.mxu0 0.0
      %2238 = vmatpush.msra.mxu0 0.0
      %2239 = vmatpush.msra.mxu0 0.0
      %2240 = vmatpush.msra.mxu0 0.0
      %2241 = vmatpush.msra.mxu0 0.0
      %2242 = vmatpush.msra.mxu0 0.0
      %2243 = vmatpush.msra.mxu0 0.0
      %2244 = vmatpush.msra.mxu0 0.0
      %2245 = vmatpush.msra.mxu0 0.0
      %2246 = vmatpush.msra.mxu0 %v2229
      %2247 = vmatmul.f32.gmra.mxu0 %v866
      %v2248 = vpop.f32.mrf.mxu0
      %v2249 = vadd.f32 0.0, %v2248
      %2250 = vmatmul.f32.gmra.mxu0 %v868
      %v2251 = vpop.f32.mrf.mxu0
      %v2252 = vadd.f32 0.0, %v2251
      %2253 = vmatmul.f32.gmra.mxu0 %v870
      %v2254 = vpop.f32.mrf.mxu0
      %v2255 = vadd.f32 0.0, %v2254
      %2256 = vmatmul.f32.gmra.mxu0 %v872
      %v2257 = vpop.f32.mrf.mxu0
      %v2258 = vadd.f32 0.0, %v2257
      %2259 = vmatmul.f32.gmra.mxu0 %v874
      %v2260 = vpop.f32.mrf.mxu0
      %v2261 = vadd.f32 0.0, %v2260
      %2262 = vmatmul.f32.gmra.mxu0 %v876
      %v2263 = vpop.f32.mrf.mxu0
      %v2264 = vadd.f32 0.0, %v2263
      %2265 = vmatmul.f32.gmra.mxu0 %v1714
      %v2266 = vpop.f32.mrf.mxu0
      %v2267 = vadd.f32 0.0, %v2266
      %2268 = vmatmul.f32.gmra.mxu0 %v2220
      %v2269 = vpop.f32.mrf.mxu0
      %v2270 = vadd.f32 0.0, %v2269
      %2271 = vmatmul.f32.gmra.mxu0 %v882
      %v2272 = vpop.f32.mrf.mxu0
      %v2273 = vadd.f32 0.0, %v2272
      %2274 = vmatmul.f32.gmra.mxu0 %v884
      %v2275 = vpop.f32.mrf.mxu0
      %v2276 = vadd.f32 0.0, %v2275
      %2277 = vmatmul.f32.gmra.mxu0 %v886
      %v2278 = vpop.f32.mrf.mxu0
      %v2279 = vadd.f32 0.0, %v2278
      %2280 = vmatmul.f32.gmra.mxu0 %v888
      %v2281 = vpop.f32.mrf.mxu0
      %v2282 = vadd.f32 0.0, %v2281
      %2283 = vmatmul.f32.gmra.mxu0 %v890
      %v2284 = vpop.f32.mrf.mxu0
      %v2285 = vadd.f32 0.0, %v2284
      %2286 = vmatmul.f32.gmra.mxu0 %v892
      %v2287 = vpop.f32.mrf.mxu0
      %v2288 = vadd.f32 0.0, %v2287
      %2289 = vmatmul.f32.gmra.mxu0 %v1716
      %v2290 = vpop.f32.mrf.mxu0
      %v2291 = vadd.f32 0.0, %v2290
      %2292 = vmatmul.f32.gmra.mxu0 %v2222
      %v2293 = vpop.f32.mrf.mxu0
      %v2294 = vadd.f32 0.0, %v2293
      %2295 = vmatmul.f32.gmra.mxu0 %v898
      %v2296 = vpop.f32.mrf.mxu0
      %v2297 = vadd.f32 0.0, %v2296
      %2298 = vmatmul.f32.gmra.mxu0 %v900
      %v2299 = vpop.f32.mrf.mxu0
      %v2300 = vadd.f32 0.0, %v2299
      %2301 = vmatmul.f32.gmra.mxu0 %v902
      %v2302 = vpop.f32.mrf.mxu0
      %v2303 = vadd.f32 0.0, %v2302
      %2304 = vmatmul.f32.gmra.mxu0 %v904
      %v2305 = vpop.f32.mrf.mxu0
      %v2306 = vadd.f32 0.0, %v2305
      %2307 = vmatmul.f32.gmra.mxu0 %v906
      %v2308 = vpop.f32.mrf.mxu0
      %v2309 = vadd.f32 0.0, %v2308
      %2310 = vmatmul.f32.gmra.mxu0 %v908
      %v2311 = vpop.f32.mrf.mxu0
      %v2312 = vadd.f32 0.0, %v2311
      %2313 = vmatmul.f32.gmra.mxu0 %v1718
      %v2314 = vpop.f32.mrf.mxu0
      %v2315 = vadd.f32 0.0, %v2314
      %2316 = vmatmul.f32.gmra.mxu0 %v2224
      %v2317 = vpop.f32.mrf.mxu0
      %v2318 = vadd.f32 0.0, %v2317
      %2319 = vmatmul.f32.gmra.mxu0 %v914
      %v2320 = vpop.f32.mrf.mxu0
      %v2321 = vadd.f32 0.0, %v2320
      %2322 = vmatmul.f32.gmra.mxu0 %v916
      %v2323 = vpop.f32.mrf.mxu0
      %v2324 = vadd.f32 0.0, %v2323
      %2325 = vmatmul.f32.gmra.mxu0 %v918
      %v2326 = vpop.f32.mrf.mxu0
      %v2327 = vadd.f32 0.0, %v2326
      %2328 = vmatmul.f32.gmra.mxu0 %v920
      %v2329 = vpop.f32.mrf.mxu0
      %v2330 = vadd.f32 0.0, %v2329
      %2331 = vmatmul.f32.gmra.mxu0 %v922
      %v2332 = vpop.f32.mrf.mxu0
      %v2333 = vadd.f32 0.0, %v2332
      %2334 = vmatmul.f32.gmra.mxu0 %v924
      %v2335 = vpop.f32.mrf.mxu0
      %v2336 = vadd.f32 0.0, %v2335
      %2337 = vmatmul.f32.gmra.mxu0 %v1720
      %v2338 = vpop.f32.mrf.mxu0
      %v2339 = vadd.f32 0.0, %v2338
      %2340 = vmatmul.f32.gmra.mxu0 %v2226
      %v2341 = vpop.f32.mrf.mxu0
      %v2342 = vadd.f32 0.0, %v2341
      %2343 = vdwg.mxu0
      %v2344 = vadd.f32 %v2170, %v2249
      %v2345 = vadd.f32 %v2171, %v2252
      %v2346 = vadd.f32 %v2172, %v2255
      %v2347 = vadd.f32 %v2173, %v2258
      %v2348 = vadd.f32 %v2174, %v2261
      %v2349 = vadd.f32 %v2175, %v2264
      %v2350 = vadd.f32 %v2176, %v2267
      %v2351 = vadd.f32 %v2177, %v2270
      %v2352 = vadd.f32 %v2178, %v2273
      %v2353 = vadd.f32 %v2179, %v2276
      %v2354 = vadd.f32 %v2180, %v2279
      %v2355 = vadd.f32 %v2181, %v2282
      %v2356 = vadd.f32 %v2182, %v2285
      %v2357 = vadd.f32 %v2183, %v2288
      %v2358 = vadd.f32 %v2184, %v2291
      %v2359 = vadd.f32 %v2185, %v2294
      %v2360 = vadd.f32 %v2186, %v2297
      %v2361 = vadd.f32 %v2187, %v2300
      %v2362 = vadd.f32 %v2188, %v2303
      %v2363 = vadd.f32 %v2189, %v2306
      %v2364 = vadd.f32 %v2190, %v2309
      %v2365 = vadd.f32 %v2191, %v2312
      %v2366 = vadd.f32 %v2192, %v2315
      %v2367 = vadd.f32 %v2193, %v2318
      %v2368 = vadd.f32 %v2194, %v2321
      %v2369 = vadd.f32 %v2195, %v2324
      %v2370 = vadd.f32 %v2196, %v2327
      %v2371 = vadd.f32 %v2197, %v2330
      %v2372 = vadd.f32 %v2198, %v2333
      %v2373 = vadd.f32 %v2199, %v2336
      %v2374 = vadd.f32 %v2200, %v2339
      %v2375 = vadd.f32 %v2201, %v2342
      %v2376 = vrot.slane %v595, 2
      %v2377 = vrot.slane %v596, 2
      %v2378 = vsel %vm1223, %v2376, %v2377
      %v2379 = vrot.slane %v615, 2
      %v2380 = vrot.slane %v616, 2
      %v2381 = vsel %vm1223, %v2379, %v2380
      %v2382 = vrot.slane %v635, 2
      %v2383 = vrot.slane %v636, 2
      %v2384 = vsel %vm1223, %v2382, %v2383
      %v2385 = vrot.slane %v655, 2
      %v2386 = vrot.slane %v656, 2
      %v2387 = vsel %vm1223, %v2385, %v2386
      %s2388 = scalar_lea.vmem %s6, 32
      %v2389 = vld [vmem:[%s2388] sm:$0xf]
      %v2390 = vsel %vm861, %v2378, 0
      %v2392 = vsel %vm861, %v2381, 0
      %v2394 = vsel %vm861, %v2384, 0
      %v2396 = vsel %vm861, %v2387, 0
      %v2399 = vsel %vm926, %v2389, 0
      %2401 = vmatpush.msra.mxu0 0.0
      %2402 = vmatpush.msra.mxu0 0.0
      %2403 = vmatpush.msra.mxu0 0.0
      %2404 = vmatpush.msra.mxu0 0.0
      %2405 = vmatpush.msra.mxu0 0.0
      %2406 = vmatpush.msra.mxu0 0.0
      %2407 = vmatpush.msra.mxu0 0.0
      %2408 = vmatpush.msra.mxu0 0.0
      %2409 = vmatpush.msra.mxu0 0.0
      %2410 = vmatpush.msra.mxu0 0.0
      %2411 = vmatpush.msra.mxu0 0.0
      %2412 = vmatpush.msra.mxu0 0.0
      %2413 = vmatpush.msra.mxu0 0.0
      %2414 = vmatpush.msra.mxu0 0.0
      %2415 = vmatpush.msra.mxu0 0.0
      %2416 = vmatpush.msra.mxu0 %v2399
      %2417 = vmatmul.f32.gmra.mxu0 %v1326
      %v2418 = vpop.f32.mrf.mxu0
      %v2419 = vadd.f32 0.0, %v2418
      %2420 = vmatmul.f32.gmra.mxu0 %v1328
      %v2421 = vpop.f32.mrf.mxu0
      %v2422 = vadd.f32 0.0, %v2421
      %2423 = vmatmul.f32.gmra.mxu0 %v1330
      %v2424 = vpop.f32.mrf.mxu0
      %v2425 = vadd.f32 0.0, %v2424
      %2426 = vmatmul.f32.gmra.mxu0 %v1332
      %v2427 = vpop.f32.mrf.mxu0
      %v2428 = vadd.f32 0.0, %v2427
      %2429 = vmatmul.f32.gmra.mxu0 %v1334
      %v2430 = vpop.f32.mrf.mxu0
      %v2431 = vadd.f32 0.0, %v2430
      %2432 = vmatmul.f32.gmra.mxu0 %v1336
      %v2433 = vpop.f32.mrf.mxu0
      %v2434 = vadd.f32 0.0, %v2433
      %2435 = vmatmul.f32.gmra.mxu0 %v1884
      %v2436 = vpop.f32.mrf.mxu0
      %v2437 = vadd.f32 0.0, %v2436
      %2438 = vmatmul.f32.gmra.mxu0 %v2390
      %v2439 = vpop.f32.mrf.mxu0
      %v2440 = vadd.f32 0.0, %v2439
      %2441 = vmatmul.f32.gmra.mxu0 %v1342
      %v2442 = vpop.f32.mrf.mxu0
      %v2443 = vadd.f32 0.0, %v2442
      %2444 = vmatmul.f32.gmra.mxu0 %v1344
      %v2445 = vpop.f32.mrf.mxu0
      %v2446 = vadd.f32 0.0, %v2445
      %2447 = vmatmul.f32.gmra.mxu0 %v1346
      %v2448 = vpop.f32.mrf.mxu0
      %v2449 = vadd.f32 0.0, %v2448
      %2450 = vmatmul.f32.gmra.mxu0 %v1348
      %v2451 = vpop.f32.mrf.mxu0
      %v2452 = vadd.f32 0.0, %v2451
      %2453 = vmatmul.f32.gmra.mxu0 %v1350
      %v2454 = vpop.f32.mrf.mxu0
      %v2455 = vadd.f32 0.0, %v2454
      %2456 = vmatmul.f32.gmra.mxu0 %v1352
      %v2457 = vpop.f32.mrf.mxu0
      %v2458 = vadd.f32 0.0, %v2457
      %2459 = vmatmul.f32.gmra.mxu0 %v1886
      %v2460 = vpop.f32.mrf.mxu0
      %v2461 = vadd.f32 0.0, %v2460
      %2462 = vmatmul.f32.gmra.mxu0 %v2392
      %v2463 = vpop.f32.mrf.mxu0
      %v2464 = vadd.f32 0.0, %v2463
      %2465 = vmatmul.f32.gmra.mxu0 %v1358
      %v2466 = vpop.f32.mrf.mxu0
      %v2467 = vadd.f32 0.0, %v2466
      %2468 = vmatmul.f32.gmra.mxu0 %v1360
      %v2469 = vpop.f32.mrf.mxu0
      %v2470 = vadd.f32 0.0, %v2469
      %2471 = vmatmul.f32.gmra.mxu0 %v1362
      %v2472 = vpop.f32.mrf.mxu0
      %v2473 = vadd.f32 0.0, %v2472
      %2474 = vmatmul.f32.gmra.mxu0 %v1364
      %v2475 = vpop.f32.mrf.mxu0
      %v2476 = vadd.f32 0.0, %v2475
      %2477 = vmatmul.f32.gmra.mxu0 %v1366
      %v2478 = vpop.f32.mrf.mxu0
      %v2479 = vadd.f32 0.0, %v2478
      %2480 = vmatmul.f32.gmra.mxu0 %v1368
      %v2481 = vpop.f32.mrf.mxu0
      %v2482 = vadd.f32 0.0, %v2481
      %2483 = vmatmul.f32.gmra.mxu0 %v1888
      %v2484 = vpop.f32.mrf.mxu0
      %v2485 = vadd.f32 0.0, %v2484
      %2486 = vmatmul.f32.gmra.mxu0 %v2394
      %v2487 = vpop.f32.mrf.mxu0
      %v2488 = vadd.f32 0.0, %v2487
      %2489 = vmatmul.f32.gmra.mxu0 %v1374
      %v2490 = vpop.f32.mrf.mxu0
      %v2491 = vadd.f32 0.0, %v2490
      %2492 = vmatmul.f32.gmra.mxu0 %v1376
      %v2493 = vpop.f32.mrf.mxu0
      %v2494 = vadd.f32 0.0, %v2493
      %2495 = vmatmul.f32.gmra.mxu0 %v1378
      %v2496 = vpop.f32.mrf.mxu0
      %v2497 = vadd.f32 0.0, %v2496
      %2498 = vmatmul.f32.gmra.mxu0 %v1380
      %v2499 = vpop.f32.mrf.mxu0
      %v2500 = vadd.f32 0.0, %v2499
      %2501 = vmatmul.f32.gmra.mxu0 %v1382
      %v2502 = vpop.f32.mrf.mxu0
      %v2503 = vadd.f32 0.0, %v2502
      %2504 = vmatmul.f32.gmra.mxu0 %v1384
      %v2505 = vpop.f32.mrf.mxu0
      %v2506 = vadd.f32 0.0, %v2505
      %2507 = vmatmul.f32.gmra.mxu0 %v1890
      %v2508 = vpop.f32.mrf.mxu0
      %v2509 = vadd.f32 0.0, %v2508
      %2510 = vmatmul.f32.gmra.mxu0 %v2396
      %v2511 = vpop.f32.mrf.mxu0
      %v2512 = vadd.f32 0.0, %v2511
      %2513 = vdwg.mxu0
      %v2514 = vadd.f32 %v2344, %v2419
      %v2515 = vadd.f32 %v2345, %v2422
      %v2516 = vadd.f32 %v2346, %v2425
      %v2517 = vadd.f32 %v2347, %v2428
      %v2518 = vadd.f32 %v2348, %v2431
      %v2519 = vadd.f32 %v2349, %v2434
      %v2520 = vadd.f32 %v2350, %v2437
      %v2521 = vadd.f32 %v2351, %v2440
      %v2522 = vadd.f32 %v2352, %v2443
      %v2523 = vadd.f32 %v2353, %v2446
      %v2524 = vadd.f32 %v2354, %v2449
      %v2525 = vadd.f32 %v2355, %v2452
      %v2526 = vadd.f32 %v2356, %v2455
      %v2527 = vadd.f32 %v2357, %v2458
      %v2528 = vadd.f32 %v2358, %v2461
      %v2529 = vadd.f32 %v2359, %v2464
      %v2530 = vadd.f32 %v2360, %v2467
      %v2531 = vadd.f32 %v2361, %v2470
      %v2532 = vadd.f32 %v2362, %v2473
      %v2533 = vadd.f32 %v2363, %v2476
      %v2534 = vadd.f32 %v2364, %v2479
      %v2535 = vadd.f32 %v2365, %v2482
      %v2536 = vadd.f32 %v2366, %v2485
      %v2537 = vadd.f32 %v2367, %v2488
      %v2538 = vadd.f32 %v2368, %v2491
      %v2539 = vadd.f32 %v2369, %v2494
      %v2540 = vadd.f32 %v2370, %v2497
      %v2541 = vadd.f32 %v2371, %v2500
      %v2542 = vadd.f32 %v2372, %v2503
      %v2543 = vadd.f32 %v2373, %v2506
      %v2544 = vadd.f32 %v2374, %v2509
      %v2545 = vadd.f32 %v2375, %v2512
      %s2546 = scalar_lea.vmem %s6, 36
      %v2547 = vld [vmem:[%s2546] sm:$0xf]
      %v2549 = vsel %vm861, %v657, 0
      %v2552 = vsel %vm861, %v659, 0
      %v2555 = vsel %vm861, %v661, 0
      %v2558 = vsel %vm861, %v663, 0
      %v2561 = vsel %vm861, %v665, 0
      %v2564 = vsel %vm861, %v667, 0
      %v2567 = vsel %vm861, %v669, 0
      %v2570 = vsel %vm861, %v671, 0
      %v2573 = vsel %vm926, %v2547, 0
      %2575 = vmatpush.msra.mxu0 0.0
      %2576 = vmatpush.msra.mxu0 0.0
      %2577 = vmatpush.msra.mxu0 0.0
      %2578 = vmatpush.msra.mxu0 0.0
      %2579 = vmatpush.msra.mxu0 0.0
      %2580 = vmatpush.msra.mxu0 0.0
      %2581 = vmatpush.msra.mxu0 0.0
      %2582 = vmatpush.msra.mxu0 0.0
      %2583 = vmatpush.msra.mxu0 0.0
      %2584 = vmatpush.msra.mxu0 0.0
      %2585 = vmatpush.msra.mxu0 0.0
      %2586 = vmatpush.msra.mxu0 0.0
      %2587 = vmatpush.msra.mxu0 0.0
      %2588 = vmatpush.msra.mxu0 0.0
      %2589 = vmatpush.msra.mxu0 0.0
      %2590 = vmatpush.msra.mxu0 %v2573
      %2591 = vmatmul.f32.gmra.mxu0 %v1059
      %v2592 = vpop.f32.mrf.mxu0
      %v2593 = vadd.f32 0.0, %v2592
      %2594 = vmatmul.f32.gmra.mxu0 %v1061
      %v2595 = vpop.f32.mrf.mxu0
      %v2596 = vadd.f32 0.0, %v2595
      %2597 = vmatmul.f32.gmra.mxu0 %v1063
      %v2598 = vpop.f32.mrf.mxu0
      %v2599 = vadd.f32 0.0, %v2598
      %2600 = vmatmul.f32.gmra.mxu0 %v1065
      %v2601 = vpop.f32.mrf.mxu0
      %v2602 = vadd.f32 0.0, %v2601
      %2603 = vmatmul.f32.gmra.mxu0 %v1067
      %v2604 = vpop.f32.mrf.mxu0
      %v2605 = vadd.f32 0.0, %v2604
      %2606 = vmatmul.f32.gmra.mxu0 %v1069
      %v2607 = vpop.f32.mrf.mxu0
      %v2608 = vadd.f32 0.0, %v2607
      %2609 = vmatmul.f32.gmra.mxu0 %v1071
      %v2610 = vpop.f32.mrf.mxu0
      %v2611 = vadd.f32 0.0, %v2610
      %2612 = vmatmul.f32.gmra.mxu0 %v1073
      %v2613 = vpop.f32.mrf.mxu0
      %v2614 = vadd.f32 0.0, %v2613
      %2615 = vmatmul.f32.gmra.mxu0 %v1075
      %v2616 = vpop.f32.mrf.mxu0
      %v2617 = vadd.f32 0.0, %v2616
      %2618 = vmatmul.f32.gmra.mxu0 %v1077
      %v2619 = vpop.f32.mrf.mxu0
      %v2620 = vadd.f32 0.0, %v2619
      %2621 = vmatmul.f32.gmra.mxu0 %v1079
      %v2622 = vpop.f32.mrf.mxu0
      %v2623 = vadd.f32 0.0, %v2622
      %2624 = vmatmul.f32.gmra.mxu0 %v1081
      %v2625 = vpop.f32.mrf.mxu0
      %v2626 = vadd.f32 0.0, %v2625
      %2627 = vmatmul.f32.gmra.mxu0 %v1083
      %v2628 = vpop.f32.mrf.mxu0
      %v2629 = vadd.f32 0.0, %v2628
      %2630 = vmatmul.f32.gmra.mxu0 %v1085
      %v2631 = vpop.f32.mrf.mxu0
      %v2632 = vadd.f32 0.0, %v2631
      %2633 = vmatmul.f32.gmra.mxu0 %v1087
      %v2634 = vpop.f32.mrf.mxu0
      %v2635 = vadd.f32 0.0, %v2634
      %2636 = vmatmul.f32.gmra.mxu0 %v1089
      %v2637 = vpop.f32.mrf.mxu0
      %v2638 = vadd.f32 0.0, %v2637
      %2639 = vmatmul.f32.gmra.mxu0 %v1091
      %v2640 = vpop.f32.mrf.mxu0
      %v2641 = vadd.f32 0.0, %v2640
      %2642 = vmatmul.f32.gmra.mxu0 %v1093
      %v2643 = vpop.f32.mrf.mxu0
      %v2644 = vadd.f32 0.0, %v2643
      %2645 = vmatmul.f32.gmra.mxu0 %v1095
      %v2646 = vpop.f32.mrf.mxu0
      %v2647 = vadd.f32 0.0, %v2646
      %2648 = vmatmul.f32.gmra.mxu0 %v1097
      %v2649 = vpop.f32.mrf.mxu0
      %v2650 = vadd.f32 0.0, %v2649
      %2651 = vmatmul.f32.gmra.mxu0 %v1099
      %v2652 = vpop.f32.mrf.mxu0
      %v2653 = vadd.f32 0.0, %v2652
      %2654 = vmatmul.f32.gmra.mxu0 %v1101
      %v2655 = vpop.f32.mrf.mxu0
      %v2656 = vadd.f32 0.0, %v2655
      %2657 = vmatmul.f32.gmra.mxu0 %v1103
      %v2658 = vpop.f32.mrf.mxu0
      %v2659 = vadd.f32 0.0, %v2658
      %2660 = vmatmul.f32.gmra.mxu0 %v1105
      %v2661 = vpop.f32.mrf.mxu0
      %v2662 = vadd.f32 0.0, %v2661
      %2663 = vmatmul.f32.gmra.mxu0 %v2549
      %v2664 = vpop.f32.mrf.mxu0
      %v2665 = vadd.f32 0.0, %v2664
      %2666 = vmatmul.f32.gmra.mxu0 %v2552
      %v2667 = vpop.f32.mrf.mxu0
      %v2668 = vadd.f32 0.0, %v2667
      %2669 = vmatmul.f32.gmra.mxu0 %v2555
      %v2670 = vpop.f32.mrf.mxu0
      %v2671 = vadd.f32 0.0, %v2670
      %2672 = vmatmul.f32.gmra.mxu0 %v2558
      %v2673 = vpop.f32.mrf.mxu0
      %v2674 = vadd.f32 0.0, %v2673
      %2675 = vmatmul.f32.gmra.mxu0 %v2561
      %v2676 = vpop.f32.mrf.mxu0
      %v2677 = vadd.f32 0.0, %v2676
      %2678 = vmatmul.f32.gmra.mxu0 %v2564
      %v2679 = vpop.f32.mrf.mxu0
      %v2680 = vadd.f32 0.0, %v2679
      %2681 = vmatmul.f32.gmra.mxu0 %v2567
      %v2682 = vpop.f32.mrf.mxu0
      %v2683 = vadd.f32 0.0, %v2682
      %2684 = vmatmul.f32.gmra.mxu0 %v2570
      %v2685 = vpop.f32.mrf.mxu0
      %v2686 = vadd.f32 0.0, %v2685
      %2687 = vdwg.mxu0
      %v2688 = vadd.f32 %v2514, %v2593
      %v2689 = vadd.f32 %v2515, %v2596
      %v2690 = vadd.f32 %v2516, %v2599
      %v2691 = vadd.f32 %v2517, %v2602
      %v2692 = vadd.f32 %v2518, %v2605
      %v2693 = vadd.f32 %v2519, %v2608
      %v2694 = vadd.f32 %v2520, %v2611
      %v2695 = vadd.f32 %v2521, %v2614
      %v2696 = vadd.f32 %v2522, %v2617
      %v2697 = vadd.f32 %v2523, %v2620
      %v2698 = vadd.f32 %v2524, %v2623
      %v2699 = vadd.f32 %v2525, %v2626
      %v2700 = vadd.f32 %v2526, %v2629
      %v2701 = vadd.f32 %v2527, %v2632
      %v2702 = vadd.f32 %v2528, %v2635
      %v2703 = vadd.f32 %v2529, %v2638
      %v2704 = vadd.f32 %v2530, %v2641
      %v2705 = vadd.f32 %v2531, %v2644
      %v2706 = vadd.f32 %v2532, %v2647
      %v2707 = vadd.f32 %v2533, %v2650
      %v2708 = vadd.f32 %v2534, %v2653
      %v2709 = vadd.f32 %v2535, %v2656
      %v2710 = vadd.f32 %v2536, %v2659
      %v2711 = vadd.f32 %v2537, %v2662
      %v2712 = vadd.f32 %v2538, %v2665
      %v2713 = vadd.f32 %v2539, %v2668
      %v2714 = vadd.f32 %v2540, %v2671
      %v2715 = vadd.f32 %v2541, %v2674
      %v2716 = vadd.f32 %v2542, %v2677
      %v2717 = vadd.f32 %v2543, %v2680
      %v2718 = vadd.f32 %v2544, %v2683
      %v2719 = vadd.f32 %v2545, %v2686
      %v2728 = vrot.slane %v657, 1
      %v2729 = vrot.slane %v658, 1
      %v2730 = vsel %vm762, %v2728, %v2729
      %v2731 = vrot.slane %v659, 1
      %v2732 = vrot.slane %v660, 1
      %v2733 = vsel %vm762, %v2731, %v2732
      %v2734 = vrot.slane %v661, 1
      %v2735 = vrot.slane %v662, 1
      %v2736 = vsel %vm762, %v2734, %v2735
      %v2737 = vrot.slane %v663, 1
      %v2738 = vrot.slane %v664, 1
      %v2739 = vsel %vm762, %v2737, %v2738
      %v2740 = vrot.slane %v665, 1
      %v2741 = vrot.slane %v666, 1
      %v2742 = vsel %vm762, %v2740, %v2741
      %v2743 = vrot.slane %v667, 1
      %v2744 = vrot.slane %v668, 1
      %v2745 = vsel %vm762, %v2743, %v2744
      %v2746 = vrot.slane %v669, 1
      %v2747 = vrot.slane %v670, 1
      %v2748 = vsel %vm762, %v2746, %v2747
      %v2749 = vrot.slane %v671, 1
      %v2750 = vrot.slane %v672, 1
      %v2751 = vsel %vm762, %v2749, %v2750
      %s2752 = scalar_lea.vmem %s6, 40
      %v2753 = vld [vmem:[%s2752] sm:$0xf]
      %v2754 = vsel %vm861, %v2730, 0
      %v2756 = vsel %vm861, %v2733, 0
      %v2758 = vsel %vm861, %v2736, 0
      %v2760 = vsel %vm861, %v2739, 0
      %v2762 = vsel %vm861, %v2742, 0
      %v2764 = vsel %vm861, %v2745, 0
      %v2766 = vsel %vm861, %v2748, 0
      %v2768 = vsel %vm861, %v2751, 0
      %v2771 = vsel %vm926, %v2753, 0
      %2773 = vmatpush.msra.mxu0 0.0
      %2774 = vmatpush.msra.mxu0 0.0
      %2775 = vmatpush.msra.mxu0 0.0
      %2776 = vmatpush.msra.mxu0 0.0
      %2777 = vmatpush.msra.mxu0 0.0
      %2778 = vmatpush.msra.mxu0 0.0
      %2779 = vmatpush.msra.mxu0 0.0
      %2780 = vmatpush.msra.mxu0 0.0
      %2781 = vmatpush.msra.mxu0 0.0
      %2782 = vmatpush.msra.mxu0 0.0
      %2783 = vmatpush.msra.mxu0 0.0
      %2784 = vmatpush.msra.mxu0 0.0
      %2785 = vmatpush.msra.mxu0 0.0
      %2786 = vmatpush.msra.mxu0 0.0
      %2787 = vmatpush.msra.mxu0 0.0
      %2788 = vmatpush.msra.mxu0 %v2771
      %2789 = vmatmul.f32.gmra.mxu0 %v878
      %v2790 = vpop.f32.mrf.mxu0
      %v2791 = vadd.f32 0.0, %v2790
      %2792 = vmatmul.f32.gmra.mxu0 %v880
      %v2793 = vpop.f32.mrf.mxu0
      %v2794 = vadd.f32 0.0, %v2793
      %2795 = vmatmul.f32.gmra.mxu0 %v882
      %v2796 = vpop.f32.mrf.mxu0
      %v2797 = vadd.f32 0.0, %v2796
      %2798 = vmatmul.f32.gmra.mxu0 %v884
      %v2799 = vpop.f32.mrf.mxu0
      %v2800 = vadd.f32 0.0, %v2799
      %2801 = vmatmul.f32.gmra.mxu0 %v886
      %v2802 = vpop.f32.mrf.mxu0
      %v2803 = vadd.f32 0.0, %v2802
      %2804 = vmatmul.f32.gmra.mxu0 %v888
      %v2805 = vpop.f32.mrf.mxu0
      %v2806 = vadd.f32 0.0, %v2805
      %2807 = vmatmul.f32.gmra.mxu0 %v890
      %v2808 = vpop.f32.mrf.mxu0
      %v2809 = vadd.f32 0.0, %v2808
      %2810 = vmatmul.f32.gmra.mxu0 %v892
      %v2811 = vpop.f32.mrf.mxu0
      %v2812 = vadd.f32 0.0, %v2811
      %2813 = vmatmul.f32.gmra.mxu0 %v894
      %v2814 = vpop.f32.mrf.mxu0
      %v2815 = vadd.f32 0.0, %v2814
      %2816 = vmatmul.f32.gmra.mxu0 %v896
      %v2817 = vpop.f32.mrf.mxu0
      %v2818 = vadd.f32 0.0, %v2817
      %2819 = vmatmul.f32.gmra.mxu0 %v898
      %v2820 = vpop.f32.mrf.mxu0
      %v2821 = vadd.f32 0.0, %v2820
      %2822 = vmatmul.f32.gmra.mxu0 %v900
      %v2823 = vpop.f32.mrf.mxu0
      %v2824 = vadd.f32 0.0, %v2823
      %2825 = vmatmul.f32.gmra.mxu0 %v902
      %v2826 = vpop.f32.mrf.mxu0
      %v2827 = vadd.f32 0.0, %v2826
      %2828 = vmatmul.f32.gmra.mxu0 %v904
      %v2829 = vpop.f32.mrf.mxu0
      %v2830 = vadd.f32 0.0, %v2829
      %2831 = vmatmul.f32.gmra.mxu0 %v906
      %v2832 = vpop.f32.mrf.mxu0
      %v2833 = vadd.f32 0.0, %v2832
      %2834 = vmatmul.f32.gmra.mxu0 %v908
      %v2835 = vpop.f32.mrf.mxu0
      %v2836 = vadd.f32 0.0, %v2835
      %2837 = vmatmul.f32.gmra.mxu0 %v910
      %v2838 = vpop.f32.mrf.mxu0
      %v2839 = vadd.f32 0.0, %v2838
      %2840 = vmatmul.f32.gmra.mxu0 %v912
      %v2841 = vpop.f32.mrf.mxu0
      %v2842 = vadd.f32 0.0, %v2841
      %2843 = vmatmul.f32.gmra.mxu0 %v914
      %v2844 = vpop.f32.mrf.mxu0
      %v2845 = vadd.f32 0.0, %v2844
      %2846 = vmatmul.f32.gmra.mxu0 %v916
      %v2847 = vpop.f32.mrf.mxu0
      %v2848 = vadd.f32 0.0, %v2847
      %2849 = vmatmul.f32.gmra.mxu0 %v918
      %v2850 = vpop.f32.mrf.mxu0
      %v2851 = vadd.f32 0.0, %v2850
      %2852 = vmatmul.f32.gmra.mxu0 %v920
      %v2853 = vpop.f32.mrf.mxu0
      %v2854 = vadd.f32 0.0, %v2853
      %2855 = vmatmul.f32.gmra.mxu0 %v922
      %v2856 = vpop.f32.mrf.mxu0
      %v2857 = vadd.f32 0.0, %v2856
      %2858 = vmatmul.f32.gmra.mxu0 %v924
      %v2859 = vpop.f32.mrf.mxu0
      %v2860 = vadd.f32 0.0, %v2859
      %2861 = vmatmul.f32.gmra.mxu0 %v2754
      %v2862 = vpop.f32.mrf.mxu0
      %v2863 = vadd.f32 0.0, %v2862
      %2864 = vmatmul.f32.gmra.mxu0 %v2756
      %v2865 = vpop.f32.mrf.mxu0
      %v2866 = vadd.f32 0.0, %v2865
      %2867 = vmatmul.f32.gmra.mxu0 %v2758
      %v2868 = vpop.f32.mrf.mxu0
      %v2869 = vadd.f32 0.0, %v2868
      %2870 = vmatmul.f32.gmra.mxu0 %v2760
      %v2871 = vpop.f32.mrf.mxu0
      %v2872 = vadd.f32 0.0, %v2871
      %2873 = vmatmul.f32.gmra.mxu0 %v2762
      %v2874 = vpop.f32.mrf.mxu0
      %v2875 = vadd.f32 0.0, %v2874
      %2876 = vmatmul.f32.gmra.mxu0 %v2764
      %v2877 = vpop.f32.mrf.mxu0
      %v2878 = vadd.f32 0.0, %v2877
      %2879 = vmatmul.f32.gmra.mxu0 %v2766
      %v2880 = vpop.f32.mrf.mxu0
      %v2881 = vadd.f32 0.0, %v2880
      %2882 = vmatmul.f32.gmra.mxu0 %v2768
      %v2883 = vpop.f32.mrf.mxu0
      %v2884 = vadd.f32 0.0, %v2883
      %2885 = vdwg.mxu0
      %v2886 = vadd.f32 %v2688, %v2791
      %v2887 = vadd.f32 %v2689, %v2794
      %v2888 = vadd.f32 %v2690, %v2797
      %v2889 = vadd.f32 %v2691, %v2800
      %v2890 = vadd.f32 %v2692, %v2803
      %v2891 = vadd.f32 %v2693, %v2806
      %v2892 = vadd.f32 %v2694, %v2809
      %v2893 = vadd.f32 %v2695, %v2812
      %v2894 = vadd.f32 %v2696, %v2815
      %v2895 = vadd.f32 %v2697, %v2818
      %v2896 = vadd.f32 %v2698, %v2821
      %v2897 = vadd.f32 %v2699, %v2824
      %v2898 = vadd.f32 %v2700, %v2827
      %v2899 = vadd.f32 %v2701, %v2830
      %v2900 = vadd.f32 %v2702, %v2833
      %v2901 = vadd.f32 %v2703, %v2836
      %v2902 = vadd.f32 %v2704, %v2839
      %v2903 = vadd.f32 %v2705, %v2842
      %v2904 = vadd.f32 %v2706, %v2845
      %v2905 = vadd.f32 %v2707, %v2848
      %v2906 = vadd.f32 %v2708, %v2851
      %v2907 = vadd.f32 %v2709, %v2854
      %v2908 = vadd.f32 %v2710, %v2857
      %v2909 = vadd.f32 %v2711, %v2860
      %v2910 = vadd.f32 %v2712, %v2863
      %v2911 = vadd.f32 %v2713, %v2866
      %v2912 = vadd.f32 %v2714, %v2869
      %v2913 = vadd.f32 %v2715, %v2872
      %v2914 = vadd.f32 %v2716, %v2875
      %v2915 = vadd.f32 %v2717, %v2878
      %v2916 = vadd.f32 %v2718, %v2881
      %v2917 = vadd.f32 %v2719, %v2884
      %v2918 = vrot.slane %v657, 2
      %v2919 = vrot.slane %v658, 2
      %v2920 = vsel %vm1223, %v2918, %v2919
      %v2921 = vrot.slane %v659, 2
      %v2922 = vrot.slane %v660, 2
      %v2923 = vsel %vm1223, %v2921, %v2922
      %v2924 = vrot.slane %v661, 2
      %v2925 = vrot.slane %v662, 2
      %v2926 = vsel %vm1223, %v2924, %v2925
      %v2927 = vrot.slane %v663, 2
      %v2928 = vrot.slane %v664, 2
      %v2929 = vsel %vm1223, %v2927, %v2928
      %v2930 = vrot.slane %v665, 2
      %v2931 = vrot.slane %v666, 2
      %v2932 = vsel %vm1223, %v2930, %v2931
      %v2933 = vrot.slane %v667, 2
      %v2934 = vrot.slane %v668, 2
      %v2935 = vsel %vm1223, %v2933, %v2934
      %v2936 = vrot.slane %v669, 2
      %v2937 = vrot.slane %v670, 2
      %v2938 = vsel %vm1223, %v2936, %v2937
      %v2939 = vrot.slane %v671, 2
      %v2940 = vrot.slane %v672, 2
      %v2941 = vsel %vm1223, %v2939, %v2940
      %s2942 = scalar_lea.vmem %s6, 44
      %v2943 = vld [vmem:[%s2942] sm:$0xf]
      %v2944 = vsel %vm861, %v2920, 0
      %v2946 = vsel %vm861, %v2923, 0
      %v2948 = vsel %vm861, %v2926, 0
      %v2950 = vsel %vm861, %v2929, 0
      %v2952 = vsel %vm861, %v2932, 0
      %v2954 = vsel %vm861, %v2935, 0
      %v2956 = vsel %vm861, %v2938, 0
      %v2958 = vsel %vm861, %v2941, 0
      %v2961 = vsel %vm926, %v2943, 0
      %2963 = vmatpush.msra.mxu0 0.0
      %2964 = vmatpush.msra.mxu0 0.0
      %2965 = vmatpush.msra.mxu0 0.0
      %2966 = vmatpush.msra.mxu0 0.0
      %2967 = vmatpush.msra.mxu0 0.0
      %2968 = vmatpush.msra.mxu0 0.0
      %2969 = vmatpush.msra.mxu0 0.0
      %2970 = vmatpush.msra.mxu0 0.0
      %2971 = vmatpush.msra.mxu0 0.0
      %2972 = vmatpush.msra.mxu0 0.0
      %2973 = vmatpush.msra.mxu0 0.0
      %2974 = vmatpush.msra.mxu0 0.0
      %2975 = vmatpush.msra.mxu0 0.0
      %2976 = vmatpush.msra.mxu0 0.0
      %2977 = vmatpush.msra.mxu0 0.0
      %2978 = vmatpush.msra.mxu0 %v2961
      %2979 = vmatmul.f32.gmra.mxu0 %v1338
      %v2980 = vpop.f32.mrf.mxu0
      %v2981 = vadd.f32 0.0, %v2980
      %2982 = vmatmul.f32.gmra.mxu0 %v1340
      %v2983 = vpop.f32.mrf.mxu0
      %v2984 = vadd.f32 0.0, %v2983
      %2985 = vmatmul.f32.gmra.mxu0 %v1342
      %v2986 = vpop.f32.mrf.mxu0
      %v2987 = vadd.f32 0.0, %v2986
      %2988 = vmatmul.f32.gmra.mxu0 %v1344
      %v2989 = vpop.f32.mrf.mxu0
      %v2990 = vadd.f32 0.0, %v2989
      %2991 = vmatmul.f32.gmra.mxu0 %v1346
      %v2992 = vpop.f32.mrf.mxu0
      %v2993 = vadd.f32 0.0, %v2992
      %2994 = vmatmul.f32.gmra.mxu0 %v1348
      %v2995 = vpop.f32.mrf.mxu0
      %v2996 = vadd.f32 0.0, %v2995
      %2997 = vmatmul.f32.gmra.mxu0 %v1350
      %v2998 = vpop.f32.mrf.mxu0
      %v2999 = vadd.f32 0.0, %v2998
      %3000 = vmatmul.f32.gmra.mxu0 %v1352
      %v3001 = vpop.f32.mrf.mxu0
      %v3002 = vadd.f32 0.0, %v3001
      %3003 = vmatmul.f32.gmra.mxu0 %v1354
      %v3004 = vpop.f32.mrf.mxu0
      %v3005 = vadd.f32 0.0, %v3004
      %3006 = vmatmul.f32.gmra.mxu0 %v1356
      %v3007 = vpop.f32.mrf.mxu0
      %v3008 = vadd.f32 0.0, %v3007
      %3009 = vmatmul.f32.gmra.mxu0 %v1358
      %v3010 = vpop.f32.mrf.mxu0
      %v3011 = vadd.f32 0.0, %v3010
      %3012 = vmatmul.f32.gmra.mxu0 %v1360
      %v3013 = vpop.f32.mrf.mxu0
      %v3014 = vadd.f32 0.0, %v3013
      %3015 = vmatmul.f32.gmra.mxu0 %v1362
      %v3016 = vpop.f32.mrf.mxu0
      %v3017 = vadd.f32 0.0, %v3016
      %3018 = vmatmul.f32.gmra.mxu0 %v1364
      %v3019 = vpop.f32.mrf.mxu0
      %v3020 = vadd.f32 0.0, %v3019
      %3021 = vmatmul.f32.gmra.mxu0 %v1366
      %v3022 = vpop.f32.mrf.mxu0
      %v3023 = vadd.f32 0.0, %v3022
      %3024 = vmatmul.f32.gmra.mxu0 %v1368
      %v3025 = vpop.f32.mrf.mxu0
      %v3026 = vadd.f32 0.0, %v3025
      %3027 = vmatmul.f32.gmra.mxu0 %v1370
      %v3028 = vpop.f32.mrf.mxu0
      %v3029 = vadd.f32 0.0, %v3028
      %3030 = vmatmul.f32.gmra.mxu0 %v1372
      %v3031 = vpop.f32.mrf.mxu0
      %v3032 = vadd.f32 0.0, %v3031
      %3033 = vmatmul.f32.gmra.mxu0 %v1374
      %v3034 = vpop.f32.mrf.mxu0
      %v3035 = vadd.f32 0.0, %v3034
      %3036 = vmatmul.f32.gmra.mxu0 %v1376
      %v3037 = vpop.f32.mrf.mxu0
      %v3038 = vadd.f32 0.0, %v3037
      %3039 = vmatmul.f32.gmra.mxu0 %v1378
      %v3040 = vpop.f32.mrf.mxu0
      %v3041 = vadd.f32 0.0, %v3040
      %3042 = vmatmul.f32.gmra.mxu0 %v1380
      %v3043 = vpop.f32.mrf.mxu0
      %v3044 = vadd.f32 0.0, %v3043
      %3045 = vmatmul.f32.gmra.mxu0 %v1382
      %v3046 = vpop.f32.mrf.mxu0
      %v3047 = vadd.f32 0.0, %v3046
      %3048 = vmatmul.f32.gmra.mxu0 %v1384
      %v3049 = vpop.f32.mrf.mxu0
      %v3050 = vadd.f32 0.0, %v3049
      %3051 = vmatmul.f32.gmra.mxu0 %v2944
      %v3052 = vpop.f32.mrf.mxu0
      %v3053 = vadd.f32 0.0, %v3052
      %3054 = vmatmul.f32.gmra.mxu0 %v2946
      %v3055 = vpop.f32.mrf.mxu0
      %v3056 = vadd.f32 0.0, %v3055
      %3057 = vmatmul.f32.gmra.mxu0 %v2948
      %v3058 = vpop.f32.mrf.mxu0
      %v3059 = vadd.f32 0.0, %v3058
      %3060 = vmatmul.f32.gmra.mxu0 %v2950
      %v3061 = vpop.f32.mrf.mxu0
      %v3062 = vadd.f32 0.0, %v3061
      %3063 = vmatmul.f32.gmra.mxu0 %v2952
      %v3064 = vpop.f32.mrf.mxu0
      %v3065 = vadd.f32 0.0, %v3064
      %3066 = vmatmul.f32.gmra.mxu0 %v2954
      %v3067 = vpop.f32.mrf.mxu0
      %v3068 = vadd.f32 0.0, %v3067
      %3069 = vmatmul.f32.gmra.mxu0 %v2956
      %v3070 = vpop.f32.mrf.mxu0
      %v3071 = vadd.f32 0.0, %v3070
      %3072 = vmatmul.f32.gmra.mxu0 %v2958
      %v3073 = vpop.f32.mrf.mxu0
      %v3074 = vadd.f32 0.0, %v3073
      %3075 = vdwg.mxu0
      %v3076 = vadd.f32 %v2886, %v2981
      %v3077 = vadd.f32 %v2887, %v2984
      %v3078 = vadd.f32 %v2888, %v2987
      %v3079 = vadd.f32 %v2889, %v2990
      %v3080 = vadd.f32 %v2890, %v2993
      %v3081 = vadd.f32 %v2891, %v2996
      %v3082 = vadd.f32 %v2892, %v2999
      %v3083 = vadd.f32 %v2893, %v3002
      %v3084 = vadd.f32 %v2894, %v3005
      %v3085 = vadd.f32 %v2895, %v3008
      %v3086 = vadd.f32 %v2896, %v3011
      %v3087 = vadd.f32 %v2897, %v3014
      %v3088 = vadd.f32 %v2898, %v3017
      %v3089 = vadd.f32 %v2899, %v3020
      %v3090 = vadd.f32 %v2900, %v3023
      %v3091 = vadd.f32 %v2901, %v3026
      %v3092 = vadd.f32 %v2902, %v3029
      %v3093 = vadd.f32 %v2903, %v3032
      %v3094 = vadd.f32 %v2904, %v3035
      %v3095 = vadd.f32 %v2905, %v3038
      %v3096 = vadd.f32 %v2906, %v3041
      %v3097 = vadd.f32 %v2907, %v3044
      %v3098 = vadd.f32 %v2908, %v3047
      %v3099 = vadd.f32 %v2909, %v3050
      %v3100 = vadd.f32 %v2910, %v3053
      %v3101 = vadd.f32 %v2911, %v3056
      %v3102 = vadd.f32 %v2912, %v3059
      %v3103 = vadd.f32 %v2913, %v3062
      %v3104 = vadd.f32 %v2914, %v3065
      %v3105 = vadd.f32 %v2915, %v3068
      %v3106 = vadd.f32 %v2916, %v3071
      %v3107 = vadd.f32 %v2917, %v3074
      %s3108 = scalar_lea.vmem %s6, 48
      %v3109 = vld [vmem:[%s3108] sm:$0xf]
      %v3111 = vsel %vm861, %v673, 0
      %v3114 = vsel %vm926, %v3109, 0
      %3116 = vmatpush.msra.mxu0 0.0
      %3117 = vmatpush.msra.mxu0 0.0
      %3118 = vmatpush.msra.mxu0 0.0
      %3119 = vmatpush.msra.mxu0 0.0
      %3120 = vmatpush.msra.mxu0 0.0
      %3121 = vmatpush.msra.mxu0 0.0
      %3122 = vmatpush.msra.mxu0 0.0
      %3123 = vmatpush.msra.mxu0 0.0
      %3124 = vmatpush.msra.mxu0 0.0
      %3125 = vmatpush.msra.mxu0 0.0
      %3126 = vmatpush.msra.mxu0 0.0
      %3127 = vmatpush.msra.mxu0 0.0
      %3128 = vmatpush.msra.mxu0 0.0
      %3129 = vmatpush.msra.mxu0 0.0
      %3130 = vmatpush.msra.mxu0 0.0
      %3131 = vmatpush.msra.mxu0 %v3114
      %3132 = vmatmul.f32.gmra.mxu0 %v1061
      %v3133 = vpop.f32.mrf.mxu0
      %v3134 = vadd.f32 0.0, %v3133
      %3135 = vmatmul.f32.gmra.mxu0 %v1063
      %v3136 = vpop.f32.mrf.mxu0
      %v3137 = vadd.f32 0.0, %v3136
      %3138 = vmatmul.f32.gmra.mxu0 %v1065
      %v3139 = vpop.f32.mrf.mxu0
      %v3140 = vadd.f32 0.0, %v3139
      %3141 = vmatmul.f32.gmra.mxu0 %v1067
      %v3142 = vpop.f32.mrf.mxu0
      %v3143 = vadd.f32 0.0, %v3142
      %3144 = vmatmul.f32.gmra.mxu0 %v1069
      %v3145 = vpop.f32.mrf.mxu0
      %v3146 = vadd.f32 0.0, %v3145
      %3147 = vmatmul.f32.gmra.mxu0 %v1071
      %v3148 = vpop.f32.mrf.mxu0
      %v3149 = vadd.f32 0.0, %v3148
      %3150 = vmatmul.f32.gmra.mxu0 %v1073
      %v3151 = vpop.f32.mrf.mxu0
      %v3152 = vadd.f32 0.0, %v3151
      %3153 = vmatmul.f32.gmra.mxu0 %v1540
      %v3154 = vpop.f32.mrf.mxu0
      %v3155 = vadd.f32 0.0, %v3154
      %3156 = vmatmul.f32.gmra.mxu0 %v1077
      %v3157 = vpop.f32.mrf.mxu0
      %v3158 = vadd.f32 0.0, %v3157
      %3159 = vmatmul.f32.gmra.mxu0 %v1079
      %v3160 = vpop.f32.mrf.mxu0
      %v3161 = vadd.f32 0.0, %v3160
      %3162 = vmatmul.f32.gmra.mxu0 %v1081
      %v3163 = vpop.f32.mrf.mxu0
      %v3164 = vadd.f32 0.0, %v3163
      %3165 = vmatmul.f32.gmra.mxu0 %v1083
      %v3166 = vpop.f32.mrf.mxu0
      %v3167 = vadd.f32 0.0, %v3166
      %3168 = vmatmul.f32.gmra.mxu0 %v1085
      %v3169 = vpop.f32.mrf.mxu0
      %v3170 = vadd.f32 0.0, %v3169
      %3171 = vmatmul.f32.gmra.mxu0 %v1087
      %v3172 = vpop.f32.mrf.mxu0
      %v3173 = vadd.f32 0.0, %v3172
      %3174 = vmatmul.f32.gmra.mxu0 %v1089
      %v3175 = vpop.f32.mrf.mxu0
      %v3176 = vadd.f32 0.0, %v3175
      %3177 = vmatmul.f32.gmra.mxu0 %v1543
      %v3178 = vpop.f32.mrf.mxu0
      %v3179 = vadd.f32 0.0, %v3178
      %3180 = vmatmul.f32.gmra.mxu0 %v1093
      %v3181 = vpop.f32.mrf.mxu0
      %v3182 = vadd.f32 0.0, %v3181
      %3183 = vmatmul.f32.gmra.mxu0 %v1095
      %v3184 = vpop.f32.mrf.mxu0
      %v3185 = vadd.f32 0.0, %v3184
      %3186 = vmatmul.f32.gmra.mxu0 %v1097
      %v3187 = vpop.f32.mrf.mxu0
      %v3188 = vadd.f32 0.0, %v3187
      %3189 = vmatmul.f32.gmra.mxu0 %v1099
      %v3190 = vpop.f32.mrf.mxu0
      %v3191 = vadd.f32 0.0, %v3190
      %3192 = vmatmul.f32.gmra.mxu0 %v1101
      %v3193 = vpop.f32.mrf.mxu0
      %v3194 = vadd.f32 0.0, %v3193
      %3195 = vmatmul.f32.gmra.mxu0 %v1103
      %v3196 = vpop.f32.mrf.mxu0
      %v3197 = vadd.f32 0.0, %v3196
      %3198 = vmatmul.f32.gmra.mxu0 %v1105
      %v3199 = vpop.f32.mrf.mxu0
      %v3200 = vadd.f32 0.0, %v3199
      %3201 = vmatmul.f32.gmra.mxu0 %v1546
      %v3202 = vpop.f32.mrf.mxu0
      %v3203 = vadd.f32 0.0, %v3202
      %3204 = vmatmul.f32.gmra.mxu0 %v2552
      %v3205 = vpop.f32.mrf.mxu0
      %v3206 = vadd.f32 0.0, %v3205
      %3207 = vmatmul.f32.gmra.mxu0 %v2555
      %v3208 = vpop.f32.mrf.mxu0
      %v3209 = vadd.f32 0.0, %v3208
      %3210 = vmatmul.f32.gmra.mxu0 %v2558
      %v3211 = vpop.f32.mrf.mxu0
      %v3212 = vadd.f32 0.0, %v3211
      %3213 = vmatmul.f32.gmra.mxu0 %v2561
      %v3214 = vpop.f32.mrf.mxu0
      %v3215 = vadd.f32 0.0, %v3214
      %3216 = vmatmul.f32.gmra.mxu0 %v2564
      %v3217 = vpop.f32.mrf.mxu0
      %v3218 = vadd.f32 0.0, %v3217
      %3219 = vmatmul.f32.gmra.mxu0 %v2567
      %v3220 = vpop.f32.mrf.mxu0
      %v3221 = vadd.f32 0.0, %v3220
      %3222 = vmatmul.f32.gmra.mxu0 %v2570
      %v3223 = vpop.f32.mrf.mxu0
      %v3224 = vadd.f32 0.0, %v3223
      %3225 = vmatmul.f32.gmra.mxu0 %v3111
      %v3226 = vpop.f32.mrf.mxu0
      %v3227 = vadd.f32 0.0, %v3226
      %3228 = vdwg.mxu0
      %v3229 = vadd.f32 %v3076, %v3134
      %v3230 = vadd.f32 %v3077, %v3137
      %v3231 = vadd.f32 %v3078, %v3140
      %v3232 = vadd.f32 %v3079, %v3143
      %v3233 = vadd.f32 %v3080, %v3146
      %v3234 = vadd.f32 %v3081, %v3149
      %v3235 = vadd.f32 %v3082, %v3152
      %v3236 = vadd.f32 %v3083, %v3155
      %v3237 = vadd.f32 %v3084, %v3158
      %v3238 = vadd.f32 %v3085, %v3161
      %v3239 = vadd.f32 %v3086, %v3164
      %v3240 = vadd.f32 %v3087, %v3167
      %v3241 = vadd.f32 %v3088, %v3170
      %v3242 = vadd.f32 %v3089, %v3173
      %v3243 = vadd.f32 %v3090, %v3176
      %v3244 = vadd.f32 %v3091, %v3179
      %v3245 = vadd.f32 %v3092, %v3182
      %v3246 = vadd.f32 %v3093, %v3185
      %v3247 = vadd.f32 %v3094, %v3188
      %v3248 = vadd.f32 %v3095, %v3191
      %v3249 = vadd.f32 %v3096, %v3194
      %v3250 = vadd.f32 %v3097, %v3197
      %v3251 = vadd.f32 %v3098, %v3200
      %v3252 = vadd.f32 %v3099, %v3203
      %v3253 = vadd.f32 %v3100, %v3206
      %v3254 = vadd.f32 %v3101, %v3209
      %v3255 = vadd.f32 %v3102, %v3212
      %v3256 = vadd.f32 %v3103, %v3215
      %v3257 = vadd.f32 %v3104, %v3218
      %v3258 = vadd.f32 %v3105, %v3221
      %v3259 = vadd.f32 %v3106, %v3224
      %v3260 = vadd.f32 %v3107, %v3227
      %v3262 = vrot.slane %v673, 1
      %v3263 = vrot.slane %v674, 1
      %v3264 = vsel %vm762, %v3262, %v3263
      %s3265 = scalar_lea.vmem %s6, 52
      %v3266 = vld [vmem:[%s3265] sm:$0xf]
      %v3267 = vsel %vm861, %v3264, 0
      %v3270 = vsel %vm926, %v3266, 0
      %3272 = vmatpush.msra.mxu0 0.0
      %3273 = vmatpush.msra.mxu0 0.0
      %3274 = vmatpush.msra.mxu0 0.0
      %3275 = vmatpush.msra.mxu0 0.0
      %3276 = vmatpush.msra.mxu0 0.0
      %3277 = vmatpush.msra.mxu0 0.0
      %3278 = vmatpush.msra.mxu0 0.0
      %3279 = vmatpush.msra.mxu0 0.0
      %3280 = vmatpush.msra.mxu0 0.0
      %3281 = vmatpush.msra.mxu0 0.0
      %3282 = vmatpush.msra.mxu0 0.0
      %3283 = vmatpush.msra.mxu0 0.0
      %3284 = vmatpush.msra.mxu0 0.0
      %3285 = vmatpush.msra.mxu0 0.0
      %3286 = vmatpush.msra.mxu0 0.0
      %3287 = vmatpush.msra.mxu0 %v3270
      %3288 = vmatmul.f32.gmra.mxu0 %v880
      %v3289 = vpop.f32.mrf.mxu0
      %v3290 = vadd.f32 0.0, %v3289
      %3291 = vmatmul.f32.gmra.mxu0 %v882
      %v3292 = vpop.f32.mrf.mxu0
      %v3293 = vadd.f32 0.0, %v3292
      %3294 = vmatmul.f32.gmra.mxu0 %v884
      %v3295 = vpop.f32.mrf.mxu0
      %v3296 = vadd.f32 0.0, %v3295
      %3297 = vmatmul.f32.gmra.mxu0 %v886
      %v3298 = vpop.f32.mrf.mxu0
      %v3299 = vadd.f32 0.0, %v3298
      %3300 = vmatmul.f32.gmra.mxu0 %v888
      %v3301 = vpop.f32.mrf.mxu0
      %v3302 = vadd.f32 0.0, %v3301
      %3303 = vmatmul.f32.gmra.mxu0 %v890
      %v3304 = vpop.f32.mrf.mxu0
      %v3305 = vadd.f32 0.0, %v3304
      %3306 = vmatmul.f32.gmra.mxu0 %v892
      %v3307 = vpop.f32.mrf.mxu0
      %v3308 = vadd.f32 0.0, %v3307
      %3309 = vmatmul.f32.gmra.mxu0 %v1716
      %v3310 = vpop.f32.mrf.mxu0
      %v3311 = vadd.f32 0.0, %v3310
      %3312 = vmatmul.f32.gmra.mxu0 %v896
      %v3313 = vpop.f32.mrf.mxu0
      %v3314 = vadd.f32 0.0, %v3313
      %3315 = vmatmul.f32.gmra.mxu0 %v898
      %v3316 = vpop.f32.mrf.mxu0
      %v3317 = vadd.f32 0.0, %v3316
      %3318 = vmatmul.f32.gmra.mxu0 %v900
      %v3319 = vpop.f32.mrf.mxu0
      %v3320 = vadd.f32 0.0, %v3319
      %3321 = vmatmul.f32.gmra.mxu0 %v902
      %v3322 = vpop.f32.mrf.mxu0
      %v3323 = vadd.f32 0.0, %v3322
      %3324 = vmatmul.f32.gmra.mxu0 %v904
      %v3325 = vpop.f32.mrf.mxu0
      %v3326 = vadd.f32 0.0, %v3325
      %3327 = vmatmul.f32.gmra.mxu0 %v906
      %v3328 = vpop.f32.mrf.mxu0
      %v3329 = vadd.f32 0.0, %v3328
      %3330 = vmatmul.f32.gmra.mxu0 %v908
      %v3331 = vpop.f32.mrf.mxu0
      %v3332 = vadd.f32 0.0, %v3331
      %3333 = vmatmul.f32.gmra.mxu0 %v1718
      %v3334 = vpop.f32.mrf.mxu0
      %v3335 = vadd.f32 0.0, %v3334
      %3336 = vmatmul.f32.gmra.mxu0 %v912
      %v3337 = vpop.f32.mrf.mxu0
      %v3338 = vadd.f32 0.0, %v3337
      %3339 = vmatmul.f32.gmra.mxu0 %v914
      %v3340 = vpop.f32.mrf.mxu0
      %v3341 = vadd.f32 0.0, %v3340
      %3342 = vmatmul.f32.gmra.mxu0 %v916
      %v3343 = vpop.f32.mrf.mxu0
      %v3344 = vadd.f32 0.0, %v3343
      %3345 = vmatmul.f32.gmra.mxu0 %v918
      %v3346 = vpop.f32.mrf.mxu0
      %v3347 = vadd.f32 0.0, %v3346
      %3348 = vmatmul.f32.gmra.mxu0 %v920
      %v3349 = vpop.f32.mrf.mxu0
      %v3350 = vadd.f32 0.0, %v3349
      %3351 = vmatmul.f32.gmra.mxu0 %v922
      %v3352 = vpop.f32.mrf.mxu0
      %v3353 = vadd.f32 0.0, %v3352
      %3354 = vmatmul.f32.gmra.mxu0 %v924
      %v3355 = vpop.f32.mrf.mxu0
      %v3356 = vadd.f32 0.0, %v3355
      %3357 = vmatmul.f32.gmra.mxu0 %v1720
      %v3358 = vpop.f32.mrf.mxu0
      %v3359 = vadd.f32 0.0, %v3358
      %3360 = vmatmul.f32.gmra.mxu0 %v2756
      %v3361 = vpop.f32.mrf.mxu0
      %v3362 = vadd.f32 0.0, %v3361
      %3363 = vmatmul.f32.gmra.mxu0 %v2758
      %v3364 = vpop.f32.mrf.mxu0
      %v3365 = vadd.f32 0.0, %v3364
      %3366 = vmatmul.f32.gmra.mxu0 %v2760
      %v3367 = vpop.f32.mrf.mxu0
      %v3368 = vadd.f32 0.0, %v3367
      %3369 = vmatmul.f32.gmra.mxu0 %v2762
      %v3370 = vpop.f32.mrf.mxu0
      %v3371 = vadd.f32 0.0, %v3370
      %3372 = vmatmul.f32.gmra.mxu0 %v2764
      %v3373 = vpop.f32.mrf.mxu0
      %v3374 = vadd.f32 0.0, %v3373
      %3375 = vmatmul.f32.gmra.mxu0 %v2766
      %v3376 = vpop.f32.mrf.mxu0
      %v3377 = vadd.f32 0.0, %v3376
      %3378 = vmatmul.f32.gmra.mxu0 %v2768
      %v3379 = vpop.f32.mrf.mxu0
      %v3380 = vadd.f32 0.0, %v3379
      %3381 = vmatmul.f32.gmra.mxu0 %v3267
      %v3382 = vpop.f32.mrf.mxu0
      %v3383 = vadd.f32 0.0, %v3382
      %3384 = vdwg.mxu0
      %v3385 = vadd.f32 %v3229, %v3290
      %v3386 = vadd.f32 %v3230, %v3293
      %v3387 = vadd.f32 %v3231, %v3296
      %v3388 = vadd.f32 %v3232, %v3299
      %v3389 = vadd.f32 %v3233, %v3302
      %v3390 = vadd.f32 %v3234, %v3305
      %v3391 = vadd.f32 %v3235, %v3308
      %v3392 = vadd.f32 %v3236, %v3311
      %v3393 = vadd.f32 %v3237, %v3314
      %v3394 = vadd.f32 %v3238, %v3317
      %v3395 = vadd.f32 %v3239, %v3320
      %v3396 = vadd.f32 %v3240, %v3323
      %v3397 = vadd.f32 %v3241, %v3326
      %v3398 = vadd.f32 %v3242, %v3329
      %v3399 = vadd.f32 %v3243, %v3332
      %v3400 = vadd.f32 %v3244, %v3335
      %v3401 = vadd.f32 %v3245, %v3338
      %v3402 = vadd.f32 %v3246, %v3341
      %v3403 = vadd.f32 %v3247, %v3344
      %v3404 = vadd.f32 %v3248, %v3347
      %v3405 = vadd.f32 %v3249, %v3350
      %v3406 = vadd.f32 %v3250, %v3353
      %v3407 = vadd.f32 %v3251, %v3356
      %v3408 = vadd.f32 %v3252, %v3359
      %v3409 = vadd.f32 %v3253, %v3362
      %v3410 = vadd.f32 %v3254, %v3365
      %v3411 = vadd.f32 %v3255, %v3368
      %v3412 = vadd.f32 %v3256, %v3371
      %v3413 = vadd.f32 %v3257, %v3374
      %v3414 = vadd.f32 %v3258, %v3377
      %v3415 = vadd.f32 %v3259, %v3380
      %v3416 = vadd.f32 %v3260, %v3383
      %v3417 = vrot.slane %v673, 2
      %v3418 = vrot.slane %v674, 2
      %v3419 = vsel %vm1223, %v3417, %v3418
      %s3420 = scalar_lea.vmem %s6, 56
      %v3421 = vld [vmem:[%s3420] sm:$0xf]
      %v3422 = vsel %vm861, %v3419, 0
      %v3425 = vsel %vm926, %v3421, 0
      %3427 = vmatpush.msra.mxu0 0.0
      %3428 = vmatpush.msra.mxu0 0.0
      %3429 = vmatpush.msra.mxu0 0.0
      %3430 = vmatpush.msra.mxu0 0.0
      %3431 = vmatpush.msra.mxu0 0.0
      %3432 = vmatpush.msra.mxu0 0.0
      %3433 = vmatpush.msra.mxu0 0.0
      %3434 = vmatpush.msra.mxu0 0.0
      %3435 = vmatpush.msra.mxu0 0.0
      %3436 = vmatpush.msra.mxu0 0.0
      %3437 = vmatpush.msra.mxu0 0.0
      %3438 = vmatpush.msra.mxu0 0.0
      %3439 = vmatpush.msra.mxu0 0.0
      %3440 = vmatpush.msra.mxu0 0.0
      %3441 = vmatpush.msra.mxu0 0.0
      %3442 = vmatpush.msra.mxu0 %v3425
      %3443 = vmatmul.f32.gmra.mxu0 %v1340
      %v3444 = vpop.f32.mrf.mxu0
      %v3445 = vadd.f32 0.0, %v3444
      %3446 = vmatmul.f32.gmra.mxu0 %v1342
      %v3447 = vpop.f32.mrf.mxu0
      %v3448 = vadd.f32 0.0, %v3447
      %3449 = vmatmul.f32.gmra.mxu0 %v1344
      %v3450 = vpop.f32.mrf.mxu0
      %v3451 = vadd.f32 0.0, %v3450
      %3452 = vmatmul.f32.gmra.mxu0 %v1346
      %v3453 = vpop.f32.mrf.mxu0
      %v3454 = vadd.f32 0.0, %v3453
      %3455 = vmatmul.f32.gmra.mxu0 %v1348
      %v3456 = vpop.f32.mrf.mxu0
      %v3457 = vadd.f32 0.0, %v3456
      %3458 = vmatmul.f32.gmra.mxu0 %v1350
      %v3459 = vpop.f32.mrf.mxu0
      %v3460 = vadd.f32 0.0, %v3459
      %3461 = vmatmul.f32.gmra.mxu0 %v1352
      %v3462 = vpop.f32.mrf.mxu0
      %v3463 = vadd.f32 0.0, %v3462
      %3464 = vmatmul.f32.gmra.mxu0 %v1886
      %v3465 = vpop.f32.mrf.mxu0
      %v3466 = vadd.f32 0.0, %v3465
      %3467 = vmatmul.f32.gmra.mxu0 %v1356
      %v3468 = vpop.f32.mrf.mxu0
      %v3469 = vadd.f32 0.0, %v3468
      %3470 = vmatmul.f32.gmra.mxu0 %v1358
      %v3471 = vpop.f32.mrf.mxu0
      %v3472 = vadd.f32 0.0, %v3471
      %3473 = vmatmul.f32.gmra.mxu0 %v1360
      %v3474 = vpop.f32.mrf.mxu0
      %v3475 = vadd.f32 0.0, %v3474
      %3476 = vmatmul.f32.gmra.mxu0 %v1362
      %v3477 = vpop.f32.mrf.mxu0
      %v3478 = vadd.f32 0.0, %v3477
      %3479 = vmatmul.f32.gmra.mxu0 %v1364
      %v3480 = vpop.f32.mrf.mxu0
      %v3481 = vadd.f32 0.0, %v3480
      %3482 = vmatmul.f32.gmra.mxu0 %v1366
      %v3483 = vpop.f32.mrf.mxu0
      %v3484 = vadd.f32 0.0, %v3483
      %3485 = vmatmul.f32.gmra.mxu0 %v1368
      %v3486 = vpop.f32.mrf.mxu0
      %v3487 = vadd.f32 0.0, %v3486
      %3488 = vmatmul.f32.gmra.mxu0 %v1888
      %v3489 = vpop.f32.mrf.mxu0
      %v3490 = vadd.f32 0.0, %v3489
      %3491 = vmatmul.f32.gmra.mxu0 %v1372
      %v3492 = vpop.f32.mrf.mxu0
      %v3493 = vadd.f32 0.0, %v3492
      %3494 = vmatmul.f32.gmra.mxu0 %v1374
      %v3495 = vpop.f32.mrf.mxu0
      %v3496 = vadd.f32 0.0, %v3495
      %3497 = vmatmul.f32.gmra.mxu0 %v1376
      %v3498 = vpop.f32.mrf.mxu0
      %v3499 = vadd.f32 0.0, %v3498
      %3500 = vmatmul.f32.gmra.mxu0 %v1378
      %v3501 = vpop.f32.mrf.mxu0
      %v3502 = vadd.f32 0.0, %v3501
      %3503 = vmatmul.f32.gmra.mxu0 %v1380
      %v3504 = vpop.f32.mrf.mxu0
      %v3505 = vadd.f32 0.0, %v3504
      %3506 = vmatmul.f32.gmra.mxu0 %v1382
      %v3507 = vpop.f32.mrf.mxu0
      %v3508 = vadd.f32 0.0, %v3507
      %3509 = vmatmul.f32.gmra.mxu0 %v1384
      %v3510 = vpop.f32.mrf.mxu0
      %v3511 = vadd.f32 0.0, %v3510
      %3512 = vmatmul.f32.gmra.mxu0 %v1890
      %v3513 = vpop.f32.mrf.mxu0
      %v3514 = vadd.f32 0.0, %v3513
      %3515 = vmatmul.f32.gmra.mxu0 %v2946
      %v3516 = vpop.f32.mrf.mxu0
      %v3517 = vadd.f32 0.0, %v3516
      %3518 = vmatmul.f32.gmra.mxu0 %v2948
      %v3519 = vpop.f32.mrf.mxu0
      %v3520 = vadd.f32 0.0, %v3519
      %3521 = vmatmul.f32.gmra.mxu0 %v2950
      %v3522 = vpop.f32.mrf.mxu0
      %v3523 = vadd.f32 0.0, %v3522
      %3524 = vmatmul.f32.gmra.mxu0 %v2952
      %v3525 = vpop.f32.mrf.mxu0
      %v3526 = vadd.f32 0.0, %v3525
      %3527 = vmatmul.f32.gmra.mxu0 %v2954
      %v3528 = vpop.f32.mrf.mxu0
      %v3529 = vadd.f32 0.0, %v3528
      %3530 = vmatmul.f32.gmra.mxu0 %v2956
      %v3531 = vpop.f32.mrf.mxu0
      %v3532 = vadd.f32 0.0, %v3531
      %3533 = vmatmul.f32.gmra.mxu0 %v2958
      %v3534 = vpop.f32.mrf.mxu0
      %v3535 = vadd.f32 0.0, %v3534
      %3536 = vmatmul.f32.gmra.mxu0 %v3422
      %v3537 = vpop.f32.mrf.mxu0
      %v3538 = vadd.f32 0.0, %v3537
      %3539 = vdwg.mxu0
      %v3540 = vadd.f32 %v3385, %v3445
      %v3541 = vadd.f32 %v3386, %v3448
      %v3542 = vadd.f32 %v3387, %v3451
      %v3543 = vadd.f32 %v3388, %v3454
      %v3544 = vadd.f32 %v3389, %v3457
      %v3545 = vadd.f32 %v3390, %v3460
      %v3546 = vadd.f32 %v3391, %v3463
      %v3547 = vadd.f32 %v3392, %v3466
      %v3548 = vadd.f32 %v3393, %v3469
      %v3549 = vadd.f32 %v3394, %v3472
      %v3550 = vadd.f32 %v3395, %v3475
      %v3551 = vadd.f32 %v3396, %v3478
      %v3552 = vadd.f32 %v3397, %v3481
      %v3553 = vadd.f32 %v3398, %v3484
      %v3554 = vadd.f32 %v3399, %v3487
      %v3555 = vadd.f32 %v3400, %v3490
      %v3556 = vadd.f32 %v3401, %v3493
      %v3557 = vadd.f32 %v3402, %v3496
      %v3558 = vadd.f32 %v3403, %v3499
      %v3559 = vadd.f32 %v3404, %v3502
      %v3560 = vadd.f32 %v3405, %v3505
      %v3561 = vadd.f32 %v3406, %v3508
      %v3562 = vadd.f32 %v3407, %v3511
      %v3563 = vadd.f32 %v3408, %v3514
      %v3564 = vadd.f32 %v3409, %v3517
      %v3565 = vadd.f32 %v3410, %v3520
      %v3566 = vadd.f32 %v3411, %v3523
      %v3567 = vadd.f32 %v3412, %v3526
      %v3568 = vadd.f32 %v3413, %v3529
      %v3569 = vadd.f32 %v3414, %v3532
      %v3570 = vadd.f32 %v3415, %v3535
      %v3571 = vadd.f32 %v3416, %v3538
      %s3572 = scalar_lea.vmem %s6, 60
      %v3573 = vld [vmem:[%s3572] sm:$0xf]
      %v3575 = vsel %vm861, %v675, 0
      %v3578 = vsel %vm926, %v3573, 0
      %3580 = vmatpush.msra.mxu0 0.0
      %3581 = vmatpush.msra.mxu0 0.0
      %3582 = vmatpush.msra.mxu0 0.0
      %3583 = vmatpush.msra.mxu0 0.0
      %3584 = vmatpush.msra.mxu0 0.0
      %3585 = vmatpush.msra.mxu0 0.0
      %3586 = vmatpush.msra.mxu0 0.0
      %3587 = vmatpush.msra.mxu0 0.0
      %3588 = vmatpush.msra.mxu0 0.0
      %3589 = vmatpush.msra.mxu0 0.0
      %3590 = vmatpush.msra.mxu0 0.0
      %3591 = vmatpush.msra.mxu0 0.0
      %3592 = vmatpush.msra.mxu0 0.0
      %3593 = vmatpush.msra.mxu0 0.0
      %3594 = vmatpush.msra.mxu0 0.0
      %3595 = vmatpush.msra.mxu0 %v3578
      %3596 = vmatmul.f32.gmra.mxu0 %v1063
      %v3597 = vpop.f32.mrf.mxu0
      %v3598 = vadd.f32 0.0, %v3597
      %3599 = vmatmul.f32.gmra.mxu0 %v1065
      %v3600 = vpop.f32.mrf.mxu0
      %v3601 = vadd.f32 0.0, %v3600
      %3602 = vmatmul.f32.gmra.mxu0 %v1067
      %v3603 = vpop.f32.mrf.mxu0
      %v3604 = vadd.f32 0.0, %v3603
      %3605 = vmatmul.f32.gmra.mxu0 %v1069
      %v3606 = vpop.f32.mrf.mxu0
      %v3607 = vadd.f32 0.0, %v3606
      %3608 = vmatmul.f32.gmra.mxu0 %v1071
      %v3609 = vpop.f32.mrf.mxu0
      %v3610 = vadd.f32 0.0, %v3609
      %3611 = vmatmul.f32.gmra.mxu0 %v1073
      %v3612 = vpop.f32.mrf.mxu0
      %v3613 = vadd.f32 0.0, %v3612
      %3614 = vmatmul.f32.gmra.mxu0 %v1540
      %v3615 = vpop.f32.mrf.mxu0
      %v3616 = vadd.f32 0.0, %v3615
      %3617 = vmatmul.f32.gmra.mxu0 %v2046
      %v3618 = vpop.f32.mrf.mxu0
      %v3619 = vadd.f32 0.0, %v3618
      %3620 = vmatmul.f32.gmra.mxu0 %v1079
      %v3621 = vpop.f32.mrf.mxu0
      %v3622 = vadd.f32 0.0, %v3621
      %3623 = vmatmul.f32.gmra.mxu0 %v1081
      %v3624 = vpop.f32.mrf.mxu0
      %v3625 = vadd.f32 0.0, %v3624
      %3626 = vmatmul.f32.gmra.mxu0 %v1083
      %v3627 = vpop.f32.mrf.mxu0
      %v3628 = vadd.f32 0.0, %v3627
      %3629 = vmatmul.f32.gmra.mxu0 %v1085
      %v3630 = vpop.f32.mrf.mxu0
      %v3631 = vadd.f32 0.0, %v3630
      %3632 = vmatmul.f32.gmra.mxu0 %v1087
      %v3633 = vpop.f32.mrf.mxu0
      %v3634 = vadd.f32 0.0, %v3633
      %3635 = vmatmul.f32.gmra.mxu0 %v1089
      %v3636 = vpop.f32.mrf.mxu0
      %v3637 = vadd.f32 0.0, %v3636
      %3638 = vmatmul.f32.gmra.mxu0 %v1543
      %v3639 = vpop.f32.mrf.mxu0
      %v3640 = vadd.f32 0.0, %v3639
      %3641 = vmatmul.f32.gmra.mxu0 %v2049
      %v3642 = vpop.f32.mrf.mxu0
      %v3643 = vadd.f32 0.0, %v3642
      %3644 = vmatmul.f32.gmra.mxu0 %v1095
      %v3645 = vpop.f32.mrf.mxu0
      %v3646 = vadd.f32 0.0, %v3645
      %3647 = vmatmul.f32.gmra.mxu0 %v1097
      %v3648 = vpop.f32.mrf.mxu0
      %v3649 = vadd.f32 0.0, %v3648
      %3650 = vmatmul.f32.gmra.mxu0 %v1099
      %v3651 = vpop.f32.mrf.mxu0
      %v3652 = vadd.f32 0.0, %v3651
      %3653 = vmatmul.f32.gmra.mxu0 %v1101
      %v3654 = vpop.f32.mrf.mxu0
      %v3655 = vadd.f32 0.0, %v3654
      %3656 = vmatmul.f32.gmra.mxu0 %v1103
      %v3657 = vpop.f32.mrf.mxu0
      %v3658 = vadd.f32 0.0, %v3657
      %3659 = vmatmul.f32.gmra.mxu0 %v1105
      %v3660 = vpop.f32.mrf.mxu0
      %v3661 = vadd.f32 0.0, %v3660
      %3662 = vmatmul.f32.gmra.mxu0 %v1546
      %v3663 = vpop.f32.mrf.mxu0
      %v3664 = vadd.f32 0.0, %v3663
      %3665 = vmatmul.f32.gmra.mxu0 %v2052
      %v3666 = vpop.f32.mrf.mxu0
      %v3667 = vadd.f32 0.0, %v3666
      %3668 = vmatmul.f32.gmra.mxu0 %v2555
      %v3669 = vpop.f32.mrf.mxu0
      %v3670 = vadd.f32 0.0, %v3669
      %3671 = vmatmul.f32.gmra.mxu0 %v2558
      %v3672 = vpop.f32.mrf.mxu0
      %v3673 = vadd.f32 0.0, %v3672
      %3674 = vmatmul.f32.gmra.mxu0 %v2561
      %v3675 = vpop.f32.mrf.mxu0
      %v3676 = vadd.f32 0.0, %v3675
      %3677 = vmatmul.f32.gmra.mxu0 %v2564
      %v3678 = vpop.f32.mrf.mxu0
      %v3679 = vadd.f32 0.0, %v3678
      %3680 = vmatmul.f32.gmra.mxu0 %v2567
      %v3681 = vpop.f32.mrf.mxu0
      %v3682 = vadd.f32 0.0, %v3681
      %3683 = vmatmul.f32.gmra.mxu0 %v2570
      %v3684 = vpop.f32.mrf.mxu0
      %v3685 = vadd.f32 0.0, %v3684
      %3686 = vmatmul.f32.gmra.mxu0 %v3111
      %v3687 = vpop.f32.mrf.mxu0
      %v3688 = vadd.f32 0.0, %v3687
      %3689 = vmatmul.f32.gmra.mxu0 %v3575
      %v3690 = vpop.f32.mrf.mxu0
      %v3691 = vadd.f32 0.0, %v3690
      %3692 = vdwg.mxu0
      %v3693 = vadd.f32 %v3540, %v3598
      %v3694 = vadd.f32 %v3541, %v3601
      %v3695 = vadd.f32 %v3542, %v3604
      %v3696 = vadd.f32 %v3543, %v3607
      %v3697 = vadd.f32 %v3544, %v3610
      %v3698 = vadd.f32 %v3545, %v3613
      %v3699 = vadd.f32 %v3546, %v3616
      %v3700 = vadd.f32 %v3547, %v3619
      %v3701 = vadd.f32 %v3548, %v3622
      %v3702 = vadd.f32 %v3549, %v3625
      %v3703 = vadd.f32 %v3550, %v3628
      %v3704 = vadd.f32 %v3551, %v3631
      %v3705 = vadd.f32 %v3552, %v3634
      %v3706 = vadd.f32 %v3553, %v3637
      %v3707 = vadd.f32 %v3554, %v3640
      %v3708 = vadd.f32 %v3555, %v3643
      %v3709 = vadd.f32 %v3556, %v3646
      %v3710 = vadd.f32 %v3557, %v3649
      %v3711 = vadd.f32 %v3558, %v3652
      %v3712 = vadd.f32 %v3559, %v3655
      %v3713 = vadd.f32 %v3560, %v3658
      %v3714 = vadd.f32 %v3561, %v3661
      %v3715 = vadd.f32 %v3562, %v3664
      %v3716 = vadd.f32 %v3563, %v3667
      %v3717 = vadd.f32 %v3564, %v3670
      %v3718 = vadd.f32 %v3565, %v3673
      %v3719 = vadd.f32 %v3566, %v3676
      %v3720 = vadd.f32 %v3567, %v3679
      %v3721 = vadd.f32 %v3568, %v3682
      %v3722 = vadd.f32 %v3569, %v3685
      %v3723 = vadd.f32 %v3570, %v3688
      %v3724 = vadd.f32 %v3571, %v3691
      %v3726 = vrot.slane %v675, 1
      %v3727 = vrot.slane %v676, 1
      %v3728 = vsel %vm762, %v3726, %v3727
      %s3729 = scalar_lea.vmem %s6, 64
      %v3730 = vld [vmem:[%s3729] sm:$0xf]
      %v3731 = vsel %vm861, %v3728, 0
      %v3734 = vsel %vm926, %v3730, 0
      %3736 = vmatpush.msra.mxu0 0.0
      %3737 = vmatpush.msra.mxu0 0.0
      %3738 = vmatpush.msra.mxu0 0.0
      %3739 = vmatpush.msra.mxu0 0.0
      %3740 = vmatpush.msra.mxu0 0.0
      %3741 = vmatpush.msra.mxu0 0.0
      %3742 = vmatpush.msra.mxu0 0.0
      %3743 = vmatpush.msra.mxu0 0.0
      %3744 = vmatpush.msra.mxu0 0.0
      %3745 = vmatpush.msra.mxu0 0.0
      %3746 = vmatpush.msra.mxu0 0.0
      %3747 = vmatpush.msra.mxu0 0.0
      %3748 = vmatpush.msra.mxu0 0.0
      %3749 = vmatpush.msra.mxu0 0.0
      %3750 = vmatpush.msra.mxu0 0.0
      %3751 = vmatpush.msra.mxu0 %v3734
      %3752 = vmatmul.f32.gmra.mxu0 %v882
      %v3753 = vpop.f32.mrf.mxu0
      %v3754 = vadd.f32 0.0, %v3753
      %3755 = vmatmul.f32.gmra.mxu0 %v884
      %v3756 = vpop.f32.mrf.mxu0
      %v3757 = vadd.f32 0.0, %v3756
      %3758 = vmatmul.f32.gmra.mxu0 %v886
      %v3759 = vpop.f32.mrf.mxu0
      %v3760 = vadd.f32 0.0, %v3759
      %3761 = vmatmul.f32.gmra.mxu0 %v888
      %v3762 = vpop.f32.mrf.mxu0
      %v3763 = vadd.f32 0.0, %v3762
      %3764 = vmatmul.f32.gmra.mxu0 %v890
      %v3765 = vpop.f32.mrf.mxu0
      %v3766 = vadd.f32 0.0, %v3765
      %3767 = vmatmul.f32.gmra.mxu0 %v892
      %v3768 = vpop.f32.mrf.mxu0
      %v3769 = vadd.f32 0.0, %v3768
      %3770 = vmatmul.f32.gmra.mxu0 %v1716
      %v3771 = vpop.f32.mrf.mxu0
      %v3772 = vadd.f32 0.0, %v3771
      %3773 = vmatmul.f32.gmra.mxu0 %v2222
      %v3774 = vpop.f32.mrf.mxu0
      %v3775 = vadd.f32 0.0, %v3774
      %3776 = vmatmul.f32.gmra.mxu0 %v898
      %v3777 = vpop.f32.mrf.mxu0
      %v3778 = vadd.f32 0.0, %v3777
      %3779 = vmatmul.f32.gmra.mxu0 %v900
      %v3780 = vpop.f32.mrf.mxu0
      %v3781 = vadd.f32 0.0, %v3780
      %3782 = vmatmul.f32.gmra.mxu0 %v902
      %v3783 = vpop.f32.mrf.mxu0
      %v3784 = vadd.f32 0.0, %v3783
      %3785 = vmatmul.f32.gmra.mxu0 %v904
      %v3786 = vpop.f32.mrf.mxu0
      %v3787 = vadd.f32 0.0, %v3786
      %3788 = vmatmul.f32.gmra.mxu0 %v906
      %v3789 = vpop.f32.mrf.mxu0
      %v3790 = vadd.f32 0.0, %v3789
      %3791 = vmatmul.f32.gmra.mxu0 %v908
      %v3792 = vpop.f32.mrf.mxu0
      %v3793 = vadd.f32 0.0, %v3792
      %3794 = vmatmul.f32.gmra.mxu0 %v1718
      %v3795 = vpop.f32.mrf.mxu0
      %v3796 = vadd.f32 0.0, %v3795
      %3797 = vmatmul.f32.gmra.mxu0 %v2224
      %v3798 = vpop.f32.mrf.mxu0
      %v3799 = vadd.f32 0.0, %v3798
      %3800 = vmatmul.f32.gmra.mxu0 %v914
      %v3801 = vpop.f32.mrf.mxu0
      %v3802 = vadd.f32 0.0, %v3801
      %3803 = vmatmul.f32.gmra.mxu0 %v916
      %v3804 = vpop.f32.mrf.mxu0
      %v3805 = vadd.f32 0.0, %v3804
      %3806 = vmatmul.f32.gmra.mxu0 %v918
      %v3807 = vpop.f32.mrf.mxu0
      %v3808 = vadd.f32 0.0, %v3807
      %3809 = vmatmul.f32.gmra.mxu0 %v920
      %v3810 = vpop.f32.mrf.mxu0
      %v3811 = vadd.f32 0.0, %v3810
      %3812 = vmatmul.f32.gmra.mxu0 %v922
      %v3813 = vpop.f32.mrf.mxu0
      %v3814 = vadd.f32 0.0, %v3813
      %3815 = vmatmul.f32.gmra.mxu0 %v924
      %v3816 = vpop.f32.mrf.mxu0
      %v3817 = vadd.f32 0.0, %v3816
      %3818 = vmatmul.f32.gmra.mxu0 %v1720
      %v3819 = vpop.f32.mrf.mxu0
      %v3820 = vadd.f32 0.0, %v3819
      %3821 = vmatmul.f32.gmra.mxu0 %v2226
      %v3822 = vpop.f32.mrf.mxu0
      %v3823 = vadd.f32 0.0, %v3822
      %3824 = vmatmul.f32.gmra.mxu0 %v2758
      %v3825 = vpop.f32.mrf.mxu0
      %v3826 = vadd.f32 0.0, %v3825
      %3827 = vmatmul.f32.gmra.mxu0 %v2760
      %v3828 = vpop.f32.mrf.mxu0
      %v3829 = vadd.f32 0.0, %v3828
      %3830 = vmatmul.f32.gmra.mxu0 %v2762
      %v3831 = vpop.f32.mrf.mxu0
      %v3832 = vadd.f32 0.0, %v3831
      %3833 = vmatmul.f32.gmra.mxu0 %v2764
      %v3834 = vpop.f32.mrf.mxu0
      %v3835 = vadd.f32 0.0, %v3834
      %3836 = vmatmul.f32.gmra.mxu0 %v2766
      %v3837 = vpop.f32.mrf.mxu0
      %v3838 = vadd.f32 0.0, %v3837
      %3839 = vmatmul.f32.gmra.mxu0 %v2768
      %v3840 = vpop.f32.mrf.mxu0
      %v3841 = vadd.f32 0.0, %v3840
      %3842 = vmatmul.f32.gmra.mxu0 %v3267
      %v3843 = vpop.f32.mrf.mxu0
      %v3844 = vadd.f32 0.0, %v3843
      %3845 = vmatmul.f32.gmra.mxu0 %v3731
      %v3846 = vpop.f32.mrf.mxu0
      %v3847 = vadd.f32 0.0, %v3846
      %3848 = vdwg.mxu0
      %v3849 = vadd.f32 %v3693, %v3754
      %v3850 = vadd.f32 %v3694, %v3757
      %v3851 = vadd.f32 %v3695, %v3760
      %v3852 = vadd.f32 %v3696, %v3763
      %v3853 = vadd.f32 %v3697, %v3766
      %v3854 = vadd.f32 %v3698, %v3769
      %v3855 = vadd.f32 %v3699, %v3772
      %v3856 = vadd.f32 %v3700, %v3775
      %v3857 = vadd.f32 %v3701, %v3778
      %v3858 = vadd.f32 %v3702, %v3781
      %v3859 = vadd.f32 %v3703, %v3784
      %v3860 = vadd.f32 %v3704, %v3787
      %v3861 = vadd.f32 %v3705, %v3790
      %v3862 = vadd.f32 %v3706, %v3793
      %v3863 = vadd.f32 %v3707, %v3796
      %v3864 = vadd.f32 %v3708, %v3799
      %v3865 = vadd.f32 %v3709, %v3802
      %v3866 = vadd.f32 %v3710, %v3805
      %v3867 = vadd.f32 %v3711, %v3808
      %v3868 = vadd.f32 %v3712, %v3811
      %v3869 = vadd.f32 %v3713, %v3814
      %v3870 = vadd.f32 %v3714, %v3817
      %v3871 = vadd.f32 %v3715, %v3820
      %v3872 = vadd.f32 %v3716, %v3823
      %v3873 = vadd.f32 %v3717, %v3826
      %v3874 = vadd.f32 %v3718, %v3829
      %v3875 = vadd.f32 %v3719, %v3832
      %v3876 = vadd.f32 %v3720, %v3835
      %v3877 = vadd.f32 %v3721, %v3838
      %v3878 = vadd.f32 %v3722, %v3841
      %v3879 = vadd.f32 %v3723, %v3844
      %v3880 = vadd.f32 %v3724, %v3847
      %v3881 = vrot.slane %v675, 2
      %v3882 = vrot.slane %v676, 2
      %v3883 = vsel %vm1223, %v3881, %v3882
      %s3884 = scalar_lea.vmem %s6, 68
      %v3885 = vld [vmem:[%s3884] sm:$0xf]
      %v3886 = vsel %vm861, %v3883, 0
      %v3889 = vsel %vm926, %v3885, 0
      %3891 = vmatpush.msra.mxu0 0.0
      %3892 = vmatpush.msra.mxu0 0.0
      %3893 = vmatpush.msra.mxu0 0.0
      %3894 = vmatpush.msra.mxu0 0.0
      %3895 = vmatpush.msra.mxu0 0.0
      %3896 = vmatpush.msra.mxu0 0.0
      %3897 = vmatpush.msra.mxu0 0.0
      %3898 = vmatpush.msra.mxu0 0.0
      %3899 = vmatpush.msra.mxu0 0.0
      %3900 = vmatpush.msra.mxu0 0.0
      %3901 = vmatpush.msra.mxu0 0.0
      %3902 = vmatpush.msra.mxu0 0.0
      %3903 = vmatpush.msra.mxu0 0.0
      %3904 = vmatpush.msra.mxu0 0.0
      %3905 = vmatpush.msra.mxu0 0.0
      %3906 = vmatpush.msra.mxu0 %v3889
      %3907 = vmatmul.f32.gmra.mxu0 %v1342
      %v3908 = vpop.f32.mrf.mxu0
      %v3909 = vadd.f32 0.0, %v3908
      %3910 = vmatmul.f32.gmra.mxu0 %v1344
      %v3911 = vpop.f32.mrf.mxu0
      %v3912 = vadd.f32 0.0, %v3911
      %3913 = vmatmul.f32.gmra.mxu0 %v1346
      %v3914 = vpop.f32.mrf.mxu0
      %v3915 = vadd.f32 0.0, %v3914
      %3916 = vmatmul.f32.gmra.mxu0 %v1348
      %v3917 = vpop.f32.mrf.mxu0
      %v3918 = vadd.f32 0.0, %v3917
      %3919 = vmatmul.f32.gmra.mxu0 %v1350
      %v3920 = vpop.f32.mrf.mxu0
      %v3921 = vadd.f32 0.0, %v3920
      %3922 = vmatmul.f32.gmra.mxu0 %v1352
      %v3923 = vpop.f32.mrf.mxu0
      %v3924 = vadd.f32 0.0, %v3923
      %3925 = vmatmul.f32.gmra.mxu0 %v1886
      %v3926 = vpop.f32.mrf.mxu0
      %v3927 = vadd.f32 0.0, %v3926
      %3928 = vmatmul.f32.gmra.mxu0 %v2392
      %v3929 = vpop.f32.mrf.mxu0
      %v3930 = vadd.f32 0.0, %v3929
      %3931 = vmatmul.f32.gmra.mxu0 %v1358
      %v3932 = vpop.f32.mrf.mxu0
      %v3933 = vadd.f32 0.0, %v3932
      %3934 = vmatmul.f32.gmra.mxu0 %v1360
      %v3935 = vpop.f32.mrf.mxu0
      %v3936 = vadd.f32 0.0, %v3935
      %3937 = vmatmul.f32.gmra.mxu0 %v1362
      %v3938 = vpop.f32.mrf.mxu0
      %v3939 = vadd.f32 0.0, %v3938
      %3940 = vmatmul.f32.gmra.mxu0 %v1364
      %v3941 = vpop.f32.mrf.mxu0
      %v3942 = vadd.f32 0.0, %v3941
      %3943 = vmatmul.f32.gmra.mxu0 %v1366
      %v3944 = vpop.f32.mrf.mxu0
      %v3945 = vadd.f32 0.0, %v3944
      %3946 = vmatmul.f32.gmra.mxu0 %v1368
      %v3947 = vpop.f32.mrf.mxu0
      %v3948 = vadd.f32 0.0, %v3947
      %3949 = vmatmul.f32.gmra.mxu0 %v1888
      %v3950 = vpop.f32.mrf.mxu0
      %v3951 = vadd.f32 0.0, %v3950
      %3952 = vmatmul.f32.gmra.mxu0 %v2394
      %v3953 = vpop.f32.mrf.mxu0
      %v3954 = vadd.f32 0.0, %v3953
      %3955 = vmatmul.f32.gmra.mxu0 %v1374
      %v3956 = vpop.f32.mrf.mxu0
      %v3957 = vadd.f32 0.0, %v3956
      %3958 = vmatmul.f32.gmra.mxu0 %v1376
      %v3959 = vpop.f32.mrf.mxu0
      %v3960 = vadd.f32 0.0, %v3959
      %3961 = vmatmul.f32.gmra.mxu0 %v1378
      %v3962 = vpop.f32.mrf.mxu0
      %v3963 = vadd.f32 0.0, %v3962
      %3964 = vmatmul.f32.gmra.mxu0 %v1380
      %v3965 = vpop.f32.mrf.mxu0
      %v3966 = vadd.f32 0.0, %v3965
      %3967 = vmatmul.f32.gmra.mxu0 %v1382
      %v3968 = vpop.f32.mrf.mxu0
      %v3969 = vadd.f32 0.0, %v3968
      %3970 = vmatmul.f32.gmra.mxu0 %v1384
      %v3971 = vpop.f32.mrf.mxu0
      %v3972 = vadd.f32 0.0, %v3971
      %3973 = vmatmul.f32.gmra.mxu0 %v1890
      %v3974 = vpop.f32.mrf.mxu0
      %v3975 = vadd.f32 0.0, %v3974
      %3976 = vmatmul.f32.gmra.mxu0 %v2396
      %v3977 = vpop.f32.mrf.mxu0
      %v3978 = vadd.f32 0.0, %v3977
      %3979 = vmatmul.f32.gmra.mxu0 %v2948
      %v3980 = vpop.f32.mrf.mxu0
      %v3981 = vadd.f32 0.0, %v3980
      %3982 = vmatmul.f32.gmra.mxu0 %v2950
      %v3983 = vpop.f32.mrf.mxu0
      %v3984 = vadd.f32 0.0, %v3983
      %3985 = vmatmul.f32.gmra.mxu0 %v2952
      %v3986 = vpop.f32.mrf.mxu0
      %v3987 = vadd.f32 0.0, %v3986
      %3988 = vmatmul.f32.gmra.mxu0 %v2954
      %v3989 = vpop.f32.mrf.mxu0
      %v3990 = vadd.f32 0.0, %v3989
      %3991 = vmatmul.f32.gmra.mxu0 %v2956
      %v3992 = vpop.f32.mrf.mxu0
      %v3993 = vadd.f32 0.0, %v3992
      %3994 = vmatmul.f32.gmra.mxu0 %v2958
      %v3995 = vpop.f32.mrf.mxu0
      %v3996 = vadd.f32 0.0, %v3995
      %3997 = vmatmul.f32.gmra.mxu0 %v3422
      %v3998 = vpop.f32.mrf.mxu0
      %v3999 = vadd.f32 0.0, %v3998
      %4000 = vmatmul.f32.gmra.mxu0 %v3886
      %v4001 = vpop.f32.mrf.mxu0
      %v4002 = vadd.f32 0.0, %v4001
      %4003 = vdwg.mxu0
      %v4004 = vadd.f32 %v3849, %v3909
      %v4005 = vadd.f32 %v3850, %v3912
      %v4006 = vadd.f32 %v3851, %v3915
      %v4007 = vadd.f32 %v3852, %v3918
      %v4008 = vadd.f32 %v3853, %v3921
      %v4009 = vadd.f32 %v3854, %v3924
      %v4010 = vadd.f32 %v3855, %v3927
      %v4011 = vadd.f32 %v3856, %v3930
      %v4012 = vadd.f32 %v3857, %v3933
      %v4013 = vadd.f32 %v3858, %v3936
      %v4014 = vadd.f32 %v3859, %v3939
      %v4015 = vadd.f32 %v3860, %v3942
      %v4016 = vadd.f32 %v3861, %v3945
      %v4017 = vadd.f32 %v3862, %v3948
      %v4018 = vadd.f32 %v3863, %v3951
      %v4019 = vadd.f32 %v3864, %v3954
      %v4020 = vadd.f32 %v3865, %v3957
      %v4021 = vadd.f32 %v3866, %v3960
      %v4022 = vadd.f32 %v3867, %v3963
      %v4023 = vadd.f32 %v3868, %v3966
      %v4024 = vadd.f32 %v3869, %v3969
      %v4025 = vadd.f32 %v3870, %v3972
      %v4026 = vadd.f32 %v3871, %v3975
      %v4027 = vadd.f32 %v3872, %v3978
      %v4028 = vadd.f32 %v3873, %v3981
      %v4029 = vadd.f32 %v3874, %v3984
      %v4030 = vadd.f32 %v3875, %v3987
      %v4031 = vadd.f32 %v3876, %v3990
      %v4032 = vadd.f32 %v3877, %v3993
      %v4033 = vadd.f32 %v3878, %v3996
      %v4034 = vadd.f32 %v3879, %v3999
      %v4035 = vadd.f32 %v3880, %v4002
      %s4036 = scalar_lea.vmem %s6, 72
      %v4037 = vld [vmem:[%s4036] sm:$0xf]
      %v4039 = vsel %vm861, %v677, 0
      %v4042 = vsel %vm861, %v679, 0
      %v4045 = vsel %vm861, %v681, 0
      %v4048 = vsel %vm861, %v683, 0
      %v4051 = vsel %vm861, %v685, 0
      %v4054 = vsel %vm861, %v687, 0
      %v4057 = vsel %vm861, %v689, 0
      %v4060 = vsel %vm861, %v691, 0
      %v4063 = vsel %vm926, %v4037, 0
      %4065 = vmatpush.msra.mxu0 0.0
      %4066 = vmatpush.msra.mxu0 0.0
      %4067 = vmatpush.msra.mxu0 0.0
      %4068 = vmatpush.msra.mxu0 0.0
      %4069 = vmatpush.msra.mxu0 0.0
      %4070 = vmatpush.msra.mxu0 0.0
      %4071 = vmatpush.msra.mxu0 0.0
      %4072 = vmatpush.msra.mxu0 0.0
      %4073 = vmatpush.msra.mxu0 0.0
      %4074 = vmatpush.msra.mxu0 0.0
      %4075 = vmatpush.msra.mxu0 0.0
      %4076 = vmatpush.msra.mxu0 0.0
      %4077 = vmatpush.msra.mxu0 0.0
      %4078 = vmatpush.msra.mxu0 0.0
      %4079 = vmatpush.msra.mxu0 0.0
      %4080 = vmatpush.msra.mxu0 %v4063
      %4081 = vmatmul.f32.gmra.mxu0 %v1075
      %v4082 = vpop.f32.mrf.mxu0
      %v4083 = vadd.f32 0.0, %v4082
      %4084 = vmatmul.f32.gmra.mxu0 %v1077
      %v4085 = vpop.f32.mrf.mxu0
      %v4086 = vadd.f32 0.0, %v4085
      %4087 = vmatmul.f32.gmra.mxu0 %v1079
      %v4088 = vpop.f32.mrf.mxu0
      %v4089 = vadd.f32 0.0, %v4088
      %4090 = vmatmul.f32.gmra.mxu0 %v1081
      %v4091 = vpop.f32.mrf.mxu0
      %v4092 = vadd.f32 0.0, %v4091
      %4093 = vmatmul.f32.gmra.mxu0 %v1083
      %v4094 = vpop.f32.mrf.mxu0
      %v4095 = vadd.f32 0.0, %v4094
      %4096 = vmatmul.f32.gmra.mxu0 %v1085
      %v4097 = vpop.f32.mrf.mxu0
      %v4098 = vadd.f32 0.0, %v4097
      %4099 = vmatmul.f32.gmra.mxu0 %v1087
      %v4100 = vpop.f32.mrf.mxu0
      %v4101 = vadd.f32 0.0, %v4100
      %4102 = vmatmul.f32.gmra.mxu0 %v1089
      %v4103 = vpop.f32.mrf.mxu0
      %v4104 = vadd.f32 0.0, %v4103
      %4105 = vmatmul.f32.gmra.mxu0 %v1091
      %v4106 = vpop.f32.mrf.mxu0
      %v4107 = vadd.f32 0.0, %v4106
      %4108 = vmatmul.f32.gmra.mxu0 %v1093
      %v4109 = vpop.f32.mrf.mxu0
      %v4110 = vadd.f32 0.0, %v4109
      %4111 = vmatmul.f32.gmra.mxu0 %v1095
      %v4112 = vpop.f32.mrf.mxu0
      %v4113 = vadd.f32 0.0, %v4112
      %4114 = vmatmul.f32.gmra.mxu0 %v1097
      %v4115 = vpop.f32.mrf.mxu0
      %v4116 = vadd.f32 0.0, %v4115
      %4117 = vmatmul.f32.gmra.mxu0 %v1099
      %v4118 = vpop.f32.mrf.mxu0
      %v4119 = vadd.f32 0.0, %v4118
      %4120 = vmatmul.f32.gmra.mxu0 %v1101
      %v4121 = vpop.f32.mrf.mxu0
      %v4122 = vadd.f32 0.0, %v4121
      %4123 = vmatmul.f32.gmra.mxu0 %v1103
      %v4124 = vpop.f32.mrf.mxu0
      %v4125 = vadd.f32 0.0, %v4124
      %4126 = vmatmul.f32.gmra.mxu0 %v1105
      %v4127 = vpop.f32.mrf.mxu0
      %v4128 = vadd.f32 0.0, %v4127
      %4129 = vmatmul.f32.gmra.mxu0 %v2549
      %v4130 = vpop.f32.mrf.mxu0
      %v4131 = vadd.f32 0.0, %v4130
      %4132 = vmatmul.f32.gmra.mxu0 %v2552
      %v4133 = vpop.f32.mrf.mxu0
      %v4134 = vadd.f32 0.0, %v4133
      %4135 = vmatmul.f32.gmra.mxu0 %v2555
      %v4136 = vpop.f32.mrf.mxu0
      %v4137 = vadd.f32 0.0, %v4136
      %4138 = vmatmul.f32.gmra.mxu0 %v2558
      %v4139 = vpop.f32.mrf.mxu0
      %v4140 = vadd.f32 0.0, %v4139
      %4141 = vmatmul.f32.gmra.mxu0 %v2561
      %v4142 = vpop.f32.mrf.mxu0
      %v4143 = vadd.f32 0.0, %v4142
      %4144 = vmatmul.f32.gmra.mxu0 %v2564
      %v4145 = vpop.f32.mrf.mxu0
      %v4146 = vadd.f32 0.0, %v4145
      %4147 = vmatmul.f32.gmra.mxu0 %v2567
      %v4148 = vpop.f32.mrf.mxu0
      %v4149 = vadd.f32 0.0, %v4148
      %4150 = vmatmul.f32.gmra.mxu0 %v2570
      %v4151 = vpop.f32.mrf.mxu0
      %v4152 = vadd.f32 0.0, %v4151
      %4153 = vmatmul.f32.gmra.mxu0 %v4039
      %v4154 = vpop.f32.mrf.mxu0
      %v4155 = vadd.f32 0.0, %v4154
      %4156 = vmatmul.f32.gmra.mxu0 %v4042
      %v4157 = vpop.f32.mrf.mxu0
      %v4158 = vadd.f32 0.0, %v4157
      %4159 = vmatmul.f32.gmra.mxu0 %v4045
      %v4160 = vpop.f32.mrf.mxu0
      %v4161 = vadd.f32 0.0, %v4160
      %4162 = vmatmul.f32.gmra.mxu0 %v4048
      %v4163 = vpop.f32.mrf.mxu0
      %v4164 = vadd.f32 0.0, %v4163
      %4165 = vmatmul.f32.gmra.mxu0 %v4051
      %v4166 = vpop.f32.mrf.mxu0
      %v4167 = vadd.f32 0.0, %v4166
      %4168 = vmatmul.f32.gmra.mxu0 %v4054
      %v4169 = vpop.f32.mrf.mxu0
      %v4170 = vadd.f32 0.0, %v4169
      %4171 = vmatmul.f32.gmra.mxu0 %v4057
      %v4172 = vpop.f32.mrf.mxu0
      %v4173 = vadd.f32 0.0, %v4172
      %4174 = vmatmul.f32.gmra.mxu0 %v4060
      %v4175 = vpop.f32.mrf.mxu0
      %v4176 = vadd.f32 0.0, %v4175
      %4177 = vdwg.mxu0
      %v4178 = vadd.f32 %v4004, %v4083
      %v4179 = vadd.f32 %v4005, %v4086
      %v4180 = vadd.f32 %v4006, %v4089
      %v4181 = vadd.f32 %v4007, %v4092
      %v4182 = vadd.f32 %v4008, %v4095
      %v4183 = vadd.f32 %v4009, %v4098
      %v4184 = vadd.f32 %v4010, %v4101
      %v4185 = vadd.f32 %v4011, %v4104
      %v4186 = vadd.f32 %v4012, %v4107
      %v4187 = vadd.f32 %v4013, %v4110
      %v4188 = vadd.f32 %v4014, %v4113
      %v4189 = vadd.f32 %v4015, %v4116
      %v4190 = vadd.f32 %v4016, %v4119
      %v4191 = vadd.f32 %v4017, %v4122
      %v4192 = vadd.f32 %v4018, %v4125
      %v4193 = vadd.f32 %v4019, %v4128
      %v4194 = vadd.f32 %v4020, %v4131
      %v4195 = vadd.f32 %v4021, %v4134
      %v4196 = vadd.f32 %v4022, %v4137
      %v4197 = vadd.f32 %v4023, %v4140
      %v4198 = vadd.f32 %v4024, %v4143
      %v4199 = vadd.f32 %v4025, %v4146
      %v4200 = vadd.f32 %v4026, %v4149
      %v4201 = vadd.f32 %v4027, %v4152
      %v4202 = vadd.f32 %v4028, %v4155
      %v4203 = vadd.f32 %v4029, %v4158
      %v4204 = vadd.f32 %v4030, %v4161
      %v4205 = vadd.f32 %v4031, %v4164
      %v4206 = vadd.f32 %v4032, %v4167
      %v4207 = vadd.f32 %v4033, %v4170
      %v4208 = vadd.f32 %v4034, %v4173
      %v4209 = vadd.f32 %v4035, %v4176
      %v4218 = vrot.slane %v677, 1
      %v4219 = vrot.slane %v678, 1
      %v4220 = vsel %vm762, %v4218, %v4219
      %v4221 = vrot.slane %v679, 1
      %v4222 = vrot.slane %v680, 1
      %v4223 = vsel %vm762, %v4221, %v4222
      %v4224 = vrot.slane %v681, 1
      %v4225 = vrot.slane %v682, 1
      %v4226 = vsel %vm762, %v4224, %v4225
      %v4227 = vrot.slane %v683, 1
      %v4228 = vrot.slane %v684, 1
      %v4229 = vsel %vm762, %v4227, %v4228
      %v4230 = vrot.slane %v685, 1
      %v4231 = vrot.slane %v686, 1
      %v4232 = vsel %vm762, %v4230, %v4231
      %v4233 = vrot.slane %v687, 1
      %v4234 = vrot.slane %v688, 1
      %v4235 = vsel %vm762, %v4233, %v4234
      %v4236 = vrot.slane %v689, 1
      %v4237 = vrot.slane %v690, 1
      %v4238 = vsel %vm762, %v4236, %v4237
      %v4239 = vrot.slane %v691, 1
      %v4240 = vrot.slane %v692, 1
      %v4241 = vsel %vm762, %v4239, %v4240
      %s4242 = scalar_lea.vmem %s6, 76
      %v4243 = vld [vmem:[%s4242] sm:$0xf]
      %v4244 = vsel %vm861, %v4220, 0
      %v4246 = vsel %vm861, %v4223, 0
      %v4248 = vsel %vm861, %v4226, 0
      %v4250 = vsel %vm861, %v4229, 0
      %v4252 = vsel %vm861, %v4232, 0
      %v4254 = vsel %vm861, %v4235, 0
      %v4256 = vsel %vm861, %v4238, 0
      %v4258 = vsel %vm861, %v4241, 0
      %v4261 = vsel %vm926, %v4243, 0
      %4263 = vmatpush.msra.mxu0 0.0
      %4264 = vmatpush.msra.mxu0 0.0
      %4265 = vmatpush.msra.mxu0 0.0
      %4266 = vmatpush.msra.mxu0 0.0
      %4267 = vmatpush.msra.mxu0 0.0
      %4268 = vmatpush.msra.mxu0 0.0
      %4269 = vmatpush.msra.mxu0 0.0
      %4270 = vmatpush.msra.mxu0 0.0
      %4271 = vmatpush.msra.mxu0 0.0
      %4272 = vmatpush.msra.mxu0 0.0
      %4273 = vmatpush.msra.mxu0 0.0
      %4274 = vmatpush.msra.mxu0 0.0
      %4275 = vmatpush.msra.mxu0 0.0
      %4276 = vmatpush.msra.mxu0 0.0
      %4277 = vmatpush.msra.mxu0 0.0
      %4278 = vmatpush.msra.mxu0 %v4261
      %4279 = vmatmul.f32.gmra.mxu0 %v894
      %v4280 = vpop.f32.mrf.mxu0
      %v4281 = vadd.f32 0.0, %v4280
      %4282 = vmatmul.f32.gmra.mxu0 %v896
      %v4283 = vpop.f32.mrf.mxu0
      %v4284 = vadd.f32 0.0, %v4283
      %4285 = vmatmul.f32.gmra.mxu0 %v898
      %v4286 = vpop.f32.mrf.mxu0
      %v4287 = vadd.f32 0.0, %v4286
      %4288 = vmatmul.f32.gmra.mxu0 %v900
      %v4289 = vpop.f32.mrf.mxu0
      %v4290 = vadd.f32 0.0, %v4289
      %4291 = vmatmul.f32.gmra.mxu0 %v902
      %v4292 = vpop.f32.mrf.mxu0
      %v4293 = vadd.f32 0.0, %v4292
      %4294 = vmatmul.f32.gmra.mxu0 %v904
      %v4295 = vpop.f32.mrf.mxu0
      %v4296 = vadd.f32 0.0, %v4295
      %4297 = vmatmul.f32.gmra.mxu0 %v906
      %v4298 = vpop.f32.mrf.mxu0
      %v4299 = vadd.f32 0.0, %v4298
      %4300 = vmatmul.f32.gmra.mxu0 %v908
      %v4301 = vpop.f32.mrf.mxu0
      %v4302 = vadd.f32 0.0, %v4301
      %4303 = vmatmul.f32.gmra.mxu0 %v910
      %v4304 = vpop.f32.mrf.mxu0
      %v4305 = vadd.f32 0.0, %v4304
      %4306 = vmatmul.f32.gmra.mxu0 %v912
      %v4307 = vpop.f32.mrf.mxu0
      %v4308 = vadd.f32 0.0, %v4307
      %4309 = vmatmul.f32.gmra.mxu0 %v914
      %v4310 = vpop.f32.mrf.mxu0
      %v4311 = vadd.f32 0.0, %v4310
      %4312 = vmatmul.f32.gmra.mxu0 %v916
      %v4313 = vpop.f32.mrf.mxu0
      %v4314 = vadd.f32 0.0, %v4313
      %4315 = vmatmul.f32.gmra.mxu0 %v918
      %v4316 = vpop.f32.mrf.mxu0
      %v4317 = vadd.f32 0.0, %v4316
      %4318 = vmatmul.f32.gmra.mxu0 %v920
      %v4319 = vpop.f32.mrf.mxu0
      %v4320 = vadd.f32 0.0, %v4319
      %4321 = vmatmul.f32.gmra.mxu0 %v922
      %v4322 = vpop.f32.mrf.mxu0
      %v4323 = vadd.f32 0.0, %v4322
      %4324 = vmatmul.f32.gmra.mxu0 %v924
      %v4325 = vpop.f32.mrf.mxu0
      %v4326 = vadd.f32 0.0, %v4325
      %4327 = vmatmul.f32.gmra.mxu0 %v2754
      %v4328 = vpop.f32.mrf.mxu0
      %v4329 = vadd.f32 0.0, %v4328
      %4330 = vmatmul.f32.gmra.mxu0 %v2756
      %v4331 = vpop.f32.mrf.mxu0
      %v4332 = vadd.f32 0.0, %v4331
      %4333 = vmatmul.f32.gmra.mxu0 %v2758
      %v4334 = vpop.f32.mrf.mxu0
      %v4335 = vadd.f32 0.0, %v4334
      %4336 = vmatmul.f32.gmra.mxu0 %v2760
      %v4337 = vpop.f32.mrf.mxu0
      %v4338 = vadd.f32 0.0, %v4337
      %4339 = vmatmul.f32.gmra.mxu0 %v2762
      %v4340 = vpop.f32.mrf.mxu0
      %v4341 = vadd.f32 0.0, %v4340
      %4342 = vmatmul.f32.gmra.mxu0 %v2764
      %v4343 = vpop.f32.mrf.mxu0
      %v4344 = vadd.f32 0.0, %v4343
      %4345 = vmatmul.f32.gmra.mxu0 %v2766
      %v4346 = vpop.f32.mrf.mxu0
      %v4347 = vadd.f32 0.0, %v4346
      %4348 = vmatmul.f32.gmra.mxu0 %v2768
      %v4349 = vpop.f32.mrf.mxu0
      %v4350 = vadd.f32 0.0, %v4349
      %4351 = vmatmul.f32.gmra.mxu0 %v4244
      %v4352 = vpop.f32.mrf.mxu0
      %v4353 = vadd.f32 0.0, %v4352
      %4354 = vmatmul.f32.gmra.mxu0 %v4246
      %v4355 = vpop.f32.mrf.mxu0
      %v4356 = vadd.f32 0.0, %v4355
      %4357 = vmatmul.f32.gmra.mxu0 %v4248
      %v4358 = vpop.f32.mrf.mxu0
      %v4359 = vadd.f32 0.0, %v4358
      %4360 = vmatmul.f32.gmra.mxu0 %v4250
      %v4361 = vpop.f32.mrf.mxu0
      %v4362 = vadd.f32 0.0, %v4361
      %4363 = vmatmul.f32.gmra.mxu0 %v4252
      %v4364 = vpop.f32.mrf.mxu0
      %v4365 = vadd.f32 0.0, %v4364
      %4366 = vmatmul.f32.gmra.mxu0 %v4254
      %v4367 = vpop.f32.mrf.mxu0
      %v4368 = vadd.f32 0.0, %v4367
      %4369 = vmatmul.f32.gmra.mxu0 %v4256
      %v4370 = vpop.f32.mrf.mxu0
      %v4371 = vadd.f32 0.0, %v4370
      %4372 = vmatmul.f32.gmra.mxu0 %v4258
      %v4373 = vpop.f32.mrf.mxu0
      %v4374 = vadd.f32 0.0, %v4373
      %4375 = vdwg.mxu0
      %v4376 = vadd.f32 %v4178, %v4281
      %v4377 = vadd.f32 %v4179, %v4284
      %v4378 = vadd.f32 %v4180, %v4287
      %v4379 = vadd.f32 %v4181, %v4290
      %v4380 = vadd.f32 %v4182, %v4293
      %v4381 = vadd.f32 %v4183, %v4296
      %v4382 = vadd.f32 %v4184, %v4299
      %v4383 = vadd.f32 %v4185, %v4302
      %v4384 = vadd.f32 %v4186, %v4305
      %v4385 = vadd.f32 %v4187, %v4308
      %v4386 = vadd.f32 %v4188, %v4311
      %v4387 = vadd.f32 %v4189, %v4314
      %v4388 = vadd.f32 %v4190, %v4317
      %v4389 = vadd.f32 %v4191, %v4320
      %v4390 = vadd.f32 %v4192, %v4323
      %v4391 = vadd.f32 %v4193, %v4326
      %v4392 = vadd.f32 %v4194, %v4329
      %v4393 = vadd.f32 %v4195, %v4332
      %v4394 = vadd.f32 %v4196, %v4335
      %v4395 = vadd.f32 %v4197, %v4338
      %v4396 = vadd.f32 %v4198, %v4341
      %v4397 = vadd.f32 %v4199, %v4344
      %v4398 = vadd.f32 %v4200, %v4347
      %v4399 = vadd.f32 %v4201, %v4350
      %v4400 = vadd.f32 %v4202, %v4353
      %v4401 = vadd.f32 %v4203, %v4356
      %v4402 = vadd.f32 %v4204, %v4359
      %v4403 = vadd.f32 %v4205, %v4362
      %v4404 = vadd.f32 %v4206, %v4365
      %v4405 = vadd.f32 %v4207, %v4368
      %v4406 = vadd.f32 %v4208, %v4371
      %v4407 = vadd.f32 %v4209, %v4374
      %v4408 = vrot.slane %v677, 2
      %v4409 = vrot.slane %v678, 2
      %v4410 = vsel %vm1223, %v4408, %v4409
      %v4411 = vrot.slane %v679, 2
      %v4412 = vrot.slane %v680, 2
      %v4413 = vsel %vm1223, %v4411, %v4412
      %v4414 = vrot.slane %v681, 2
      %v4415 = vrot.slane %v682, 2
      %v4416 = vsel %vm1223, %v4414, %v4415
      %v4417 = vrot.slane %v683, 2
      %v4418 = vrot.slane %v684, 2
      %v4419 = vsel %vm1223, %v4417, %v4418
      %v4420 = vrot.slane %v685, 2
      %v4421 = vrot.slane %v686, 2
      %v4422 = vsel %vm1223, %v4420, %v4421
      %v4423 = vrot.slane %v687, 2
      %v4424 = vrot.slane %v688, 2
      %v4425 = vsel %vm1223, %v4423, %v4424
      %v4426 = vrot.slane %v689, 2
      %v4427 = vrot.slane %v690, 2
      %v4428 = vsel %vm1223, %v4426, %v4427
      %v4429 = vrot.slane %v691, 2
      %v4430 = vrot.slane %v692, 2
      %v4431 = vsel %vm1223, %v4429, %v4430
      %s4432 = scalar_lea.vmem %s6, 80
      %v4433 = vld [vmem:[%s4432] sm:$0xf]
      %v4434 = vsel %vm861, %v4410, 0
      %v4436 = vsel %vm861, %v4413, 0
      %v4438 = vsel %vm861, %v4416, 0
      %v4440 = vsel %vm861, %v4419, 0
      %v4442 = vsel %vm861, %v4422, 0
      %v4444 = vsel %vm861, %v4425, 0
      %v4446 = vsel %vm861, %v4428, 0
      %v4448 = vsel %vm861, %v4431, 0
      %v4451 = vsel %vm926, %v4433, 0
      %4453 = vmatpush.msra.mxu0 0.0
      %4454 = vmatpush.msra.mxu0 0.0
      %4455 = vmatpush.msra.mxu0 0.0
      %4456 = vmatpush.msra.mxu0 0.0
      %4457 = vmatpush.msra.mxu0 0.0
      %4458 = vmatpush.msra.mxu0 0.0
      %4459 = vmatpush.msra.mxu0 0.0
      %4460 = vmatpush.msra.mxu0 0.0
      %4461 = vmatpush.msra.mxu0 0.0
      %4462 = vmatpush.msra.mxu0 0.0
      %4463 = vmatpush.msra.mxu0 0.0
      %4464 = vmatpush.msra.mxu0 0.0
      %4465 = vmatpush.msra.mxu0 0.0
      %4466 = vmatpush.msra.mxu0 0.0
      %4467 = vmatpush.msra.mxu0 0.0
      %4468 = vmatpush.msra.mxu0 %v4451
      %4469 = vmatmul.f32.gmra.mxu0 %v1354
      %v4470 = vpop.f32.mrf.mxu0
      %v4471 = vadd.f32 0.0, %v4470
      %4472 = vmatmul.f32.gmra.mxu0 %v1356
      %v4473 = vpop.f32.mrf.mxu0
      %v4474 = vadd.f32 0.0, %v4473
      %4475 = vmatmul.f32.gmra.mxu0 %v1358
      %v4476 = vpop.f32.mrf.mxu0
      %v4477 = vadd.f32 0.0, %v4476
      %4478 = vmatmul.f32.gmra.mxu0 %v1360
      %v4479 = vpop.f32.mrf.mxu0
      %v4480 = vadd.f32 0.0, %v4479
      %4481 = vmatmul.f32.gmra.mxu0 %v1362
      %v4482 = vpop.f32.mrf.mxu0
      %v4483 = vadd.f32 0.0, %v4482
      %4484 = vmatmul.f32.gmra.mxu0 %v1364
      %v4485 = vpop.f32.mrf.mxu0
      %v4486 = vadd.f32 0.0, %v4485
      %4487 = vmatmul.f32.gmra.mxu0 %v1366
      %v4488 = vpop.f32.mrf.mxu0
      %v4489 = vadd.f32 0.0, %v4488
      %4490 = vmatmul.f32.gmra.mxu0 %v1368
      %v4491 = vpop.f32.mrf.mxu0
      %v4492 = vadd.f32 0.0, %v4491
      %4493 = vmatmul.f32.gmra.mxu0 %v1370
      %v4494 = vpop.f32.mrf.mxu0
      %v4495 = vadd.f32 0.0, %v4494
      %4496 = vmatmul.f32.gmra.mxu0 %v1372
      %v4497 = vpop.f32.mrf.mxu0
      %v4498 = vadd.f32 0.0, %v4497
      %4499 = vmatmul.f32.gmra.mxu0 %v1374
      %v4500 = vpop.f32.mrf.mxu0
      %v4501 = vadd.f32 0.0, %v4500
      %4502 = vmatmul.f32.gmra.mxu0 %v1376
      %v4503 = vpop.f32.mrf.mxu0
      %v4504 = vadd.f32 0.0, %v4503
      %4505 = vmatmul.f32.gmra.mxu0 %v1378
      %v4506 = vpop.f32.mrf.mxu0
      %v4507 = vadd.f32 0.0, %v4506
      %4508 = vmatmul.f32.gmra.mxu0 %v1380
      %v4509 = vpop.f32.mrf.mxu0
      %v4510 = vadd.f32 0.0, %v4509
      %4511 = vmatmul.f32.gmra.mxu0 %v1382
      %v4512 = vpop.f32.mrf.mxu0
      %v4513 = vadd.f32 0.0, %v4512
      %4514 = vmatmul.f32.gmra.mxu0 %v1384
      %v4515 = vpop.f32.mrf.mxu0
      %v4516 = vadd.f32 0.0, %v4515
      %4517 = vmatmul.f32.gmra.mxu0 %v2944
      %v4518 = vpop.f32.mrf.mxu0
      %v4519 = vadd.f32 0.0, %v4518
      %4520 = vmatmul.f32.gmra.mxu0 %v2946
      %v4521 = vpop.f32.mrf.mxu0
      %v4522 = vadd.f32 0.0, %v4521
      %4523 = vmatmul.f32.gmra.mxu0 %v2948
      %v4524 = vpop.f32.mrf.mxu0
      %v4525 = vadd.f32 0.0, %v4524
      %4526 = vmatmul.f32.gmra.mxu0 %v2950
      %v4527 = vpop.f32.mrf.mxu0
      %v4528 = vadd.f32 0.0, %v4527
      %4529 = vmatmul.f32.gmra.mxu0 %v2952
      %v4530 = vpop.f32.mrf.mxu0
      %v4531 = vadd.f32 0.0, %v4530
      %4532 = vmatmul.f32.gmra.mxu0 %v2954
      %v4533 = vpop.f32.mrf.mxu0
      %v4534 = vadd.f32 0.0, %v4533
      %4535 = vmatmul.f32.gmra.mxu0 %v2956
      %v4536 = vpop.f32.mrf.mxu0
      %v4537 = vadd.f32 0.0, %v4536
      %4538 = vmatmul.f32.gmra.mxu0 %v2958
      %v4539 = vpop.f32.mrf.mxu0
      %v4540 = vadd.f32 0.0, %v4539
      %4541 = vmatmul.f32.gmra.mxu0 %v4434
      %v4542 = vpop.f32.mrf.mxu0
      %v4543 = vadd.f32 0.0, %v4542
      %4544 = vmatmul.f32.gmra.mxu0 %v4436
      %v4545 = vpop.f32.mrf.mxu0
      %v4546 = vadd.f32 0.0, %v4545
      %4547 = vmatmul.f32.gmra.mxu0 %v4438
      %v4548 = vpop.f32.mrf.mxu0
      %v4549 = vadd.f32 0.0, %v4548
      %4550 = vmatmul.f32.gmra.mxu0 %v4440
      %v4551 = vpop.f32.mrf.mxu0
      %v4552 = vadd.f32 0.0, %v4551
      %4553 = vmatmul.f32.gmra.mxu0 %v4442
      %v4554 = vpop.f32.mrf.mxu0
      %v4555 = vadd.f32 0.0, %v4554
      %4556 = vmatmul.f32.gmra.mxu0 %v4444
      %v4557 = vpop.f32.mrf.mxu0
      %v4558 = vadd.f32 0.0, %v4557
      %4559 = vmatmul.f32.gmra.mxu0 %v4446
      %v4560 = vpop.f32.mrf.mxu0
      %v4561 = vadd.f32 0.0, %v4560
      %4562 = vmatmul.f32.gmra.mxu0 %v4448
      %v4563 = vpop.f32.mrf.mxu0
      %v4564 = vadd.f32 0.0, %v4563
      %4565 = vdwg.mxu0
      %v4566 = vadd.f32 %v4376, %v4471
      %v4567 = vadd.f32 %v4377, %v4474
      %v4568 = vadd.f32 %v4378, %v4477
      %v4569 = vadd.f32 %v4379, %v4480
      %v4570 = vadd.f32 %v4380, %v4483
      %v4571 = vadd.f32 %v4381, %v4486
      %v4572 = vadd.f32 %v4382, %v4489
      %v4573 = vadd.f32 %v4383, %v4492
      %v4574 = vadd.f32 %v4384, %v4495
      %v4575 = vadd.f32 %v4385, %v4498
      %v4576 = vadd.f32 %v4386, %v4501
      %v4577 = vadd.f32 %v4387, %v4504
      %v4578 = vadd.f32 %v4388, %v4507
      %v4579 = vadd.f32 %v4389, %v4510
      %v4580 = vadd.f32 %v4390, %v4513
      %v4581 = vadd.f32 %v4391, %v4516
      %v4582 = vadd.f32 %v4392, %v4519
      %v4583 = vadd.f32 %v4393, %v4522
      %v4584 = vadd.f32 %v4394, %v4525
      %v4585 = vadd.f32 %v4395, %v4528
      %v4586 = vadd.f32 %v4396, %v4531
      %v4587 = vadd.f32 %v4397, %v4534
      %v4588 = vadd.f32 %v4398, %v4537
      %v4589 = vadd.f32 %v4399, %v4540
      %v4590 = vadd.f32 %v4400, %v4543
      %v4591 = vadd.f32 %v4401, %v4546
      %v4592 = vadd.f32 %v4402, %v4549
      %v4593 = vadd.f32 %v4403, %v4552
      %v4594 = vadd.f32 %v4404, %v4555
      %v4595 = vadd.f32 %v4405, %v4558
      %v4596 = vadd.f32 %v4406, %v4561
      %v4597 = vadd.f32 %v4407, %v4564
      %s4598 = scalar_lea.vmem %s6, 84
      %v4599 = vld [vmem:[%s4598] sm:$0xf]
      %v4601 = vsel %vm861, %v693, 0
      %v4604 = vsel %vm926, %v4599, 0
      %4606 = vmatpush.msra.mxu0 0.0
      %4607 = vmatpush.msra.mxu0 0.0
      %4608 = vmatpush.msra.mxu0 0.0
      %4609 = vmatpush.msra.mxu0 0.0
      %4610 = vmatpush.msra.mxu0 0.0
      %4611 = vmatpush.msra.mxu0 0.0
      %4612 = vmatpush.msra.mxu0 0.0
      %4613 = vmatpush.msra.mxu0 0.0
      %4614 = vmatpush.msra.mxu0 0.0
      %4615 = vmatpush.msra.mxu0 0.0
      %4616 = vmatpush.msra.mxu0 0.0
      %4617 = vmatpush.msra.mxu0 0.0
      %4618 = vmatpush.msra.mxu0 0.0
      %4619 = vmatpush.msra.mxu0 0.0
      %4620 = vmatpush.msra.mxu0 0.0
      %4621 = vmatpush.msra.mxu0 %v4604
      %4622 = vmatmul.f32.gmra.mxu0 %v1077
      %v4623 = vpop.f32.mrf.mxu0
      %v4624 = vadd.f32 0.0, %v4623
      %4625 = vmatmul.f32.gmra.mxu0 %v1079
      %v4626 = vpop.f32.mrf.mxu0
      %v4627 = vadd.f32 0.0, %v4626
      %4628 = vmatmul.f32.gmra.mxu0 %v1081
      %v4629 = vpop.f32.mrf.mxu0
      %v4630 = vadd.f32 0.0, %v4629
      %4631 = vmatmul.f32.gmra.mxu0 %v1083
      %v4632 = vpop.f32.mrf.mxu0
      %v4633 = vadd.f32 0.0, %v4632
      %4634 = vmatmul.f32.gmra.mxu0 %v1085
      %v4635 = vpop.f32.mrf.mxu0
      %v4636 = vadd.f32 0.0, %v4635
      %4637 = vmatmul.f32.gmra.mxu0 %v1087
      %v4638 = vpop.f32.mrf.mxu0
      %v4639 = vadd.f32 0.0, %v4638
      %4640 = vmatmul.f32.gmra.mxu0 %v1089
      %v4641 = vpop.f32.mrf.mxu0
      %v4642 = vadd.f32 0.0, %v4641
      %4643 = vmatmul.f32.gmra.mxu0 %v1543
      %v4644 = vpop.f32.mrf.mxu0
      %v4645 = vadd.f32 0.0, %v4644
      %4646 = vmatmul.f32.gmra.mxu0 %v1093
      %v4647 = vpop.f32.mrf.mxu0
      %v4648 = vadd.f32 0.0, %v4647
      %4649 = vmatmul.f32.gmra.mxu0 %v1095
      %v4650 = vpop.f32.mrf.mxu0
      %v4651 = vadd.f32 0.0, %v4650
      %4652 = vmatmul.f32.gmra.mxu0 %v1097
      %v4653 = vpop.f32.mrf.mxu0
      %v4654 = vadd.f32 0.0, %v4653
      %4655 = vmatmul.f32.gmra.mxu0 %v1099
      %v4656 = vpop.f32.mrf.mxu0
      %v4657 = vadd.f32 0.0, %v4656
      %4658 = vmatmul.f32.gmra.mxu0 %v1101
      %v4659 = vpop.f32.mrf.mxu0
      %v4660 = vadd.f32 0.0, %v4659
      %4661 = vmatmul.f32.gmra.mxu0 %v1103
      %v4662 = vpop.f32.mrf.mxu0
      %v4663 = vadd.f32 0.0, %v4662
      %4664 = vmatmul.f32.gmra.mxu0 %v1105
      %v4665 = vpop.f32.mrf.mxu0
      %v4666 = vadd.f32 0.0, %v4665
      %4667 = vmatmul.f32.gmra.mxu0 %v1546
      %v4668 = vpop.f32.mrf.mxu0
      %v4669 = vadd.f32 0.0, %v4668
      %4670 = vmatmul.f32.gmra.mxu0 %v2552
      %v4671 = vpop.f32.mrf.mxu0
      %v4672 = vadd.f32 0.0, %v4671
      %4673 = vmatmul.f32.gmra.mxu0 %v2555
      %v4674 = vpop.f32.mrf.mxu0
      %v4675 = vadd.f32 0.0, %v4674
      %4676 = vmatmul.f32.gmra.mxu0 %v2558
      %v4677 = vpop.f32.mrf.mxu0
      %v4678 = vadd.f32 0.0, %v4677
      %4679 = vmatmul.f32.gmra.mxu0 %v2561
      %v4680 = vpop.f32.mrf.mxu0
      %v4681 = vadd.f32 0.0, %v4680
      %4682 = vmatmul.f32.gmra.mxu0 %v2564
      %v4683 = vpop.f32.mrf.mxu0
      %v4684 = vadd.f32 0.0, %v4683
      %4685 = vmatmul.f32.gmra.mxu0 %v2567
      %v4686 = vpop.f32.mrf.mxu0
      %v4687 = vadd.f32 0.0, %v4686
      %4688 = vmatmul.f32.gmra.mxu0 %v2570
      %v4689 = vpop.f32.mrf.mxu0
      %v4690 = vadd.f32 0.0, %v4689
      %4691 = vmatmul.f32.gmra.mxu0 %v3111
      %v4692 = vpop.f32.mrf.mxu0
      %v4693 = vadd.f32 0.0, %v4692
      %4694 = vmatmul.f32.gmra.mxu0 %v4042
      %v4695 = vpop.f32.mrf.mxu0
      %v4696 = vadd.f32 0.0, %v4695
      %4697 = vmatmul.f32.gmra.mxu0 %v4045
      %v4698 = vpop.f32.mrf.mxu0
      %v4699 = vadd.f32 0.0, %v4698
      %4700 = vmatmul.f32.gmra.mxu0 %v4048
      %v4701 = vpop.f32.mrf.mxu0
      %v4702 = vadd.f32 0.0, %v4701
      %4703 = vmatmul.f32.gmra.mxu0 %v4051
      %v4704 = vpop.f32.mrf.mxu0
      %v4705 = vadd.f32 0.0, %v4704
      %4706 = vmatmul.f32.gmra.mxu0 %v4054
      %v4707 = vpop.f32.mrf.mxu0
      %v4708 = vadd.f32 0.0, %v4707
      %4709 = vmatmul.f32.gmra.mxu0 %v4057
      %v4710 = vpop.f32.mrf.mxu0
      %v4711 = vadd.f32 0.0, %v4710
      %4712 = vmatmul.f32.gmra.mxu0 %v4060
      %v4713 = vpop.f32.mrf.mxu0
      %v4714 = vadd.f32 0.0, %v4713
      %4715 = vmatmul.f32.gmra.mxu0 %v4601
      %v4716 = vpop.f32.mrf.mxu0
      %v4717 = vadd.f32 0.0, %v4716
      %4718 = vdwg.mxu0
      %v4719 = vadd.f32 %v4566, %v4624
      %v4720 = vadd.f32 %v4567, %v4627
      %v4721 = vadd.f32 %v4568, %v4630
      %v4722 = vadd.f32 %v4569, %v4633
      %v4723 = vadd.f32 %v4570, %v4636
      %v4724 = vadd.f32 %v4571, %v4639
      %v4725 = vadd.f32 %v4572, %v4642
      %v4726 = vadd.f32 %v4573, %v4645
      %v4727 = vadd.f32 %v4574, %v4648
      %v4728 = vadd.f32 %v4575, %v4651
      %v4729 = vadd.f32 %v4576, %v4654
      %v4730 = vadd.f32 %v4577, %v4657
      %v4731 = vadd.f32 %v4578, %v4660
      %v4732 = vadd.f32 %v4579, %v4663
      %v4733 = vadd.f32 %v4580, %v4666
      %v4734 = vadd.f32 %v4581, %v4669
      %v4735 = vadd.f32 %v4582, %v4672
      %v4736 = vadd.f32 %v4583, %v4675
      %v4737 = vadd.f32 %v4584, %v4678
      %v4738 = vadd.f32 %v4585, %v4681
      %v4739 = vadd.f32 %v4586, %v4684
      %v4740 = vadd.f32 %v4587, %v4687
      %v4741 = vadd.f32 %v4588, %v4690
      %v4742 = vadd.f32 %v4589, %v4693
      %v4743 = vadd.f32 %v4590, %v4696
      %v4744 = vadd.f32 %v4591, %v4699
      %v4745 = vadd.f32 %v4592, %v4702
      %v4746 = vadd.f32 %v4593, %v4705
      %v4747 = vadd.f32 %v4594, %v4708
      %v4748 = vadd.f32 %v4595, %v4711
      %v4749 = vadd.f32 %v4596, %v4714
      %v4750 = vadd.f32 %v4597, %v4717
      %v4752 = vrot.slane %v693, 1
      %v4753 = vrot.slane %v694, 1
      %v4754 = vsel %vm762, %v4752, %v4753
      %s4755 = scalar_lea.vmem %s6, 88
      %v4756 = vld [vmem:[%s4755] sm:$0xf]
      %v4757 = vsel %vm861, %v4754, 0
      %v4760 = vsel %vm926, %v4756, 0
      %4762 = vmatpush.msra.mxu0 0.0
      %4763 = vmatpush.msra.mxu0 0.0
      %4764 = vmatpush.msra.mxu0 0.0
      %4765 = vmatpush.msra.mxu0 0.0
      %4766 = vmatpush.msra.mxu0 0.0
      %4767 = vmatpush.msra.mxu0 0.0
      %4768 = vmatpush.msra.mxu0 0.0
      %4769 = vmatpush.msra.mxu0 0.0
      %4770 = vmatpush.msra.mxu0 0.0
      %4771 = vmatpush.msra.mxu0 0.0
      %4772 = vmatpush.msra.mxu0 0.0
      %4773 = vmatpush.msra.mxu0 0.0
      %4774 = vmatpush.msra.mxu0 0.0
      %4775 = vmatpush.msra.mxu0 0.0
      %4776 = vmatpush.msra.mxu0 0.0
      %4777 = vmatpush.msra.mxu0 %v4760
      %4778 = vmatmul.f32.gmra.mxu0 %v896
      %v4779 = vpop.f32.mrf.mxu0
      %v4780 = vadd.f32 0.0, %v4779
      %4781 = vmatmul.f32.gmra.mxu0 %v898
      %v4782 = vpop.f32.mrf.mxu0
      %v4783 = vadd.f32 0.0, %v4782
      %4784 = vmatmul.f32.gmra.mxu0 %v900
      %v4785 = vpop.f32.mrf.mxu0
      %v4786 = vadd.f32 0.0, %v4785
      %4787 = vmatmul.f32.gmra.mxu0 %v902
      %v4788 = vpop.f32.mrf.mxu0
      %v4789 = vadd.f32 0.0, %v4788
      %4790 = vmatmul.f32.gmra.mxu0 %v904
      %v4791 = vpop.f32.mrf.mxu0
      %v4792 = vadd.f32 0.0, %v4791
      %4793 = vmatmul.f32.gmra.mxu0 %v906
      %v4794 = vpop.f32.mrf.mxu0
      %v4795 = vadd.f32 0.0, %v4794
      %4796 = vmatmul.f32.gmra.mxu0 %v908
      %v4797 = vpop.f32.mrf.mxu0
      %v4798 = vadd.f32 0.0, %v4797
      %4799 = vmatmul.f32.gmra.mxu0 %v1718
      %v4800 = vpop.f32.mrf.mxu0
      %v4801 = vadd.f32 0.0, %v4800
      %4802 = vmatmul.f32.gmra.mxu0 %v912
      %v4803 = vpop.f32.mrf.mxu0
      %v4804 = vadd.f32 0.0, %v4803
      %4805 = vmatmul.f32.gmra.mxu0 %v914
      %v4806 = vpop.f32.mrf.mxu0
      %v4807 = vadd.f32 0.0, %v4806
      %4808 = vmatmul.f32.gmra.mxu0 %v916
      %v4809 = vpop.f32.mrf.mxu0
      %v4810 = vadd.f32 0.0, %v4809
      %4811 = vmatmul.f32.gmra.mxu0 %v918
      %v4812 = vpop.f32.mrf.mxu0
      %v4813 = vadd.f32 0.0, %v4812
      %4814 = vmatmul.f32.gmra.mxu0 %v920
      %v4815 = vpop.f32.mrf.mxu0
      %v4816 = vadd.f32 0.0, %v4815
      %4817 = vmatmul.f32.gmra.mxu0 %v922
      %v4818 = vpop.f32.mrf.mxu0
      %v4819 = vadd.f32 0.0, %v4818
      %4820 = vmatmul.f32.gmra.mxu0 %v924
      %v4821 = vpop.f32.mrf.mxu0
      %v4822 = vadd.f32 0.0, %v4821
      %4823 = vmatmul.f32.gmra.mxu0 %v1720
      %v4824 = vpop.f32.mrf.mxu0
      %v4825 = vadd.f32 0.0, %v4824
      %4826 = vmatmul.f32.gmra.mxu0 %v2756
      %v4827 = vpop.f32.mrf.mxu0
      %v4828 = vadd.f32 0.0, %v4827
      %4829 = vmatmul.f32.gmra.mxu0 %v2758
      %v4830 = vpop.f32.mrf.mxu0
      %v4831 = vadd.f32 0.0, %v4830
      %4832 = vmatmul.f32.gmra.mxu0 %v2760
      %v4833 = vpop.f32.mrf.mxu0
      %v4834 = vadd.f32 0.0, %v4833
      %4835 = vmatmul.f32.gmra.mxu0 %v2762
      %v4836 = vpop.f32.mrf.mxu0
      %v4837 = vadd.f32 0.0, %v4836
      %4838 = vmatmul.f32.gmra.mxu0 %v2764
      %v4839 = vpop.f32.mrf.mxu0
      %v4840 = vadd.f32 0.0, %v4839
      %4841 = vmatmul.f32.gmra.mxu0 %v2766
      %v4842 = vpop.f32.mrf.mxu0
      %v4843 = vadd.f32 0.0, %v4842
      %4844 = vmatmul.f32.gmra.mxu0 %v2768
      %v4845 = vpop.f32.mrf.mxu0
      %v4846 = vadd.f32 0.0, %v4845
      %4847 = vmatmul.f32.gmra.mxu0 %v3267
      %v4848 = vpop.f32.mrf.mxu0
      %v4849 = vadd.f32 0.0, %v4848
      %4850 = vmatmul.f32.gmra.mxu0 %v4246
      %v4851 = vpop.f32.mrf.mxu0
      %v4852 = vadd.f32 0.0, %v4851
      %4853 = vmatmul.f32.gmra.mxu0 %v4248
      %v4854 = vpop.f32.mrf.mxu0
      %v4855 = vadd.f32 0.0, %v4854
      %4856 = vmatmul.f32.gmra.mxu0 %v4250
      %v4857 = vpop.f32.mrf.mxu0
      %v4858 = vadd.f32 0.0, %v4857
      %4859 = vmatmul.f32.gmra.mxu0 %v4252
      %v4860 = vpop.f32.mrf.mxu0
      %v4861 = vadd.f32 0.0, %v4860
      %4862 = vmatmul.f32.gmra.mxu0 %v4254
      %v4863 = vpop.f32.mrf.mxu0
      %v4864 = vadd.f32 0.0, %v4863
      %4865 = vmatmul.f32.gmra.mxu0 %v4256
      %v4866 = vpop.f32.mrf.mxu0
      %v4867 = vadd.f32 0.0, %v4866
      %4868 = vmatmul.f32.gmra.mxu0 %v4258
      %v4869 = vpop.f32.mrf.mxu0
      %v4870 = vadd.f32 0.0, %v4869
      %4871 = vmatmul.f32.gmra.mxu0 %v4757
      %v4872 = vpop.f32.mrf.mxu0
      %v4873 = vadd.f32 0.0, %v4872
      %4874 = vdwg.mxu0
      %v4875 = vadd.f32 %v4719, %v4780
      %v4876 = vadd.f32 %v4720, %v4783
      %v4877 = vadd.f32 %v4721, %v4786
      %v4878 = vadd.f32 %v4722, %v4789
      %v4879 = vadd.f32 %v4723, %v4792
      %v4880 = vadd.f32 %v4724, %v4795
      %v4881 = vadd.f32 %v4725, %v4798
      %v4882 = vadd.f32 %v4726, %v4801
      %v4883 = vadd.f32 %v4727, %v4804
      %v4884 = vadd.f32 %v4728, %v4807
      %v4885 = vadd.f32 %v4729, %v4810
      %v4886 = vadd.f32 %v4730, %v4813
      %v4887 = vadd.f32 %v4731, %v4816
      %v4888 = vadd.f32 %v4732, %v4819
      %v4889 = vadd.f32 %v4733, %v4822
      %v4890 = vadd.f32 %v4734, %v4825
      %v4891 = vadd.f32 %v4735, %v4828
      %v4892 = vadd.f32 %v4736, %v4831
      %v4893 = vadd.f32 %v4737, %v4834
      %v4894 = vadd.f32 %v4738, %v4837
      %v4895 = vadd.f32 %v4739, %v4840
      %v4896 = vadd.f32 %v4740, %v4843
      %v4897 = vadd.f32 %v4741, %v4846
      %v4898 = vadd.f32 %v4742, %v4849
      %v4899 = vadd.f32 %v4743, %v4852
      %v4900 = vadd.f32 %v4744, %v4855
      %v4901 = vadd.f32 %v4745, %v4858
      %v4902 = vadd.f32 %v4746, %v4861
      %v4903 = vadd.f32 %v4747, %v4864
      %v4904 = vadd.f32 %v4748, %v4867
      %v4905 = vadd.f32 %v4749, %v4870
      %v4906 = vadd.f32 %v4750, %v4873
      %v4907 = vrot.slane %v693, 2
      %v4908 = vrot.slane %v694, 2
      %v4909 = vsel %vm1223, %v4907, %v4908
      %s4910 = scalar_lea.vmem %s6, 92
      %v4911 = vld [vmem:[%s4910] sm:$0xf]
      %v4912 = vsel %vm861, %v4909, 0
      %v4915 = vsel %vm926, %v4911, 0
      %4917 = vmatpush.msra.mxu0 0.0
      %4918 = vmatpush.msra.mxu0 0.0
      %4919 = vmatpush.msra.mxu0 0.0
      %4920 = vmatpush.msra.mxu0 0.0
      %4921 = vmatpush.msra.mxu0 0.0
      %4922 = vmatpush.msra.mxu0 0.0
      %4923 = vmatpush.msra.mxu0 0.0
      %4924 = vmatpush.msra.mxu0 0.0
      %4925 = vmatpush.msra.mxu0 0.0
      %4926 = vmatpush.msra.mxu0 0.0
      %4927 = vmatpush.msra.mxu0 0.0
      %4928 = vmatpush.msra.mxu0 0.0
      %4929 = vmatpush.msra.mxu0 0.0
      %4930 = vmatpush.msra.mxu0 0.0
      %4931 = vmatpush.msra.mxu0 0.0
      %4932 = vmatpush.msra.mxu0 %v4915
      %4933 = vmatmul.f32.gmra.mxu0 %v1356
      %v4934 = vpop.f32.mrf.mxu0
      %v4935 = vadd.f32 0.0, %v4934
      %4936 = vmatmul.f32.gmra.mxu0 %v1358
      %v4937 = vpop.f32.mrf.mxu0
      %v4938 = vadd.f32 0.0, %v4937
      %4939 = vmatmul.f32.gmra.mxu0 %v1360
      %v4940 = vpop.f32.mrf.mxu0
      %v4941 = vadd.f32 0.0, %v4940
      %4942 = vmatmul.f32.gmra.mxu0 %v1362
      %v4943 = vpop.f32.mrf.mxu0
      %v4944 = vadd.f32 0.0, %v4943
      %4945 = vmatmul.f32.gmra.mxu0 %v1364
      %v4946 = vpop.f32.mrf.mxu0
      %v4947 = vadd.f32 0.0, %v4946
      %4948 = vmatmul.f32.gmra.mxu0 %v1366
      %v4949 = vpop.f32.mrf.mxu0
      %v4950 = vadd.f32 0.0, %v4949
      %4951 = vmatmul.f32.gmra.mxu0 %v1368
      %v4952 = vpop.f32.mrf.mxu0
      %v4953 = vadd.f32 0.0, %v4952
      %4954 = vmatmul.f32.gmra.mxu0 %v1888
      %v4955 = vpop.f32.mrf.mxu0
      %v4956 = vadd.f32 0.0, %v4955
      %4957 = vmatmul.f32.gmra.mxu0 %v1372
      %v4958 = vpop.f32.mrf.mxu0
      %v4959 = vadd.f32 0.0, %v4958
      %4960 = vmatmul.f32.gmra.mxu0 %v1374
      %v4961 = vpop.f32.mrf.mxu0
      %v4962 = vadd.f32 0.0, %v4961
      %4963 = vmatmul.f32.gmra.mxu0 %v1376
      %v4964 = vpop.f32.mrf.mxu0
      %v4965 = vadd.f32 0.0, %v4964
      %4966 = vmatmul.f32.gmra.mxu0 %v1378
      %v4967 = vpop.f32.mrf.mxu0
      %v4968 = vadd.f32 0.0, %v4967
      %4969 = vmatmul.f32.gmra.mxu0 %v1380
      %v4970 = vpop.f32.mrf.mxu0
      %v4971 = vadd.f32 0.0, %v4970
      %4972 = vmatmul.f32.gmra.mxu0 %v1382
      %v4973 = vpop.f32.mrf.mxu0
      %v4974 = vadd.f32 0.0, %v4973
      %4975 = vmatmul.f32.gmra.mxu0 %v1384
      %v4976 = vpop.f32.mrf.mxu0
      %v4977 = vadd.f32 0.0, %v4976
      %4978 = vmatmul.f32.gmra.mxu0 %v1890
      %v4979 = vpop.f32.mrf.mxu0
      %v4980 = vadd.f32 0.0, %v4979
      %4981 = vmatmul.f32.gmra.mxu0 %v2946
      %v4982 = vpop.f32.mrf.mxu0
      %v4983 = vadd.f32 0.0, %v4982
      %4984 = vmatmul.f32.gmra.mxu0 %v2948
      %v4985 = vpop.f32.mrf.mxu0
      %v4986 = vadd.f32 0.0, %v4985
      %4987 = vmatmul.f32.gmra.mxu0 %v2950
      %v4988 = vpop.f32.mrf.mxu0
      %v4989 = vadd.f32 0.0, %v4988
      %4990 = vmatmul.f32.gmra.mxu0 %v2952
      %v4991 = vpop.f32.mrf.mxu0
      %v4992 = vadd.f32 0.0, %v4991
      %4993 = vmatmul.f32.gmra.mxu0 %v2954
      %v4994 = vpop.f32.mrf.mxu0
      %v4995 = vadd.f32 0.0, %v4994
      %4996 = vmatmul.f32.gmra.mxu0 %v2956
      %v4997 = vpop.f32.mrf.mxu0
      %v4998 = vadd.f32 0.0, %v4997
      %4999 = vmatmul.f32.gmra.mxu0 %v2958
      %v5000 = vpop.f32.mrf.mxu0
      %v5001 = vadd.f32 0.0, %v5000
      %5002 = vmatmul.f32.gmra.mxu0 %v3422
      %v5003 = vpop.f32.mrf.mxu0
      %v5004 = vadd.f32 0.0, %v5003
      %5005 = vmatmul.f32.gmra.mxu0 %v4436
      %v5006 = vpop.f32.mrf.mxu0
      %v5007 = vadd.f32 0.0, %v5006
      %5008 = vmatmul.f32.gmra.mxu0 %v4438
      %v5009 = vpop.f32.mrf.mxu0
      %v5010 = vadd.f32 0.0, %v5009
      %5011 = vmatmul.f32.gmra.mxu0 %v4440
      %v5012 = vpop.f32.mrf.mxu0
      %v5013 = vadd.f32 0.0, %v5012
      %5014 = vmatmul.f32.gmra.mxu0 %v4442
      %v5015 = vpop.f32.mrf.mxu0
      %v5016 = vadd.f32 0.0, %v5015
      %5017 = vmatmul.f32.gmra.mxu0 %v4444
      %v5018 = vpop.f32.mrf.mxu0
      %v5019 = vadd.f32 0.0, %v5018
      %5020 = vmatmul.f32.gmra.mxu0 %v4446
      %v5021 = vpop.f32.mrf.mxu0
      %v5022 = vadd.f32 0.0, %v5021
      %5023 = vmatmul.f32.gmra.mxu0 %v4448
      %v5024 = vpop.f32.mrf.mxu0
      %v5025 = vadd.f32 0.0, %v5024
      %5026 = vmatmul.f32.gmra.mxu0 %v4912
      %v5027 = vpop.f32.mrf.mxu0
      %v5028 = vadd.f32 0.0, %v5027
      %5029 = vdwg.mxu0
      %v5030 = vadd.f32 %v4875, %v4935
      %v5031 = vadd.f32 %v4876, %v4938
      %v5032 = vadd.f32 %v4877, %v4941
      %v5033 = vadd.f32 %v4878, %v4944
      %v5034 = vadd.f32 %v4879, %v4947
      %v5035 = vadd.f32 %v4880, %v4950
      %v5036 = vadd.f32 %v4881, %v4953
      %v5037 = vadd.f32 %v4882, %v4956
      %v5038 = vadd.f32 %v4883, %v4959
      %v5039 = vadd.f32 %v4884, %v4962
      %v5040 = vadd.f32 %v4885, %v4965
      %v5041 = vadd.f32 %v4886, %v4968
      %v5042 = vadd.f32 %v4887, %v4971
      %v5043 = vadd.f32 %v4888, %v4974
      %v5044 = vadd.f32 %v4889, %v4977
      %v5045 = vadd.f32 %v4890, %v4980
      %v5046 = vadd.f32 %v4891, %v4983
      %v5047 = vadd.f32 %v4892, %v4986
      %v5048 = vadd.f32 %v4893, %v4989
      %v5049 = vadd.f32 %v4894, %v4992
      %v5050 = vadd.f32 %v4895, %v4995
      %v5051 = vadd.f32 %v4896, %v4998
      %v5052 = vadd.f32 %v4897, %v5001
      %v5053 = vadd.f32 %v4898, %v5004
      %v5054 = vadd.f32 %v4899, %v5007
      %v5055 = vadd.f32 %v4900, %v5010
      %v5056 = vadd.f32 %v4901, %v5013
      %v5057 = vadd.f32 %v4902, %v5016
      %v5058 = vadd.f32 %v4903, %v5019
      %v5059 = vadd.f32 %v4904, %v5022
      %v5060 = vadd.f32 %v4905, %v5025
      %v5061 = vadd.f32 %v4906, %v5028
      %s5062 = scalar_lea.vmem %s6, 96
      %v5063 = vld [vmem:[%s5062] sm:$0xf]
      %v5065 = vsel %vm861, %v695, 0
      %v5068 = vsel %vm926, %v5063, 0
      %5070 = vmatpush.msra.mxu0 0.0
      %5071 = vmatpush.msra.mxu0 0.0
      %5072 = vmatpush.msra.mxu0 0.0
      %5073 = vmatpush.msra.mxu0 0.0
      %5074 = vmatpush.msra.mxu0 0.0
      %5075 = vmatpush.msra.mxu0 0.0
      %5076 = vmatpush.msra.mxu0 0.0
      %5077 = vmatpush.msra.mxu0 0.0
      %5078 = vmatpush.msra.mxu0 0.0
      %5079 = vmatpush.msra.mxu0 0.0
      %5080 = vmatpush.msra.mxu0 0.0
      %5081 = vmatpush.msra.mxu0 0.0
      %5082 = vmatpush.msra.mxu0 0.0
      %5083 = vmatpush.msra.mxu0 0.0
      %5084 = vmatpush.msra.mxu0 0.0
      %5085 = vmatpush.msra.mxu0 %v5068
      %5086 = vmatmul.f32.gmra.mxu0 %v1079
      %v5087 = vpop.f32.mrf.mxu0
      %v5088 = vadd.f32 0.0, %v5087
      %5089 = vmatmul.f32.gmra.mxu0 %v1081
      %v5090 = vpop.f32.mrf.mxu0
      %v5091 = vadd.f32 0.0, %v5090
      %5092 = vmatmul.f32.gmra.mxu0 %v1083
      %v5093 = vpop.f32.mrf.mxu0
      %v5094 = vadd.f32 0.0, %v5093
      %5095 = vmatmul.f32.gmra.mxu0 %v1085
      %v5096 = vpop.f32.mrf.mxu0
      %v5097 = vadd.f32 0.0, %v5096
      %5098 = vmatmul.f32.gmra.mxu0 %v1087
      %v5099 = vpop.f32.mrf.mxu0
      %v5100 = vadd.f32 0.0, %v5099
      %5101 = vmatmul.f32.gmra.mxu0 %v1089
      %v5102 = vpop.f32.mrf.mxu0
      %v5103 = vadd.f32 0.0, %v5102
      %5104 = vmatmul.f32.gmra.mxu0 %v1543
      %v5105 = vpop.f32.mrf.mxu0
      %v5106 = vadd.f32 0.0, %v5105
      %5107 = vmatmul.f32.gmra.mxu0 %v2049
      %v5108 = vpop.f32.mrf.mxu0
      %v5109 = vadd.f32 0.0, %v5108
      %5110 = vmatmul.f32.gmra.mxu0 %v1095
      %v5111 = vpop.f32.mrf.mxu0
      %v5112 = vadd.f32 0.0, %v5111
      %5113 = vmatmul.f32.gmra.mxu0 %v1097
      %v5114 = vpop.f32.mrf.mxu0
      %v5115 = vadd.f32 0.0, %v5114
      %5116 = vmatmul.f32.gmra.mxu0 %v1099
      %v5117 = vpop.f32.mrf.mxu0
      %v5118 = vadd.f32 0.0, %v5117
      %5119 = vmatmul.f32.gmra.mxu0 %v1101
      %v5120 = vpop.f32.mrf.mxu0
      %v5121 = vadd.f32 0.0, %v5120
      %5122 = vmatmul.f32.gmra.mxu0 %v1103
      %v5123 = vpop.f32.mrf.mxu0
      %v5124 = vadd.f32 0.0, %v5123
      %5125 = vmatmul.f32.gmra.mxu0 %v1105
      %v5126 = vpop.f32.mrf.mxu0
      %v5127 = vadd.f32 0.0, %v5126
      %5128 = vmatmul.f32.gmra.mxu0 %v1546
      %v5129 = vpop.f32.mrf.mxu0
      %v5130 = vadd.f32 0.0, %v5129
      %5131 = vmatmul.f32.gmra.mxu0 %v2052
      %v5132 = vpop.f32.mrf.mxu0
      %v5133 = vadd.f32 0.0, %v5132
      %5134 = vmatmul.f32.gmra.mxu0 %v2555
      %v5135 = vpop.f32.mrf.mxu0
      %v5136 = vadd.f32 0.0, %v5135
      %5137 = vmatmul.f32.gmra.mxu0 %v2558
      %v5138 = vpop.f32.mrf.mxu0
      %v5139 = vadd.f32 0.0, %v5138
      %5140 = vmatmul.f32.gmra.mxu0 %v2561
      %v5141 = vpop.f32.mrf.mxu0
      %v5142 = vadd.f32 0.0, %v5141
      %5143 = vmatmul.f32.gmra.mxu0 %v2564
      %v5144 = vpop.f32.mrf.mxu0
      %v5145 = vadd.f32 0.0, %v5144
      %5146 = vmatmul.f32.gmra.mxu0 %v2567
      %v5147 = vpop.f32.mrf.mxu0
      %v5148 = vadd.f32 0.0, %v5147
      %5149 = vmatmul.f32.gmra.mxu0 %v2570
      %v5150 = vpop.f32.mrf.mxu0
      %v5151 = vadd.f32 0.0, %v5150
      %5152 = vmatmul.f32.gmra.mxu0 %v3111
      %v5153 = vpop.f32.mrf.mxu0
      %v5154 = vadd.f32 0.0, %v5153
      %5155 = vmatmul.f32.gmra.mxu0 %v3575
      %v5156 = vpop.f32.mrf.mxu0
      %v5157 = vadd.f32 0.0, %v5156
      %5158 = vmatmul.f32.gmra.mxu0 %v4045
      %v5159 = vpop.f32.mrf.mxu0
      %v5160 = vadd.f32 0.0, %v5159
      %5161 = vmatmul.f32.gmra.mxu0 %v4048
      %v5162 = vpop.f32.mrf.mxu0
      %v5163 = vadd.f32 0.0, %v5162
      %5164 = vmatmul.f32.gmra.mxu0 %v4051
      %v5165 = vpop.f32.mrf.mxu0
      %v5166 = vadd.f32 0.0, %v5165
      %5167 = vmatmul.f32.gmra.mxu0 %v4054
      %v5168 = vpop.f32.mrf.mxu0
      %v5169 = vadd.f32 0.0, %v5168
      %5170 = vmatmul.f32.gmra.mxu0 %v4057
      %v5171 = vpop.f32.mrf.mxu0
      %v5172 = vadd.f32 0.0, %v5171
      %5173 = vmatmul.f32.gmra.mxu0 %v4060
      %v5174 = vpop.f32.mrf.mxu0
      %v5175 = vadd.f32 0.0, %v5174
      %5176 = vmatmul.f32.gmra.mxu0 %v4601
      %v5177 = vpop.f32.mrf.mxu0
      %v5178 = vadd.f32 0.0, %v5177
      %5179 = vmatmul.f32.gmra.mxu0 %v5065
      %v5180 = vpop.f32.mrf.mxu0
      %v5181 = vadd.f32 0.0, %v5180
      %5182 = vdwg.mxu0
      %v5183 = vadd.f32 %v5030, %v5088
      %v5184 = vadd.f32 %v5031, %v5091
      %v5185 = vadd.f32 %v5032, %v5094
      %v5186 = vadd.f32 %v5033, %v5097
      %v5187 = vadd.f32 %v5034, %v5100
      %v5188 = vadd.f32 %v5035, %v5103
      %v5189 = vadd.f32 %v5036, %v5106
      %v5190 = vadd.f32 %v5037, %v5109
      %v5191 = vadd.f32 %v5038, %v5112
      %v5192 = vadd.f32 %v5039, %v5115
      %v5193 = vadd.f32 %v5040, %v5118
      %v5194 = vadd.f32 %v5041, %v5121
      %v5195 = vadd.f32 %v5042, %v5124
      %v5196 = vadd.f32 %v5043, %v5127
      %v5197 = vadd.f32 %v5044, %v5130
      %v5198 = vadd.f32 %v5045, %v5133
      %v5199 = vadd.f32 %v5046, %v5136
      %v5200 = vadd.f32 %v5047, %v5139
      %v5201 = vadd.f32 %v5048, %v5142
      %v5202 = vadd.f32 %v5049, %v5145
      %v5203 = vadd.f32 %v5050, %v5148
      %v5204 = vadd.f32 %v5051, %v5151
      %v5205 = vadd.f32 %v5052, %v5154
      %v5206 = vadd.f32 %v5053, %v5157
      %v5207 = vadd.f32 %v5054, %v5160
      %v5208 = vadd.f32 %v5055, %v5163
      %v5209 = vadd.f32 %v5056, %v5166
      %v5210 = vadd.f32 %v5057, %v5169
      %v5211 = vadd.f32 %v5058, %v5172
      %v5212 = vadd.f32 %v5059, %v5175
      %v5213 = vadd.f32 %v5060, %v5178
      %v5214 = vadd.f32 %v5061, %v5181
      %v5216 = vrot.slane %v695, 1
      %v5217 = vrot.slane %v696, 1
      %v5218 = vsel %vm762, %v5216, %v5217
      %s5219 = scalar_lea.vmem %s6, 100
      %v5220 = vld [vmem:[%s5219] sm:$0xf]
      %v5221 = vsel %vm861, %v5218, 0
      %v5224 = vsel %vm926, %v5220, 0
      %5226 = vmatpush.msra.mxu0 0.0
      %5227 = vmatpush.msra.mxu0 0.0
      %5228 = vmatpush.msra.mxu0 0.0
      %5229 = vmatpush.msra.mxu0 0.0
      %5230 = vmatpush.msra.mxu0 0.0
      %5231 = vmatpush.msra.mxu0 0.0
      %5232 = vmatpush.msra.mxu0 0.0
      %5233 = vmatpush.msra.mxu0 0.0
      %5234 = vmatpush.msra.mxu0 0.0
      %5235 = vmatpush.msra.mxu0 0.0
      %5236 = vmatpush.msra.mxu0 0.0
      %5237 = vmatpush.msra.mxu0 0.0
      %5238 = vmatpush.msra.mxu0 0.0
      %5239 = vmatpush.msra.mxu0 0.0
      %5240 = vmatpush.msra.mxu0 0.0
      %5241 = vmatpush.msra.mxu0 %v5224
      %5242 = vmatmul.f32.gmra.mxu0 %v898
      %v5243 = vpop.f32.mrf.mxu0
      %v5244 = vadd.f32 0.0, %v5243
      %5245 = vmatmul.f32.gmra.mxu0 %v900
      %v5246 = vpop.f32.mrf.mxu0
      %v5247 = vadd.f32 0.0, %v5246
      %5248 = vmatmul.f32.gmra.mxu0 %v902
      %v5249 = vpop.f32.mrf.mxu0
      %v5250 = vadd.f32 0.0, %v5249
      %5251 = vmatmul.f32.gmra.mxu0 %v904
      %v5252 = vpop.f32.mrf.mxu0
      %v5253 = vadd.f32 0.0, %v5252
      %5254 = vmatmul.f32.gmra.mxu0 %v906
      %v5255 = vpop.f32.mrf.mxu0
      %v5256 = vadd.f32 0.0, %v5255
      %5257 = vmatmul.f32.gmra.mxu0 %v908
      %v5258 = vpop.f32.mrf.mxu0
      %v5259 = vadd.f32 0.0, %v5258
      %5260 = vmatmul.f32.gmra.mxu0 %v1718
      %v5261 = vpop.f32.mrf.mxu0
      %v5262 = vadd.f32 0.0, %v5261
      %5263 = vmatmul.f32.gmra.mxu0 %v2224
      %v5264 = vpop.f32.mrf.mxu0
      %v5265 = vadd.f32 0.0, %v5264
      %5266 = vmatmul.f32.gmra.mxu0 %v914
      %v5267 = vpop.f32.mrf.mxu0
      %v5268 = vadd.f32 0.0, %v5267
      %5269 = vmatmul.f32.gmra.mxu0 %v916
      %v5270 = vpop.f32.mrf.mxu0
      %v5271 = vadd.f32 0.0, %v5270
      %5272 = vmatmul.f32.gmra.mxu0 %v918
      %v5273 = vpop.f32.mrf.mxu0
      %v5274 = vadd.f32 0.0, %v5273
      %5275 = vmatmul.f32.gmra.mxu0 %v920
      %v5276 = vpop.f32.mrf.mxu0
      %v5277 = vadd.f32 0.0, %v5276
      %5278 = vmatmul.f32.gmra.mxu0 %v922
      %v5279 = vpop.f32.mrf.mxu0
      %v5280 = vadd.f32 0.0, %v5279
      %5281 = vmatmul.f32.gmra.mxu0 %v924
      %v5282 = vpop.f32.mrf.mxu0
      %v5283 = vadd.f32 0.0, %v5282
      %5284 = vmatmul.f32.gmra.mxu0 %v1720
      %v5285 = vpop.f32.mrf.mxu0
      %v5286 = vadd.f32 0.0, %v5285
      %5287 = vmatmul.f32.gmra.mxu0 %v2226
      %v5288 = vpop.f32.mrf.mxu0
      %v5289 = vadd.f32 0.0, %v5288
      %5290 = vmatmul.f32.gmra.mxu0 %v2758
      %v5291 = vpop.f32.mrf.mxu0
      %v5292 = vadd.f32 0.0, %v5291
      %5293 = vmatmul.f32.gmra.mxu0 %v2760
      %v5294 = vpop.f32.mrf.mxu0
      %v5295 = vadd.f32 0.0, %v5294
      %5296 = vmatmul.f32.gmra.mxu0 %v2762
      %v5297 = vpop.f32.mrf.mxu0
      %v5298 = vadd.f32 0.0, %v5297
      %5299 = vmatmul.f32.gmra.mxu0 %v2764
      %v5300 = vpop.f32.mrf.mxu0
      %v5301 = vadd.f32 0.0, %v5300
      %5302 = vmatmul.f32.gmra.mxu0 %v2766
      %v5303 = vpop.f32.mrf.mxu0
      %v5304 = vadd.f32 0.0, %v5303
      %5305 = vmatmul.f32.gmra.mxu0 %v2768
      %v5306 = vpop.f32.mrf.mxu0
      %v5307 = vadd.f32 0.0, %v5306
      %5308 = vmatmul.f32.gmra.mxu0 %v3267
      %v5309 = vpop.f32.mrf.mxu0
      %v5310 = vadd.f32 0.0, %v5309
      %5311 = vmatmul.f32.gmra.mxu0 %v3731
      %v5312 = vpop.f32.mrf.mxu0
      %v5313 = vadd.f32 0.0, %v5312
      %5314 = vmatmul.f32.gmra.mxu0 %v4248
      %v5315 = vpop.f32.mrf.mxu0
      %v5316 = vadd.f32 0.0, %v5315
      %5317 = vmatmul.f32.gmra.mxu0 %v4250
      %v5318 = vpop.f32.mrf.mxu0
      %v5319 = vadd.f32 0.0, %v5318
      %5320 = vmatmul.f32.gmra.mxu0 %v4252
      %v5321 = vpop.f32.mrf.mxu0
      %v5322 = vadd.f32 0.0, %v5321
      %5323 = vmatmul.f32.gmra.mxu0 %v4254
      %v5324 = vpop.f32.mrf.mxu0
      %v5325 = vadd.f32 0.0, %v5324
      %5326 = vmatmul.f32.gmra.mxu0 %v4256
      %v5327 = vpop.f32.mrf.mxu0
      %v5328 = vadd.f32 0.0, %v5327
      %5329 = vmatmul.f32.gmra.mxu0 %v4258
      %v5330 = vpop.f32.mrf.mxu0
      %v5331 = vadd.f32 0.0, %v5330
      %5332 = vmatmul.f32.gmra.mxu0 %v4757
      %v5333 = vpop.f32.mrf.mxu0
      %v5334 = vadd.f32 0.0, %v5333
      %5335 = vmatmul.f32.gmra.mxu0 %v5221
      %v5336 = vpop.f32.mrf.mxu0
      %v5337 = vadd.f32 0.0, %v5336
      %5338 = vdwg.mxu0
      %v5339 = vadd.f32 %v5183, %v5244
      %v5340 = vadd.f32 %v5184, %v5247
      %v5341 = vadd.f32 %v5185, %v5250
      %v5342 = vadd.f32 %v5186, %v5253
      %v5343 = vadd.f32 %v5187, %v5256
      %v5344 = vadd.f32 %v5188, %v5259
      %v5345 = vadd.f32 %v5189, %v5262
      %v5346 = vadd.f32 %v5190, %v5265
      %v5347 = vadd.f32 %v5191, %v5268
      %v5348 = vadd.f32 %v5192, %v5271
      %v5349 = vadd.f32 %v5193, %v5274
      %v5350 = vadd.f32 %v5194, %v5277
      %v5351 = vadd.f32 %v5195, %v5280
      %v5352 = vadd.f32 %v5196, %v5283
      %v5353 = vadd.f32 %v5197, %v5286
      %v5354 = vadd.f32 %v5198, %v5289
      %v5355 = vadd.f32 %v5199, %v5292
      %v5356 = vadd.f32 %v5200, %v5295
      %v5357 = vadd.f32 %v5201, %v5298
      %v5358 = vadd.f32 %v5202, %v5301
      %v5359 = vadd.f32 %v5203, %v5304
      %v5360 = vadd.f32 %v5204, %v5307
      %v5361 = vadd.f32 %v5205, %v5310
      %v5362 = vadd.f32 %v5206, %v5313
      %v5363 = vadd.f32 %v5207, %v5316
      %v5364 = vadd.f32 %v5208, %v5319
      %v5365 = vadd.f32 %v5209, %v5322
      %v5366 = vadd.f32 %v5210, %v5325
      %v5367 = vadd.f32 %v5211, %v5328
      %v5368 = vadd.f32 %v5212, %v5331
      %v5369 = vadd.f32 %v5213, %v5334
      %v5370 = vadd.f32 %v5214, %v5337
      %v5371 = vrot.slane %v695, 2
      %v5372 = vrot.slane %v696, 2
      %v5373 = vsel %vm1223, %v5371, %v5372
      %s5374 = scalar_lea.vmem %s6, 104
      %v5375 = vld [vmem:[%s5374] sm:$0xf]
      %v5376 = vsel %vm861, %v5373, 0
      %v5379 = vsel %vm926, %v5375, 0
      %5381 = vmatpush.msra.mxu0 0.0
      %5382 = vmatpush.msra.mxu0 0.0
      %5383 = vmatpush.msra.mxu0 0.0
      %5384 = vmatpush.msra.mxu0 0.0
      %5385 = vmatpush.msra.mxu0 0.0
      %5386 = vmatpush.msra.mxu0 0.0
      %5387 = vmatpush.msra.mxu0 0.0
      %5388 = vmatpush.msra.mxu0 0.0
      %5389 = vmatpush.msra.mxu0 0.0
      %5390 = vmatpush.msra.mxu0 0.0
      %5391 = vmatpush.msra.mxu0 0.0
      %5392 = vmatpush.msra.mxu0 0.0
      %5393 = vmatpush.msra.mxu0 0.0
      %5394 = vmatpush.msra.mxu0 0.0
      %5395 = vmatpush.msra.mxu0 0.0
      %5396 = vmatpush.msra.mxu0 %v5379
      %5397 = vmatmul.f32.gmra.mxu0 %v1358
      %v5398 = vpop.f32.mrf.mxu0
      %v5399 = vadd.f32 0.0, %v5398
      %5400 = vmatmul.f32.gmra.mxu0 %v1360
      %v5401 = vpop.f32.mrf.mxu0
      %v5402 = vadd.f32 0.0, %v5401
      %5403 = vmatmul.f32.gmra.mxu0 %v1362
      %v5404 = vpop.f32.mrf.mxu0
      %v5405 = vadd.f32 0.0, %v5404
      %5406 = vmatmul.f32.gmra.mxu0 %v1364
      %v5407 = vpop.f32.mrf.mxu0
      %v5408 = vadd.f32 0.0, %v5407
      %5409 = vmatmul.f32.gmra.mxu0 %v1366
      %v5410 = vpop.f32.mrf.mxu0
      %v5411 = vadd.f32 0.0, %v5410
      %5412 = vmatmul.f32.gmra.mxu0 %v1368
      %v5413 = vpop.f32.mrf.mxu0
      %v5414 = vadd.f32 0.0, %v5413
      %5415 = vmatmul.f32.gmra.mxu0 %v1888
      %v5416 = vpop.f32.mrf.mxu0
      %v5417 = vadd.f32 0.0, %v5416
      %5418 = vmatmul.f32.gmra.mxu0 %v2394
      %v5419 = vpop.f32.mrf.mxu0
      %v5420 = vadd.f32 0.0, %v5419
      %5421 = vmatmul.f32.gmra.mxu0 %v1374
      %v5422 = vpop.f32.mrf.mxu0
      %v5423 = vadd.f32 0.0, %v5422
      %5424 = vmatmul.f32.gmra.mxu0 %v1376
      %v5425 = vpop.f32.mrf.mxu0
      %v5426 = vadd.f32 0.0, %v5425
      %5427 = vmatmul.f32.gmra.mxu0 %v1378
      %v5428 = vpop.f32.mrf.mxu0
      %v5429 = vadd.f32 0.0, %v5428
      %5430 = vmatmul.f32.gmra.mxu0 %v1380
      %v5431 = vpop.f32.mrf.mxu0
      %v5432 = vadd.f32 0.0, %v5431
      %5433 = vmatmul.f32.gmra.mxu0 %v1382
      %v5434 = vpop.f32.mrf.mxu0
      %v5435 = vadd.f32 0.0, %v5434
      %5436 = vmatmul.f32.gmra.mxu0 %v1384
      %v5437 = vpop.f32.mrf.mxu0
      %v5438 = vadd.f32 0.0, %v5437
      %5439 = vmatmul.f32.gmra.mxu0 %v1890
      %v5440 = vpop.f32.mrf.mxu0
      %v5441 = vadd.f32 0.0, %v5440
      %5442 = vmatmul.f32.gmra.mxu0 %v2396
      %v5443 = vpop.f32.mrf.mxu0
      %v5444 = vadd.f32 0.0, %v5443
      %5445 = vmatmul.f32.gmra.mxu0 %v2948
      %v5446 = vpop.f32.mrf.mxu0
      %v5447 = vadd.f32 0.0, %v5446
      %5448 = vmatmul.f32.gmra.mxu0 %v2950
      %v5449 = vpop.f32.mrf.mxu0
      %v5450 = vadd.f32 0.0, %v5449
      %5451 = vmatmul.f32.gmra.mxu0 %v2952
      %v5452 = vpop.f32.mrf.mxu0
      %v5453 = vadd.f32 0.0, %v5452
      %5454 = vmatmul.f32.gmra.mxu0 %v2954
      %v5455 = vpop.f32.mrf.mxu0
      %v5456 = vadd.f32 0.0, %v5455
      %5457 = vmatmul.f32.gmra.mxu0 %v2956
      %v5458 = vpop.f32.mrf.mxu0
      %v5459 = vadd.f32 0.0, %v5458
      %5460 = vmatmul.f32.gmra.mxu0 %v2958
      %v5461 = vpop.f32.mrf.mxu0
      %v5462 = vadd.f32 0.0, %v5461
      %5463 = vmatmul.f32.gmra.mxu0 %v3422
      %v5464 = vpop.f32.mrf.mxu0
      %v5465 = vadd.f32 0.0, %v5464
      %5466 = vmatmul.f32.gmra.mxu0 %v3886
      %v5467 = vpop.f32.mrf.mxu0
      %v5468 = vadd.f32 0.0, %v5467
      %5469 = vmatmul.f32.gmra.mxu0 %v4438
      %v5470 = vpop.f32.mrf.mxu0
      %v5471 = vadd.f32 0.0, %v5470
      %5472 = vmatmul.f32.gmra.mxu0 %v4440
      %v5473 = vpop.f32.mrf.mxu0
      %v5474 = vadd.f32 0.0, %v5473
      %5475 = vmatmul.f32.gmra.mxu0 %v4442
      %v5476 = vpop.f32.mrf.mxu0
      %v5477 = vadd.f32 0.0, %v5476
      %5478 = vmatmul.f32.gmra.mxu0 %v4444
      %v5479 = vpop.f32.mrf.mxu0
      %v5480 = vadd.f32 0.0, %v5479
      %5481 = vmatmul.f32.gmra.mxu0 %v4446
      %v5482 = vpop.f32.mrf.mxu0
      %v5483 = vadd.f32 0.0, %v5482
      %5484 = vmatmul.f32.gmra.mxu0 %v4448
      %v5485 = vpop.f32.mrf.mxu0
      %v5486 = vadd.f32 0.0, %v5485
      %5487 = vmatmul.f32.gmra.mxu0 %v4912
      %v5488 = vpop.f32.mrf.mxu0
      %v5489 = vadd.f32 0.0, %v5488
      %5490 = vmatmul.f32.gmra.mxu0 %v5376
      %v5491 = vpop.f32.mrf.mxu0
      %v5492 = vadd.f32 0.0, %v5491
      %5493 = vdwg.mxu0
      %v5494 = vadd.f32 %v5339, %v5399
      %v5495 = vadd.f32 %v5340, %v5402
      %v5496 = vadd.f32 %v5341, %v5405
      %v5497 = vadd.f32 %v5342, %v5408
      %v5498 = vadd.f32 %v5343, %v5411
      %v5499 = vadd.f32 %v5344, %v5414
      %v5500 = vadd.f32 %v5345, %v5417
      %v5501 = vadd.f32 %v5346, %v5420
      %v5502 = vadd.f32 %v5347, %v5423
      %v5503 = vadd.f32 %v5348, %v5426
      %v5504 = vadd.f32 %v5349, %v5429
      %v5505 = vadd.f32 %v5350, %v5432
      %v5506 = vadd.f32 %v5351, %v5435
      %v5507 = vadd.f32 %v5352, %v5438
      %v5508 = vadd.f32 %v5353, %v5441
      %v5509 = vadd.f32 %v5354, %v5444
      %v5510 = vadd.f32 %v5355, %v5447
      %v5511 = vadd.f32 %v5356, %v5450
      %v5512 = vadd.f32 %v5357, %v5453
      %v5513 = vadd.f32 %v5358, %v5456
      %v5514 = vadd.f32 %v5359, %v5459
      %v5515 = vadd.f32 %v5360, %v5462
      %v5516 = vadd.f32 %v5361, %v5465
      %v5517 = vadd.f32 %v5362, %v5468
      %v5518 = vadd.f32 %v5363, %v5471
      %v5519 = vadd.f32 %v5364, %v5474
      %v5520 = vadd.f32 %v5365, %v5477
      %v5521 = vadd.f32 %v5366, %v5480
      %v5522 = vadd.f32 %v5367, %v5483
      %v5523 = vadd.f32 %v5368, %v5486
      %v5524 = vadd.f32 %v5369, %v5489
      %v5525 = vadd.f32 %v5370, %v5492
      %5526 = vxpose.xlu0.b32.start [1/16] %v5494, 128
      %5527 = vxpose.xlu0.b32.cont [2/16] %v5495, 128
      %5528 = vxpose.xlu0.b32.cont [3/16] %v5496, 128
      %5529 = vxpose.xlu0.b32.cont [4/16] %v5497, 128
      %5530 = vxpose.xlu0.b32.cont [5/16] %v5498, 128
      %5531 = vxpose.xlu0.b32.cont [6/16] %v5499, 128
      %5532 = vxpose.xlu0.b32.cont [7/16] %v5500, 128
      %5533 = vxpose.xlu0.b32.cont [8/16] %v5501, 128
      %5534 = vxpose.xlu0.b32.cont [9/16] %v5502, 128
      %5535 = vxpose.xlu0.b32.cont [10/16] %v5503, 128
      %5536 = vxpose.xlu0.b32.cont [11/16] %v5504, 128
      %5537 = vxpose.xlu0.b32.cont [12/16] %v5505, 128
      %5538 = vxpose.xlu0.b32.cont [13/16] %v5506, 128
      %5539 = vxpose.xlu0.b32.cont [14/16] %v5507, 128
      %5540 = vxpose.xlu0.b32.cont [15/16] %v5508, 128
      %5541 = vxpose.xlu0.b32.end [16/16] %v5509, 128
      %v5542 = vpop.trf.xlu0
      %v5543 = vpop.trf.xlu0
      %v5544 = vpop.trf.xlu0
      %v5545 = vpop.trf.xlu0
      %v5546 = vpop.trf.xlu0
      %v5547 = vpop.trf.xlu0
      %v5548 = vpop.trf.xlu0
      %v5549 = vpop.trf.xlu0
      %v5550 = vpop.trf.xlu0
      %v5551 = vpop.trf.xlu0
      %v5552 = vpop.trf.xlu0
      %v5553 = vpop.trf.xlu0
      %v5554 = vpop.trf.xlu0
      %v5555 = vpop.trf.xlu0
      %v5556 = vpop.trf.xlu0
      %v5557 = vpop.trf.xlu0
      %5558 = vxpose.xlu0.b32.start [1/16] %v5510, 128
      %5559 = vxpose.xlu0.b32.cont [2/16] %v5511, 128
      %5560 = vxpose.xlu0.b32.cont [3/16] %v5512, 128
      %5561 = vxpose.xlu0.b32.cont [4/16] %v5513, 128
      %5562 = vxpose.xlu0.b32.cont [5/16] %v5514, 128
      %5563 = vxpose.xlu0.b32.cont [6/16] %v5515, 128
      %5564 = vxpose.xlu0.b32.cont [7/16] %v5516, 128
      %5565 = vxpose.xlu0.b32.cont [8/16] %v5517, 128
      %5566 = vxpose.xlu0.b32.cont [9/16] %v5518, 128
      %5567 = vxpose.xlu0.b32.cont [10/16] %v5519, 128
      %5568 = vxpose.xlu0.b32.cont [11/16] %v5520, 128
      %5569 = vxpose.xlu0.b32.cont [12/16] %v5521, 128
      %5570 = vxpose.xlu0.b32.cont [13/16] %v5522, 128
      %5571 = vxpose.xlu0.b32.cont [14/16] %v5523, 128
      %5572 = vxpose.xlu0.b32.cont [15/16] %v5524, 128
      %5573 = vxpose.xlu0.b32.end [16/16] %v5525, 128
      %v5574 = vpop.trf.xlu0
      %v5575 = vpop.trf.xlu0
      %v5576 = vpop.trf.xlu0
      %v5577 = vpop.trf.xlu0
      %v5578 = vpop.trf.xlu0
      %v5579 = vpop.trf.xlu0
      %v5580 = vpop.trf.xlu0
      %v5581 = vpop.trf.xlu0
      %v5582 = vpop.trf.xlu0
      %v5583 = vpop.trf.xlu0
      %v5584 = vpop.trf.xlu0
      %v5585 = vpop.trf.xlu0
      %v5586 = vpop.trf.xlu0
      %v5587 = vpop.trf.xlu0
      %v5588 = vpop.trf.xlu0
      %v5589 = vpop.trf.xlu0
      %v5590 = vld [vmem:[%s7] sm:$0xff]
      %5592 = vset.pattern.permute.xlu0 0
      %5593 = vperm.xlu0 %5592, %v5590
      %v5594 = vpop.permute.xlu0 %5593
      %v5596 = vadd.f32 %v5542, %v5594
      %v5597 = vadd.f32 %v5574, %v5594
      %v5598 = vadd.f32 %v5596, %v5597
      %5599 = vadd.xlane.f32.xlu0 %v5598
      %v5600 = vpop.xlane.xlu0 %5599
      %v5601 = vmul.f32 %v5596, %v5596
      %v5602 = vmul.f32 %v5597, %v5597
      %v5603 = vadd.f32 %v5601, %v5602
      %5604 = vadd.xlane.f32.xlu0 %v5603
      %v5605 = vpop.xlane.xlu0 %5604
      %vm5606 = vcmask 7168
      %v5607 = vsel %vm5606, %v5600, %v5605
      %p5608 = scmp.eq.s32.totalorder %s24, 0
      // Predicated region
      $region53: #{tpu_custom_call.1} parent=51 // pred_check
        %p5609 = pneg %p5608
      $region54: #{tpu_custom_call.1} parent=51 // pred_check_branch
        %5611 = sbr.rel (%p5609) target = $region56
      $region55: #{tpu_custom_call.1} parent=51 // pred_region
        %vm5612 = vcmask 15360
        %5613 = vst.msk [vmem:[%s576] sm:$0xff] %vm5612, 0.0
      $region56: #{tpu_custom_call.1} parent=51 // pred_fallthru
        _
      %v5614 = vld [vmem:[%s576] sm:$0xff]
      %v5615 = vadd.f32 %v5614, %v5607
      %vm5616 = vcmask 15360
      %5617 = vst.msk [vmem:[%s576] sm:$0xff] %vm5616, %v5615
      %p5618 = scmp.lt.s32.totalorder %s23, 1
      %s5619 = scalar_select %p5618, %s23, 1
      %s5620 = smul.addr %s5619, 8
      %s5621 = scalar_lea.vmem %s8, %s5620
      // Predicated region
      $region57: #{tpu_custom_call.1} parent=51 // pred_check
        %p5622 = pneg %p281
      $region58: #{tpu_custom_call.1} parent=51 // pred_check_branch
        %5624 = sbr.rel (%p5622) target = $region60
      $region59: #{tpu_custom_call.1} parent=51 // pred_region
        _
      $region60: #{tpu_custom_call.1} parent=51 // pred_fallthru
        _
    $region52: #{tpu_custom_call.1} parent=5 // pred_fallthru
      _
    %p5625 = scmp.le.s32.totalorder 2, %s14
    // Predicated region
    $region61: #{tpu_custom_call.1} parent=5 // pred_check
      %p5626 = pneg %p5625
    $region62: #{tpu_custom_call.1} parent=5 // pred_check_branch
      %5628 = sbr.rel (%p5626) target = $region64
    $region63: #{tpu_custom_call.1} parent=5 // pred_region
      %s5629 = ssub.s32 %s14, 2
      // Predicated region
      $region65: #{tpu_custom_call.1} parent=63 // pred_check
        %p5630 = pneg %p287
      $region66: #{tpu_custom_call.1} parent=63 // pred_check_branch
        %5632 = sbr.rel (%p5630) target = $region68
      $region67: #{tpu_custom_call.1} parent=63 // pred_region
        %p5633 = scmp.lt.s32.totalorder %s25, 1
        %s5634 = scalar_select %p5633, %s25, 1
        %s5635 = smul.addr %s5634, 8
        %s5636 = scalar_lea.vmem %s8, %s5635
      $region68: #{tpu_custom_call.1} parent=63 // pred_fallthru
        _
    $region64: #{tpu_custom_call.1} parent=5 // pred_fallthru
      _
  $region6: #{tpu_custom_call.1} parent=0 // loop_footer
    %s18 = sadd.s32 1, %s14
  $region7: #{tpu_custom_call.1} parent=0 // loop_footer_branch
    %13 = sbr.rel target = $region3
  $region8: #{tpu_custom_call.1} parent=0 // loop_exit
    _

</llo_original>
